<compile_context>
chip_gen: v7x
topology: tpu7x:2x2x1
jax: 0.10.0
libtpu: 0.0.40
codegen_flags: <defaults>
</compile_context>

<pallas_src>
import functools

import jax
import jax.numpy as jnp
from jax.experimental import pallas as pl
from jax.experimental.pallas import tpu as pltpu


def _round_up(n, m):
    return ((n + m - 1) // m) * m


def _aux_offsets(UP, HP, HEADP):
    """Static offsets/widths of (layer1..4, heads) spans inside the packed aux row."""
    widths = (UP, UP, HP, HP, HEADP)
    offs = []
    o = 0
    for w in widths:
        offs.append(o)
        o += w
    return tuple(offs), widths, o


# ---------------------------------------------------------------------------
# Kernel
# ---------------------------------------------------------------------------
def a3c_mlp_kernel(num_actions, x_ref, w1_ref, w2_ref, w3_ref, w4_ref,
                   wh_ref, aux_ref, out_ref):
    UP = w1_ref.shape[1]
    HP = w3_ref.shape[1]
    HEADP = wh_ref.shape[1]
    offs, widths, _ = _aux_offsets(UP, HP, HEADP)

    def bias(i):      # [1, width] f32, lane-aligned static slice
        return aux_ref[0:1, offs[i]:offs[i] + widths[i]]

    def scale(i):     # [1, width] f32 per-output-channel dequant scale (1.0 if bf16)
        return aux_ref[1:2, offs[i]:offs[i] + widths[i]]

    def layer(h, w_ref, i):
        # int8/bf16 weight -> bf16 on the VPU, bf16 x bf16 -> f32 acc on the MXU,
        # dequant scale + bias + LeakyReLU(0.1) on the VPU.
        w = w_ref[...].astype(jnp.bfloat16)
        acc = jnp.dot(h, w, preferred_element_type=jnp.float32)
        acc = acc * scale(i) + bias(i)
        return jnp.maximum(acc, 0.1 * acc).astype(jnp.bfloat16)   # LeakyReLU, no select

    h = x_ref[...].astype(jnp.bfloat16)     # f32 observations -> bf16 in-kernel
    h = layer(h, w1_ref, 0)                 # [TB, UP]
    h = layer(h, w2_ref, 1)                 # [TB, UP]
    h = layer(h, w3_ref, 2)                 # [TB, HP]
    h = layer(h, w4_ref, 3)                 # [TB, HP]

    # Fused heads: one lane-aligned matmul (critic | actor | actor2 | zero pad).
    heads = jnp.dot(h, wh_ref[...].astype(jnp.bfloat16),
                    preferred_element_type=jnp.float32)
    heads = heads * scale(4) + bias(4)

    # softsign(x) = x / (1 + |x|) on the actor columns only (cols 1..A).
    # The reciprocal goes to the EUP slot instead of a VALU divide chain.
    col = jax.lax.broadcasted_iota(jnp.int32, heads.shape, 1)
    is_actor = (col >= 1) & (col <= num_actions)
    soft = heads * pl.reciprocal(1.0 + jnp.abs(heads), approx=True)
    out_ref[...] = jnp.where(is_actor, soft, heads)


# ---------------------------------------------------------------------------
# One-time parameter preprocessing (outside the hot path)
# ---------------------------------------------------------------------------
def prepare_params(params, num_actions, hidden_weight_dtype=jnp.bfloat16):
    """Transpose PyTorch [out,in] -> [in,out], zero-pad widths to 128-multiples,
    fuse the three heads into one [HP, HEADP] bf16 weight, pack biases + dequant
    scales into one [2, TOT] f32 aux array, and (optionally) store the three big
    hidden weights as int8 with per-output-channel scales.  Call once at init."""
    A = num_actions
    num_inputs = params["fc1_w"].shape[1]
    U = params["fc1_w"].shape[0]            # 576
    H = params["fc3_w"].shape[0]            # 288
    UP = _round_up(U, 128)                  # 640
    HP = _round_up(H, 128)                  # 384
    HEADP = _round_up(1 + 2 * A, 128)       # handles any num_actions
    offs, widths, TOT = _aux_offsets(UP, HP, HEADP)

    def pad_t(w, rows, cols):
        w = jnp.asarray(w, jnp.float32).T                     # [in, out]
        out = jnp.zeros((rows, cols), jnp.float32)
        return out.at[:w.shape[0], :w.shape[1]].set(w)

    def quantize_cols(w_f32):
        """Per-output-channel symmetric quantization -> (stored_weight, scale_row)."""
        if hidden_weight_dtype == jnp.int8:
            amax = jnp.max(jnp.abs(w_f32), axis=0, keepdims=True)
            s = jnp.where(amax > 0.0, amax / 127.0, 1.0)
            q = jnp.clip(jnp.round(w_f32 / s), -127.0, 127.0).astype(jnp.int8)
            return q, s
        # TODO(synk): add an fp8 (e4m3) weight variant for v7x (its MXU has no int path).
        return w_f32.astype(jnp.bfloat16), jnp.ones((1, w_f32.shape[1]), jnp.float32)

    # fc1 is tiny (num_inputs x 640) -> keep bf16; quantize the three big weights.
    w1 = pad_t(params["fc1_w"], num_inputs, UP).astype(jnp.bfloat16)
    s1 = jnp.ones((1, UP), jnp.float32)
    w2, s2 = quantize_cols(pad_t(params["fc2_w"], UP, UP))
    w3, s3 = quantize_cols(pad_t(params["fc3_w"], UP, HP))
    w4, s4 = quantize_cols(pad_t(params["fc4_w"], HP, HP))

    # Fused head weight (bf16, ~96 KiB): col 0 critic, 1..A actor, 1+A..2A actor2.
    wh = jnp.zeros((HP, HEADP), jnp.float32)
    wh = wh.at[:H, 0:1].set(jnp.asarray(params["critic_w"], jnp.float32).T)
    wh = wh.at[:H, 1:1 + A].set(jnp.asarray(params["actor_w"], jnp.float32).T)
    wh = wh.at[:H, 1 + A:1 + 2 * A].set(jnp.asarray(params["actor2_w"], jnp.float32).T)
    wh = wh.astype(jnp.bfloat16)

    # aux[0, :] = biases, aux[1, :] = dequant scales (1.0 where not quantized).
    aux = jnp.zeros((2, TOT), jnp.float32).at[1, :].set(1.0)
    for i, (name, n) in enumerate((("fc1_b", U), ("fc2_b", U), ("fc3_b", H), ("fc4_b", H))):
        b = jnp.asarray(params[name], jnp.float32).reshape(-1)
        aux = aux.at[0, offs[i]:offs[i] + n].set(b)
    for i, s in enumerate((s1, s2, s3, s4)):
        aux = aux.at[1, offs[i]:offs[i] + widths[i]].set(s[0])
    o4 = offs[4]
    aux = aux.at[0, o4:o4 + 1].set(jnp.asarray(params["critic_b"], jnp.float32))
    aux = aux.at[0, o4 + 1:o4 + 1 + A].set(jnp.asarray(params["actor_b"], jnp.float32))
    aux = aux.at[0, o4 + 1 + A:o4 + 1 + 2 * A].set(jnp.asarray(params["actor2_b"], jnp.float32))

    return (w1, w2, w3, w4, wh, aux)


# ---------------------------------------------------------------------------
# Forward wrapper
# ---------------------------------------------------------------------------
@functools.partial(jax.jit, static_argnames=("num_actions",))
def a3c_mlp_forward(x, prepped, *, num_actions):
    """x: [B, num_inputs] f32.  prepped: output of prepare_params (reused across
    calls).  Returns (critic [B,1], softsign(actor) [B,A], actor2 [B,A])."""
    w1, w2, w3, w4, wh, aux = prepped
    B, num_inputs = x.shape
    HEADP = wh.shape[1]

    # Pad the batch so MXU-M / sublane tiles are full; tile large batches so the
    # activation tiles pipeline and, on v7x, both TensorCores get grid steps.
    if B > 256:
        TB = 256
        Bp = _round_up(B, TB)
    else:
        Bp = _round_up(B, 16)
        TB = Bp
    if Bp != B:
        x = jnp.pad(x, ((0, Bp - B), (0, 0)))
    grid = (Bp // TB,)

    def resident(a):
        nd = a.ndim
        return pl.BlockSpec(a.shape, lambda i: (0,) * nd)   # same block every step

    in_specs = [pl.BlockSpec((TB, num_inputs), lambda i: (i, 0))] + [
        resident(a) for a in (w1, w2, w3, w4, wh, aux)
    ]
    out_specs = pl.BlockSpec((TB, HEADP), lambda i: (i, 0))

    # Advisory cost estimate for XLA's scheduler.
    flops = 2 * Bp * sum(int(w.shape[0]) * int(w.shape[1]) for w in (w1, w2, w3, w4, wh))
    bytes_accessed = sum(int(a.size) * a.dtype.itemsize for a in (x, w1, w2, w3, w4, wh, aux))
    bytes_accessed += Bp * HEADP * 4

    out = pl.pallas_call(
        functools.partial(a3c_mlp_kernel, num_actions),
        out_shape=jax.ShapeDtypeStruct((Bp, HEADP), jnp.float32),
        grid=grid,
        in_specs=in_specs,
        out_specs=out_specs,
        compiler_params=pltpu.CompilerParams(dimension_semantics=("parallel",)),
        cost_estimate=pl.CostEstimate(
            flops=flops, transcendentals=Bp * HEADP, bytes_accessed=bytes_accessed),
    )(x, w1, w2, w3, w4, wh, aux)

    critic = out[:B, 0:1]
    actor = out[:B, 1:1 + num_actions]
    actor2 = out[:B, 1 + num_actions:1 + 2 * num_actions]
    return critic, actor, actor2


# ---------------------------------------------------------------------------
# Synthetic params + references
# ---------------------------------------------------------------------------
def init_params(key, num_inputs, num_actions, size=24):
    """Deterministic synthetic parameter init (PyTorch convention W:[out,in], b:[out])."""
    UNITS = size ** 2
    HALF = UNITS // 2
    shapes = {
        "fc1_w": (UNITS, num_inputs), "fc1_b": (UNITS,),
        "fc2_w": (UNITS, UNITS), "fc2_b": (UNITS,),
        "fc3_w": (HALF, UNITS), "fc3_b": (HALF,),
        "fc4_w": (HALF, HALF), "fc4_b": (HALF,),
        "critic_w": (1, HALF), "critic_b": (1,),
        "actor_w": (num_actions, HALF), "actor_b": (num_actions,),
        "actor2_w": (num_actions, HALF), "actor2_b": (num_actions,),
    }
    params = {}
    keys = jax.random.split(key, len(shapes))
    for k, (name, shp) in zip(keys, sorted(shapes.items())):
        fan_in = shp[-1] if len(shp) > 1 else shp[0]
        scale = 1.0 / jnp.sqrt(jnp.float32(fan_in))
        params[name] = scale * jax.random.normal(k, shp, dtype=jnp.float32)
    params["critic_b"] = jnp.zeros((1,), jnp.float32)
    params["actor_b"] = jnp.zeros((num_actions,), jnp.float32)
    params["actor2_b"] = jnp.zeros((num_actions,), jnp.float32)
    return params


def reference_forward(x, params):
    """Pure-JAX f32 reference mirroring the PyTorch forward."""
    def lin(v, w, b):
        return v @ jnp.asarray(w, jnp.float32).T + jnp.asarray(b, jnp.float32)

    def lrelu(v):
        return jnp.where(v > 0, v, 0.1 * v)

    h = lrelu(lin(x, params["fc1_w"], params["fc1_b"]))
    h = lrelu(lin(h, params["fc2_w"], params["fc2_b"]))
    h = lrelu(lin(h, params["fc3_w"], params["fc3_b"]))
    h = lrelu(lin(h, params["fc4_w"], params["fc4_b"]))
    critic = lin(h, params["critic_w"], params["critic_b"])
    actor = lin(h, params["actor_w"], params["actor_b"])
    actor2 = lin(h, params["actor2_w"], params["actor2_b"])
    return critic, actor / (1.0 + jnp.abs(actor)), actor2


def reference_forward_prepped(x, prepped, num_actions):
    """Pure-JAX reference mirroring the kernel's quantized/bf16 math exactly
    (modulo the in-kernel approximate reciprocal used for softsign)."""
    w1, w2, w3, w4, wh, aux = prepped
    UP, HP, HEADP = w1.shape[1], w3.shape[1], wh.shape[1]
    offs, widths, _ = _aux_offsets(UP, HP, HEADP)

    def bias(i):
        return aux[0:1, offs[i]:offs[i] + widths[i]]

    def scale(i):
        return aux[1:2, offs[i]:offs[i] + widths[i]]

    h = x.astype(jnp.bfloat16)
    for i, w in enumerate((w1, w2, w3, w4)):
        acc = jnp.dot(h, w.astype(jnp.bfloat16), preferred_element_type=jnp.float32)
        acc = acc * scale(i) + bias(i)
        h = jnp.maximum(acc, 0.1 * acc).astype(jnp.bfloat16)
    heads = jnp.dot(h, wh.astype(jnp.bfloat16), preferred_element_type=jnp.float32)
    heads = heads * scale(4) + bias(4)
    A = num_actions
    critic = heads[:, 0:1]
    actor = heads[:, 1:1 + A]
    actor2 = heads[:, 1 + A:1 + 2 * A]
    return critic, actor / (1.0 + jnp.abs(actor)), actor2


def _assert_close(got, want, tol):
    err = float(jnp.max(jnp.abs(got - want)))
    assert jnp.allclose(got, want, atol=tol, rtol=tol), f"max abs err {err} > tol {tol}"


if __name__ == "__main__":
    key = jax.random.PRNGKey(0)
    k_x, k_p, k_x2 = jax.random.split(key, 3)

    B = 8            # small demo batch (padded to 16 inside the wrapper)
    NUM_INPUTS = 16  # observation dim
    NUM_ACTIONS = 6  # action_space.shape[0]
    SIZE = 24        # module default -> UNITS=576, UNITS/2=288

    x = jax.random.normal(k_x, (B, NUM_INPUTS), dtype=jnp.float32)
    params = init_params(k_p, NUM_INPUTS, NUM_ACTIONS, size=SIZE)

    # ---- default bf16 weight path -----------------------------------------
    prepped = jax.block_until_ready(prepare_params(params, NUM_ACTIONS))
    critic, actor, actor2 = a3c_mlp_forward(x, prepped, num_actions=NUM_ACTIONS)
    jax.block_until_ready((critic, actor, actor2))

    assert critic.shape == (B, 1)
    assert actor.shape == (B, NUM_ACTIONS)
    assert actor2.shape == (B, NUM_ACTIONS)

    tc, ta, ta2 = reference_forward_prepped(x, prepped, NUM_ACTIONS)
    _assert_close(critic, tc, 5e-3)
    _assert_close(actor, ta, 1e-2)      # softsign uses approx EUP reciprocal
    _assert_close(actor2, ta2, 5e-3)

    rc, ra, ra2 = reference_forward(x, params)   # loose: bf16 quantization error
    _assert_close(critic, rc, 1e-1)
    _assert_close(actor, ra, 1e-1)
    _assert_close(actor2, ra2, 1e-1)

    # ---- int8 hidden-weight path (halves the dominant weight DMA on v5e/v6e) ----
    prepped_i8 = jax.block_until_ready(
        prepare_params(params, NUM_ACTIONS, hidden_weight_dtype=jnp.int8))
    c8, a8, a28 = a3c_mlp_forward(x, prepped_i8, num_actions=NUM_ACTIONS)
    jax.block_until_ready((c8, a8, a28))
    tc8, ta8, ta28 = reference_forward_prepped(x, prepped_i8, NUM_ACTIONS)
    _assert_close(c8, tc8, 5e-3)
    _assert_close(a8, ta8, 1e-2)
    _assert_close(a28, ta28, 5e-3)
    _assert_close(c8, rc, 2e-1)          # int8 quantization vs full-f32 reference

    # ---- larger (rollout-sized) batch exercising the parallel batch grid ----
    B2 = 260                              # -> padded to 512, grid=(2,), 256-row tiles
    x2 = jax.random.normal(k_x2, (B2, NUM_INPUTS), dtype=jnp.float32)
    c2, a2_, a22 = a3c_mlp_forward(x2, prepped, num_actions=NUM_ACTIONS)
    jax.block_until_ready((c2, a2_, a22))
    assert c2.shape == (B2, 1) and a2_.shape == (B2, NUM_ACTIONS)
    tc2, ta2_, ta22 = reference_forward_prepped(x2, prepped, NUM_ACTIONS)
    _assert_close(c2, tc2, 5e-3)
    _assert_close(a2_, ta2_, 1e-2)
    _assert_close(a22, ta22, 5e-3)

    print("KERNEL_OK")
</pallas_src>

<mosaic_0001>
module attributes {stable_mosaic.version = 11 : i64} {
  func.func @a3c_mlp_kernel(%arg0: i32, %arg1: memref<16x16xf32, #tpu.memory_space<vmem>>, %arg2: memref<16x640xbf16, #tpu.memory_space<vmem>>, %arg3: memref<640x640xbf16, #tpu.memory_space<vmem>>, %arg4: memref<640x384xbf16, #tpu.memory_space<vmem>>, %arg5: memref<384x384xbf16, #tpu.memory_space<vmem>>, %arg6: memref<384x128xbf16, #tpu.memory_space<vmem>>, %arg7: memref<2x2176xf32, #tpu.memory_space<vmem>>, %arg8: memref<16x128xf32, #tpu.memory_space<vmem>>) attributes {dimension_semantics = [#tpu.dimension_semantics<parallel>], iteration_bounds = array<i64: 1>, scalar_prefetch = 0 : i64, scratch_operands = 0 : i64, tpu.core_type = #tpu.core_type<tc>, window_params = [{transform_indices = @transform_0, window_bounds = array<i64: 16, 16>}, {pipeline_mode = #tpu.pipeline_mode<synchronous>, transform_indices = @transform_1, window_bounds = array<i64: 16, 640>}, {pipeline_mode = #tpu.pipeline_mode<synchronous>, transform_indices = @transform_2, window_bounds = array<i64: 640, 640>}, {pipeline_mode = #tpu.pipeline_mode<synchronous>, transform_indices = @transform_3, window_bounds = array<i64: 640, 384>}, {pipeline_mode = #tpu.pipeline_mode<synchronous>, transform_indices = @transform_4, window_bounds = array<i64: 384, 384>}, {pipeline_mode = #tpu.pipeline_mode<synchronous>, transform_indices = @transform_5, window_bounds = array<i64: 384, 128>}, {pipeline_mode = #tpu.pipeline_mode<synchronous>, transform_indices = @transform_6, window_bounds = array<i64: 2, 2176>}, {transform_indices = @transform_7, window_bounds = array<i64: 16, 128>}]} {
    %c0 = arith.constant 0 : index
    %c0_0 = arith.constant 0 : index
    %0 = vector.load %arg1[%c0, %c0_0] : memref<16x16xf32, #tpu.memory_space<vmem>>, vector<16x16xf32>
    %1 = arith.truncf %0 : vector<16x16xf32> to vector<16x16xbf16>
    %c0_1 = arith.constant 0 : index
    %c0_2 = arith.constant 0 : index
    %2 = vector.load %arg2[%c0_1, %c0_2] : memref<16x640xbf16, #tpu.memory_space<vmem>>, vector<16x640xbf16>
    %cst = arith.constant dense<0.000000e+00> : vector<16x640xf32>
    %3 = tpu.matmul %1, %2, %cst {dimension_numbers = #tpu.dot_dimension_numbers<[1], [0], [0], [1], [0, 0, 1, 1], [], []>} : vector<16x16xbf16>, vector<16x640xbf16>, vector<16x640xf32> -> vector<16x640xf32>
    %c1 = arith.constant 1 : index
    %c0_3 = arith.constant 0 : index
    %4 = vector.load %arg7[%c1, %c0_3] : memref<2x2176xf32, #tpu.memory_space<vmem>>, vector<1x640xf32>
    %5 = vector.broadcast %4 : vector<1x640xf32> to vector<16x640xf32>
    %6 = arith.mulf %3, %5 : vector<16x640xf32>
    %c0_4 = arith.constant 0 : index
    %c0_5 = arith.constant 0 : index
    %7 = vector.load %arg7[%c0_4, %c0_5] : memref<2x2176xf32, #tpu.memory_space<vmem>>, vector<1x640xf32>
    %8 = vector.broadcast %7 : vector<1x640xf32> to vector<16x640xf32>
    %9 = arith.addf %6, %8 : vector<16x640xf32>
    %cst_6 = arith.constant 1.000000e-01 : f32
    %10 = vector.broadcast %cst_6 : f32 to vector<16x640xf32>
    %11 = arith.mulf %10, %9 : vector<16x640xf32>
    %12 = arith.maximumf %9, %11 : vector<16x640xf32>
    %13 = arith.truncf %12 : vector<16x640xf32> to vector<16x640xbf16>
    %c0_7 = arith.constant 0 : index
    %c0_8 = arith.constant 0 : index
    %14 = vector.load %arg3[%c0_7, %c0_8] : memref<640x640xbf16, #tpu.memory_space<vmem>>, vector<640x640xbf16>
    %cst_9 = arith.constant dense<0.000000e+00> : vector<16x640xf32>
    %15 = tpu.matmul %13, %14, %cst_9 {dimension_numbers = #tpu.dot_dimension_numbers<[1], [0], [0], [1], [0, 0, 1, 1], [], []>} : vector<16x640xbf16>, vector<640x640xbf16>, vector<16x640xf32> -> vector<16x640xf32>
    %c1_10 = arith.constant 1 : index
    %c640 = arith.constant 640 : index
    %16 = vector.load %arg7[%c1_10, %c640] : memref<2x2176xf32, #tpu.memory_space<vmem>>, vector<1x640xf32>
    %17 = vector.broadcast %16 : vector<1x640xf32> to vector<16x640xf32>
    %18 = arith.mulf %15, %17 : vector<16x640xf32>
    %c0_11 = arith.constant 0 : index
    %c640_12 = arith.constant 640 : index
    %19 = vector.load %arg7[%c0_11, %c640_12] : memref<2x2176xf32, #tpu.memory_space<vmem>>, vector<1x640xf32>
    %20 = vector.broadcast %19 : vector<1x640xf32> to vector<16x640xf32>
    %21 = arith.addf %18, %20 : vector<16x640xf32>
    %cst_13 = arith.constant 1.000000e-01 : f32
    %22 = vector.broadcast %cst_13 : f32 to vector<16x640xf32>
    %23 = arith.mulf %22, %21 : vector<16x640xf32>
    %24 = arith.maximumf %21, %23 : vector<16x640xf32>
    %25 = arith.truncf %24 : vector<16x640xf32> to vector<16x640xbf16>
    %c0_14 = arith.constant 0 : index
    %c0_15 = arith.constant 0 : index
    %26 = vector.load %arg4[%c0_14, %c0_15] : memref<640x384xbf16, #tpu.memory_space<vmem>>, vector<640x384xbf16>
    %cst_16 = arith.constant dense<0.000000e+00> : vector<16x384xf32>
    %27 = tpu.matmul %25, %26, %cst_16 {dimension_numbers = #tpu.dot_dimension_numbers<[1], [0], [0], [1], [0, 0, 1, 1], [], []>} : vector<16x640xbf16>, vector<640x384xbf16>, vector<16x384xf32> -> vector<16x384xf32>
    %c1_17 = arith.constant 1 : index
    %c1280 = arith.constant 1280 : index
    %28 = vector.load %arg7[%c1_17, %c1280] : memref<2x2176xf32, #tpu.memory_space<vmem>>, vector<1x384xf32>
    %29 = vector.broadcast %28 : vector<1x384xf32> to vector<16x384xf32>
    %30 = arith.mulf %27, %29 : vector<16x384xf32>
    %c0_18 = arith.constant 0 : index
    %c1280_19 = arith.constant 1280 : index
    %31 = vector.load %arg7[%c0_18, %c1280_19] : memref<2x2176xf32, #tpu.memory_space<vmem>>, vector<1x384xf32>
    %32 = vector.broadcast %31 : vector<1x384xf32> to vector<16x384xf32>
    %33 = arith.addf %30, %32 : vector<16x384xf32>
    %cst_20 = arith.constant 1.000000e-01 : f32
    %34 = vector.broadcast %cst_20 : f32 to vector<16x384xf32>
    %35 = arith.mulf %34, %33 : vector<16x384xf32>
    %36 = arith.maximumf %33, %35 : vector<16x384xf32>
    %37 = arith.truncf %36 : vector<16x384xf32> to vector<16x384xbf16>
    %c0_21 = arith.constant 0 : index
    %c0_22 = arith.constant 0 : index
    %38 = vector.load %arg5[%c0_21, %c0_22] : memref<384x384xbf16, #tpu.memory_space<vmem>>, vector<384x384xbf16>
    %cst_23 = arith.constant dense<0.000000e+00> : vector<16x384xf32>
    %39 = tpu.matmul %37, %38, %cst_23 {dimension_numbers = #tpu.dot_dimension_numbers<[1], [0], [0], [1], [0, 0, 1, 1], [], []>} : vector<16x384xbf16>, vector<384x384xbf16>, vector<16x384xf32> -> vector<16x384xf32>
    %c1_24 = arith.constant 1 : index
    %c1664 = arith.constant 1664 : index
    %40 = vector.load %arg7[%c1_24, %c1664] : memref<2x2176xf32, #tpu.memory_space<vmem>>, vector<1x384xf32>
    %41 = vector.broadcast %40 : vector<1x384xf32> to vector<16x384xf32>
    %42 = arith.mulf %39, %41 : vector<16x384xf32>
    %c0_25 = arith.constant 0 : index
    %c1664_26 = arith.constant 1664 : index
    %43 = vector.load %arg7[%c0_25, %c1664_26] : memref<2x2176xf32, #tpu.memory_space<vmem>>, vector<1x384xf32>
    %44 = vector.broadcast %43 : vector<1x384xf32> to vector<16x384xf32>
    %45 = arith.addf %42, %44 : vector<16x384xf32>
    %cst_27 = arith.constant 1.000000e-01 : f32
    %46 = vector.broadcast %cst_27 : f32 to vector<16x384xf32>
    %47 = arith.mulf %46, %45 : vector<16x384xf32>
    %48 = arith.maximumf %45, %47 : vector<16x384xf32>
    %49 = arith.truncf %48 : vector<16x384xf32> to vector<16x384xbf16>
    %c0_28 = arith.constant 0 : index
    %c0_29 = arith.constant 0 : index
    %50 = vector.load %arg6[%c0_28, %c0_29] : memref<384x128xbf16, #tpu.memory_space<vmem>>, vector<384x128xbf16>
    %cst_30 = arith.constant dense<0.000000e+00> : vector<16x128xf32>
    %51 = tpu.matmul %49, %50, %cst_30 {dimension_numbers = #tpu.dot_dimension_numbers<[1], [0], [0], [1], [0, 0, 1, 1], [], []>} : vector<16x384xbf16>, vector<384x128xbf16>, vector<16x128xf32> -> vector<16x128xf32>
    %c1_31 = arith.constant 1 : index
    %c2048 = arith.constant 2048 : index
    %52 = vector.load %arg7[%c1_31, %c2048] : memref<2x2176xf32, #tpu.memory_space<vmem>>, vector<1x128xf32>
    %53 = vector.broadcast %52 : vector<1x128xf32> to vector<16x128xf32>
    %54 = arith.mulf %51, %53 : vector<16x128xf32>
    %c0_32 = arith.constant 0 : index
    %c2048_33 = arith.constant 2048 : index
    %55 = vector.load %arg7[%c0_32, %c2048_33] : memref<2x2176xf32, #tpu.memory_space<vmem>>, vector<1x128xf32>
    %56 = vector.broadcast %55 : vector<1x128xf32> to vector<16x128xf32>
    %57 = arith.addf %54, %56 : vector<16x128xf32>
    %58 = tpu.iota {dimensions = array<i32: 1>} : vector<16x128xi32>
    %c1_i32 = arith.constant 1 : i32
    %59 = vector.broadcast %c1_i32 : i32 to vector<16x128xi32>
    %60 = arith.cmpi sge, %58, %59 : vector<16x128xi32>
    %c6_i32 = arith.constant 6 : i32
    %61 = vector.broadcast %c6_i32 : i32 to vector<16x128xi32>
    %62 = arith.cmpi sle, %58, %61 : vector<16x128xi32>
    %63 = arith.andi %60, %62 : vector<16x128xi1>
    %64 = math.absf %57 : vector<16x128xf32>
    %cst_34 = arith.constant 1.000000e+00 : f32
    %65 = vector.broadcast %cst_34 : f32 to vector<16x128xf32>
    %66 = arith.addf %65, %64 : vector<16x128xf32>
    %67 = tpu.reciprocal %66 {approx = true} : vector<16x128xf32> -> vector<16x128xf32>
    %68 = arith.mulf %57, %67 : vector<16x128xf32>
    %69 = arith.select %63, %68, %57 : vector<16x128xi1>, vector<16x128xf32>
    %c0_35 = arith.constant 0 : index
    %c0_36 = arith.constant 0 : index
    %70 = vector.load %arg8[%c0_35, %c0_36] : memref<16x128xf32, #tpu.memory_space<vmem>>, vector<16x128xf32>
    tpu.vector_store %arg8[%c0_35, %c0_36], %69 {strides = array<i32>} : memref<16x128xf32, #tpu.memory_space<vmem>>, vector<16x128xf32>,
    return
  }
  func.func @transform_0(%arg0: i32) -> (i32, i32) {
    %c0_i32 = arith.constant 0 : i32
    %c0_i32_0 = arith.constant 0 : i32
    return %arg0, %c0_i32 : i32, i32
  }
  func.func @transform_1(%arg0: i32) -> (i32, i32) {
    %c0_i32 = arith.constant 0 : i32
    %c0_i32_0 = arith.constant 0 : i32
    %c0_i32_1 = arith.constant 0 : i32
    return %c0_i32, %c0_i32_0 : i32, i32
  }
  func.func @transform_2(%arg0: i32) -> (i32, i32) {
    %c0_i32 = arith.constant 0 : i32
    %c0_i32_0 = arith.constant 0 : i32
    %c0_i32_1 = arith.constant 0 : i32
    return %c0_i32, %c0_i32_0 : i32, i32
  }
  func.func @transform_3(%arg0: i32) -> (i32, i32) {
    %c0_i32 = arith.constant 0 : i32
    %c0_i32_0 = arith.constant 0 : i32
    %c0_i32_1 = arith.constant 0 : i32
    return %c0_i32, %c0_i32_0 : i32, i32
  }
  func.func @transform_4(%arg0: i32) -> (i32, i32) {
    %c0_i32 = arith.constant 0 : i32
    %c0_i32_0 = arith.constant 0 : i32
    %c0_i32_1 = arith.constant 0 : i32
    return %c0_i32, %c0_i32_0 : i32, i32
  }
  func.func @transform_5(%arg0: i32) -> (i32, i32) {
    %c0_i32 = arith.constant 0 : i32
    %c0_i32_0 = arith.constant 0 : i32
    %c0_i32_1 = arith.constant 0 : i32
    return %c0_i32, %c0_i32_0 : i32, i32
  }
  func.func @transform_6(%arg0: i32) -> (i32, i32) {
    %c0_i32 = arith.constant 0 : i32
    %c0_i32_0 = arith.constant 0 : i32
    %c0_i32_1 = arith.constant 0 : i32
    return %c0_i32, %c0_i32_0 : i32, i32
  }
  func.func @transform_7(%arg0: i32) -> (i32, i32) {
    %c0_i32 = arith.constant 0 : i32
    %c0_i32_0 = arith.constant 0 : i32
    return %arg0, %c0_i32 : i32, i32
  }
}

</mosaic_0001>

<llo_original>
// kernel: a3c_mlp_forward.1
$region0: #{a3c_mlp_forward.1}
  #allocation0 [shape = 'u32[]', space=smem, size = 0x4, offset = 0x4, fixed_abs, tag = 'smem constant byte address 0x4 - core index']
  #allocation1 [shape = 'u32[144,128]{1,0:T(1,128)}', space=vmem, size = 0x12000, scoped, tag = 'internal scratch']
  %s0 = inlined_call_operand.vmem [shape: f32[16,16], index: 0, kind: input, shape index: {}]
  %s1 = inlined_call_operand.hbm [shape: bf16[16,640], index: 1, kind: input, shape index: {}]
  %s2 = inlined_call_operand.hbm [shape: bf16[640,640], index: 2, kind: input, shape index: {}]
  %s3 = inlined_call_operand.hbm [shape: bf16[640,384], index: 3, kind: input, shape index: {}]
  %s4 = inlined_call_operand.hbm [shape: bf16[384,384], index: 4, kind: input, shape index: {}]
  %s5 = inlined_call_operand.hbm [shape: bf16[384,128], index: 5, kind: input, shape index: {}]
  %s6 = inlined_call_operand.vmem [shape: f32[2,2176], index: 6, kind: input, shape index: {}]
  %s7 = inlined_call_operand.vmem [shape: f32[16,128], index: 7, kind: output, shape index: {}]
  %s8 = sld [smem:[#allocation0]]
  $region58: #{a3c_mlp_forward.1} parent=0
    _
  %s10 = ssub.s32 1, %s8
  %s11 = scalar_select 0, %s10, %s8
  $region1: #{a3c_mlp_forward.1} parent=0
    #allocation2 [shape = 'u8[20480]{0}', space=vmem, size = 0x5000, scoped, tag = 'input window, operand 1, single buffered']
    #allocation3 [shape = 's32[1]{0}', space=sflag, size = 0x4, scoped, tag = 'scoped memory for a3c_mlp_forward.1']
    #allocation4 [shape = 'u8[819200]{0}', space=vmem, size = 0xc8000, scoped, tag = 'input window, operand 2, single buffered']
    #allocation5 [shape = 's32[1]{0}', space=sflag, size = 0x4, scoped, tag = 'scoped memory for a3c_mlp_forward.1']
    #allocation6 [shape = 'u8[491520]{0}', space=vmem, size = 0x78000, scoped, tag = 'input window, operand 3, single buffered']
    #allocation7 [shape = 'u8[294912]{0}', space=vmem, size = 0x48000, scoped, tag = 'input window, operand 4, single buffered']
    #allocation8 [shape = 's32[1]{0}', space=sflag, size = 0x4, scoped, tag = 'scoped memory for a3c_mlp_forward.1']
    #allocation9 [shape = 'u8[98304]{0}', space=vmem, size = 0x18000, scoped, tag = 'input window, operand 5, single buffered']
    %12 = vsyncpa [#allocation3], 0
    %13 = vsyncpa [#allocation5], 0
    %14 = vsyncpa [#allocation8], 0
    // Predicated region
    $region2: #{a3c_mlp_forward.1} parent=1 // pred_check
      _
    $region3: #{a3c_mlp_forward.1} parent=1 // pred_check_branch
      %16 = sbr.rel (0) target = $region5
    $region4: #{a3c_mlp_forward.1} parent=1 // pred_region
      _
    $region5: #{a3c_mlp_forward.1} parent=1 // pred_fallthru
      _
    // Predicated region
    $region6: #{a3c_mlp_forward.1} parent=1 // pred_check
      _
    $region7: #{a3c_mlp_forward.1} parent=1 // pred_check_branch
      %18 = sbr.rel (0) target = $region9
    $region8: #{a3c_mlp_forward.1} parent=1 // pred_region
      %s20 = ssub.s32 640, 640
      %21 = vsyncadd [#allocation3], %s20
      %s22 = sshll.u32 [#allocation2], 4
      %s23 = int_to_ptr.vmem [resolvable:$true] %s22
      %28 = dma.hbm_to_vmem [thread:$0]  %s1, 640, %s23, [#allocation3], 320, 320, 20
    $region9: #{a3c_mlp_forward.1} parent=1 // pred_fallthru
      _
    // Predicated region
    $region10: #{a3c_mlp_forward.1} parent=1 // pred_check
      _
    $region11: #{a3c_mlp_forward.1} parent=1 // pred_check_branch
      %30 = sbr.rel (0) target = $region13
    $region12: #{a3c_mlp_forward.1} parent=1 // pred_region
      %s32 = ssub.s32 25600, 25600
      %33 = vsyncadd [#allocation5], %s32
      %s34 = sshll.u32 [#allocation4], 4
      %s35 = int_to_ptr.vmem [resolvable:$true] %s34
      %40 = dma.hbm_to_vmem [thread:$0]  %s2, 25600, %s35, [#allocation5], 320, 320, 20
    $region13: #{a3c_mlp_forward.1} parent=1 // pred_fallthru
      _
    // Predicated region
    $region14: #{a3c_mlp_forward.1} parent=1 // pred_check
      _
    $region15: #{a3c_mlp_forward.1} parent=1 // pred_check_branch
      %42 = sbr.rel (0) target = $region17
    $region16: #{a3c_mlp_forward.1} parent=1 // pred_region
      %s44 = ssub.s32 15360, 15360
      %45 = vsyncadd [#allocation5], %s44
      %s46 = sshll.u32 [#allocation6], 4
      %s47 = int_to_ptr.vmem [resolvable:$true] %s46
      %52 = dma.hbm_to_vmem [thread:$0]  %s3, 15360, %s47, [#allocation5], 192, 192, 12
    $region17: #{a3c_mlp_forward.1} parent=1 // pred_fallthru
      _
    // Predicated region
    $region18: #{a3c_mlp_forward.1} parent=1 // pred_check
      _
    $region19: #{a3c_mlp_forward.1} parent=1 // pred_check_branch
      %54 = sbr.rel (0) target = $region21
    $region20: #{a3c_mlp_forward.1} parent=1 // pred_region
      %s56 = ssub.s32 9216, 9216
      %57 = vsyncadd [#allocation8], %s56
      %s58 = sshll.u32 [#allocation7], 4
      %s59 = int_to_ptr.vmem [resolvable:$true] %s58
      %64 = dma.hbm_to_vmem [thread:$0]  %s4, 9216, %s59, [#allocation8], 192, 192, 12
    $region21: #{a3c_mlp_forward.1} parent=1 // pred_fallthru
      _
    // Predicated region
    $region22: #{a3c_mlp_forward.1} parent=1 // pred_check
      _
    $region23: #{a3c_mlp_forward.1} parent=1 // pred_check_branch
      %66 = sbr.rel (0) target = $region25
    $region24: #{a3c_mlp_forward.1} parent=1 // pred_region
      %s68 = ssub.s32 3072, 3072
      %69 = vsyncadd [#allocation8], %s68
      %s70 = sshll.u32 [#allocation9], 4
      %s71 = int_to_ptr.vmem [resolvable:$true] %s70
      %76 = dma.hbm_to_vmem [thread:$0]  %s5, 3072, %s71, [#allocation8], 64, 64, 4
    $region25: #{a3c_mlp_forward.1} parent=1 // pred_fallthru
      _
    // Predicated region
    $region26: #{a3c_mlp_forward.1} parent=1 // pred_check
      _
    $region27: #{a3c_mlp_forward.1} parent=1 // pred_check_branch
      %78 = sbr.rel (0) target = $region29
    $region28: #{a3c_mlp_forward.1} parent=1 // pred_region
      _
    $region29: #{a3c_mlp_forward.1} parent=1 // pred_fallthru
      _
    // Predicated region
    $region30: #{a3c_mlp_forward.1} parent=1 // pred_check
      _
    $region31: #{a3c_mlp_forward.1} parent=1 // pred_check_branch
      %80 = sbr.rel (0) target = $region33
    $region32: #{a3c_mlp_forward.1} parent=1 // pred_region
      %81 = dma.done [#allocation3], 640
    $region33: #{a3c_mlp_forward.1} parent=1 // pred_fallthru
      _
    // Predicated region
    $region34: #{a3c_mlp_forward.1} parent=1 // pred_check
      _
    $region35: #{a3c_mlp_forward.1} parent=1 // pred_check_branch
      %83 = sbr.rel (0) target = $region37
    $region36: #{a3c_mlp_forward.1} parent=1 // pred_region
      %84 = dma.done [#allocation5], 25600
    $region37: #{a3c_mlp_forward.1} parent=1 // pred_fallthru
      _
    // Predicated region
    $region38: #{a3c_mlp_forward.1} parent=1 // pred_check
      _
    $region39: #{a3c_mlp_forward.1} parent=1 // pred_check_branch
      %86 = sbr.rel (0) target = $region41
    $region40: #{a3c_mlp_forward.1} parent=1 // pred_region
      %87 = dma.done [#allocation5], 15360
    $region41: #{a3c_mlp_forward.1} parent=1 // pred_fallthru
      _
    // Predicated region
    $region42: #{a3c_mlp_forward.1} parent=1 // pred_check
      _
    $region43: #{a3c_mlp_forward.1} parent=1 // pred_check_branch
      %89 = sbr.rel (0) target = $region45
    $region44: #{a3c_mlp_forward.1} parent=1 // pred_region
      %90 = dma.done [#allocation8], 9216
    $region45: #{a3c_mlp_forward.1} parent=1 // pred_fallthru
      _
    // Predicated region
    $region46: #{a3c_mlp_forward.1} parent=1 // pred_check
      _
    $region47: #{a3c_mlp_forward.1} parent=1 // pred_check_branch
      %92 = sbr.rel (0) target = $region49
    $region48: #{a3c_mlp_forward.1} parent=1 // pred_region
      %93 = dma.done [#allocation8], 3072
    $region49: #{a3c_mlp_forward.1} parent=1 // pred_fallthru
      _
    %v95 = vld [vmem:[%s0] sm:$0xff]
    %v96 = vld [vmem:[%s0 + $0x8] sm:$0xff]
    %v97 = vpack.c.bf16 %v96, %v95
    %v98 = vld [vmem:[#allocation2] sm:$0xff]
    %v99 = vld [vmem:[#allocation2 + $0x8] sm:$0xff]
    %v100 = vld [vmem:[#allocation2 + $0x10] sm:$0xf]
    %v101 = vld [vmem:[#allocation2 + $0x14] sm:$0xff]
    %v102 = vld [vmem:[#allocation2 + $0x1c] sm:$0xff]
    %v103 = vld [vmem:[#allocation2 + $0x24] sm:$0xf]
    %v110 = vunpack.c.l.b16 %v98
    %v111 = vunpack.c.h.b16 %v98
    %v112 = vunpack.c.l.b16 %v99
    %v113 = vunpack.c.h.b16 %v99
    %v114 = vunpack.c.l.b16 %v100
    %v115 = vunpack.c.l.b16 %v101
    %v116 = vunpack.c.h.b16 %v101
    %v117 = vunpack.c.l.b16 %v102
    %v118 = vunpack.c.h.b16 %v102
    %v119 = vunpack.c.l.b16 %v103
    %v120 = vpack.c.b16 %v115, %v110
    %v121 = vpack.c.b16 %v116, %v111
    %v122 = vpack.c.b16 %v117, %v112
    %v123 = vpack.c.b16 %v118, %v113
    %v124 = vpack.c.b16 %v119, %v114
    %vm130 = vcmask 130048
    %v132 = vsel %vm130, %v97, 0
    %134 = vmatprep.subr.bf16.mxu0 %v121
    %135 = vmatpush1.bf16.msra.mxu0 %v120
    %136 = vmatprep.subr.bf16.mxu0 0
    %137 = vmatpush1.bf16.msra.mxu0 0
    %138 = vmatprep.subr.bf16.mxu0 0
    %139 = vmatpush1.bf16.msra.mxu0 0
    %140 = vmatprep.subr.bf16.mxu0 0
    %141 = vmatpush1.bf16.msra.mxu0 0
    %142 = vmatprep.subr.bf16.mxu0 0
    %143 = vmatpush1.bf16.msra.mxu0 0
    %144 = vmatprep.subr.bf16.mxu0 0
    %145 = vmatpush1.bf16.msra.mxu0 0
    %146 = vmatprep.subr.bf16.mxu0 0
    %147 = vmatpush1.bf16.msra.mxu0 0
    %148 = vmatprep.subr.bf16.mxu0 0
    %149 = vmatpush1.bf16.msra.mxu0 0
    %150 = vmatprep.subr.bf16.mxu0 0
    %151 = vmatpush1.bf16.msra.mxu0 0
    %152 = vmatprep.subr.bf16.mxu0 0
    %153 = vmatpush1.bf16.msra.mxu0 0
    %154 = vmatprep.subr.bf16.mxu0 0
    %155 = vmatpush1.bf16.msra.mxu0 0
    %156 = vmatprep.subr.bf16.mxu0 0
    %157 = vmatpush1.bf16.msra.mxu0 0
    %158 = vmatprep.subr.bf16.mxu0 0
    %159 = vmatpush1.bf16.msra.mxu0 0
    %160 = vmatprep.subr.bf16.mxu0 0
    %161 = vmatpush1.bf16.msra.mxu0 0
    %162 = vmatprep.subr.bf16.mxu0 0
    %163 = vmatpush1.bf16.msra.mxu0 0
    %164 = vmatprep.subr.bf16.mxu0 0
    %165 = vmatpush1.bf16.msra.mxu0 0
    %166 = vmatprep.mubr.bf16.mxu0 0
    %167 = vmatmul.mubr.bf16.gmra.mrb[0].mxu0 %v132
    %v168 = vpop.f32.mrb[0].mxu0
    %v169 = vadd.f32 0.0, %v168
    %v170 = vpop.f32.mrb[0].mxu0
    %v171 = vadd.f32 0.0, %v170
    %v172 = vpop.f32.mrb[0].mxu0
    %v173 = vadd.f32 0.0, %v172
    %v174 = vpop.f32.mrb[0].mxu0
    %v175 = vadd.f32 0.0, %v174
    %176 = vdwg.mxu0
    %177 = vmatprep.subr.bf16.mxu0 %v123
    %178 = vmatpush1.bf16.msra.mxu0 %v122
    %179 = vmatprep.subr.bf16.mxu0 0
    %180 = vmatpush1.bf16.msra.mxu0 0
    %181 = vmatprep.subr.bf16.mxu0 0
    %182 = vmatpush1.bf16.msra.mxu0 0
    %183 = vmatprep.subr.bf16.mxu0 0
    %184 = vmatpush1.bf16.msra.mxu0 0
    %185 = vmatprep.subr.bf16.mxu0 0
    %186 = vmatpush1.bf16.msra.mxu0 0
    %187 = vmatprep.subr.bf16.mxu0 0
    %188 = vmatpush1.bf16.msra.mxu0 0
    %189 = vmatprep.subr.bf16.mxu0 0
    %190 = vmatpush1.bf16.msra.mxu0 0
    %191 = vmatprep.subr.bf16.mxu0 0
    %192 = vmatpush1.bf16.msra.mxu0 0
    %193 = vmatprep.subr.bf16.mxu0 0
    %194 = vmatpush1.bf16.msra.mxu0 0
    %195 = vmatprep.subr.bf16.mxu0 0
    %196 = vmatpush1.bf16.msra.mxu0 0
    %197 = vmatprep.subr.bf16.mxu0 0
    %198 = vmatpush1.bf16.msra.mxu0 0
    %199 = vmatprep.subr.bf16.mxu0 0
    %200 = vmatpush1.bf16.msra.mxu0 0
    %201 = vmatprep.subr.bf16.mxu0 0
    %202 = vmatpush1.bf16.msra.mxu0 0
    %203 = vmatprep.subr.bf16.mxu0 0
    %204 = vmatpush1.bf16.msra.mxu0 0
    %205 = vmatprep.subr.bf16.mxu0 0
    %206 = vmatpush1.bf16.msra.mxu0 0
    %207 = vmatprep.subr.bf16.mxu0 0
    %208 = vmatpush1.bf16.msra.mxu0 0
    %209 = vmatprep.mubr.bf16.mxu0 0
    %210 = vmatmul.mubr.bf16.gmra.mrb[0].mxu0 %v132
    %v211 = vpop.f32.mrb[0].mxu0
    %v212 = vadd.f32 0.0, %v211
    %v213 = vpop.f32.mrb[0].mxu0
    %v214 = vadd.f32 0.0, %v213
    %v215 = vpop.f32.mrb[0].mxu0
    %v216 = vadd.f32 0.0, %v215
    %v217 = vpop.f32.mrb[0].mxu0
    %v218 = vadd.f32 0.0, %v217
    %219 = vdwg.mxu0
    %220 = vmatprep.subr.bf16.mxu0 0
    %221 = vmatpush1.bf16.msra.mxu0 %v124
    %222 = vmatprep.subr.bf16.mxu0 0
    %223 = vmatpush1.bf16.msra.mxu0 0
    %224 = vmatprep.subr.bf16.mxu0 0
    %225 = vmatpush1.bf16.msra.mxu0 0
    %226 = vmatprep.subr.bf16.mxu0 0
    %227 = vmatpush1.bf16.msra.mxu0 0
    %228 = vmatprep.subr.bf16.mxu0 0
    %229 = vmatpush1.bf16.msra.mxu0 0
    %230 = vmatprep.subr.bf16.mxu0 0
    %231 = vmatpush1.bf16.msra.mxu0 0
    %232 = vmatprep.subr.bf16.mxu0 0
    %233 = vmatpush1.bf16.msra.mxu0 0
    %234 = vmatprep.subr.bf16.mxu0 0
    %235 = vmatpush1.bf16.msra.mxu0 0
    %236 = vmatprep.subr.bf16.mxu0 0
    %237 = vmatpush1.bf16.msra.mxu0 0
    %238 = vmatprep.subr.bf16.mxu0 0
    %239 = vmatpush1.bf16.msra.mxu0 0
    %240 = vmatprep.subr.bf16.mxu0 0
    %241 = vmatpush1.bf16.msra.mxu0 0
    %242 = vmatprep.subr.bf16.mxu0 0
    %243 = vmatpush1.bf16.msra.mxu0 0
    %244 = vmatprep.subr.bf16.mxu0 0
    %245 = vmatpush1.bf16.msra.mxu0 0
    %246 = vmatprep.subr.bf16.mxu0 0
    %247 = vmatpush1.bf16.msra.mxu0 0
    %248 = vmatprep.subr.bf16.mxu0 0
    %249 = vmatpush1.bf16.msra.mxu0 0
    %250 = vmatprep.subr.bf16.mxu0 0
    %251 = vmatpush1.bf16.msra.mxu0 0
    %252 = vmatprep.mubr.bf16.mxu0 0
    %253 = vmatmul.mubr.bf16.gmra.mrb[0].mxu0 %v132
    %v254 = vpop.f32.mrb[0].mxu0
    %v255 = vadd.f32 0.0, %v254
    %v256 = vpop.f32.mrb[0].mxu0
    %v257 = vpop.f32.mrb[0].mxu0
    %v258 = vadd.f32 0.0, %v257
    %v259 = vpop.f32.mrb[0].mxu0
    %260 = vdwg.mxu0
    %s261 = scalar_lea.vmem %s6, 1
    %v262 = vld [vmem:[%s261] ss:$2 sm:$0x1f]
    %v264 = vlaneseq
    %v265 = vshrl.u32 %v264, 7
    %v266 = vsub.s32 0, %v265
    %v267 = vrot.slane %v262, %v266
    %v268 = vlaneseq
    %v269 = vshrl.u32 %v268, 7
    %v270 = vsub.s32 1, %v269
    %v271 = vrot.slane %v262, %v270
    %v272 = vlaneseq
    %v273 = vshrl.u32 %v272, 7
    %v274 = vsub.s32 2, %v273
    %v275 = vrot.slane %v262, %v274
    %v276 = vlaneseq
    %v277 = vshrl.u32 %v276, 7
    %v278 = vsub.s32 3, %v277
    %v279 = vrot.slane %v262, %v278
    %v280 = vlaneseq
    %v281 = vshrl.u32 %v280, 7
    %v282 = vsub.s32 4, %v281
    %v283 = vrot.slane %v262, %v282
    %v289 = vmul.f32 %v169, %v267
    %v290 = vmul.f32 %v171, %v271
    %v291 = vmul.f32 %v212, %v275
    %v292 = vmul.f32 %v214, %v279
    %v293 = vmul.f32 %v255, %v283
    %v294 = vmul.f32 %v173, %v267
    %v295 = vmul.f32 %v175, %v271
    %v296 = vmul.f32 %v216, %v275
    %v297 = vmul.f32 %v218, %v279
    %v298 = vmul.f32 %v258, %v283
    %v299 = vld [vmem:[%s6] ss:$2 sm:$0x1f]
    %v301 = vlaneseq
    %v302 = vshrl.u32 %v301, 7
    %v303 = vsub.s32 0, %v302
    %v304 = vrot.slane %v299, %v303
    %v305 = vlaneseq
    %v306 = vshrl.u32 %v305, 7
    %v307 = vsub.s32 1, %v306
    %v308 = vrot.slane %v299, %v307
    %v309 = vlaneseq
    %v310 = vshrl.u32 %v309, 7
    %v311 = vsub.s32 2, %v310
    %v312 = vrot.slane %v299, %v311
    %v313 = vlaneseq
    %v314 = vshrl.u32 %v313, 7
    %v315 = vsub.s32 3, %v314
    %v316 = vrot.slane %v299, %v315
    %v317 = vlaneseq
    %v318 = vshrl.u32 %v317, 7
    %v319 = vsub.s32 4, %v318
    %v320 = vrot.slane %v299, %v319
    %v326 = vadd.f32 %v289, %v304
    %v327 = vadd.f32 %v290, %v308
    %v328 = vadd.f32 %v291, %v312
    %v329 = vadd.f32 %v292, %v316
    %v330 = vadd.f32 %v293, %v320
    %v331 = vadd.f32 %v294, %v304
    %v332 = vadd.f32 %v295, %v308
    %v333 = vadd.f32 %v296, %v312
    %v334 = vadd.f32 %v297, %v316
    %v335 = vadd.f32 %v298, %v320
    %v336 = vmul.f32 %v326, 0.1
    %v337 = vmul.f32 %v327, 0.1
    %v338 = vmul.f32 %v328, 0.1
    %v339 = vmul.f32 %v329, 0.1
    %v340 = vmul.f32 %v330, 0.1
    %v341 = vmul.f32 %v331, 0.1
    %v342 = vmul.f32 %v332, 0.1
    %v343 = vmul.f32 %v333, 0.1
    %v344 = vmul.f32 %v334, 0.1
    %v345 = vmul.f32 %v335, 0.1
    %v346 = vmax.f32 %v326, %v336
    %v347 = vmax.f32 %v327, %v337
    %v348 = vmax.f32 %v328, %v338
    %v349 = vmax.f32 %v329, %v339
    %v350 = vmax.f32 %v330, %v340
    %v351 = vmax.f32 %v331, %v341
    %v352 = vmax.f32 %v332, %v342
    %v353 = vmax.f32 %v333, %v343
    %v354 = vmax.f32 %v334, %v344
    %v355 = vmax.f32 %v335, %v345
    %v356 = vpack.c.bf16 %v351, %v346
    %v357 = vpack.c.bf16 %v352, %v347
    %v358 = vpack.c.bf16 %v353, %v348
    %v359 = vpack.c.bf16 %v354, %v349
    %v360 = vpack.c.bf16 %v355, %v350
    %v361 = vld [vmem:[#allocation4] sm:$0xff]
    %v362 = vld [vmem:[#allocation4 + $0x8] sm:$0xff]
    %v363 = vld [vmem:[#allocation4 + $0x10] sm:$0xf]
    %v364 = vld [vmem:[#allocation4 + $0x14] sm:$0xff]
    %v365 = vld [vmem:[#allocation4 + $0x1c] sm:$0xff]
    %v366 = vld [vmem:[#allocation4 + $0x24] sm:$0xf]
    %v367 = vld [vmem:[#allocation4 + $0x28] sm:$0xff]
    %v368 = vld [vmem:[#allocation4 + $0x30] sm:$0xff]
    %v369 = vld [vmem:[#allocation4 + $0x38] sm:$0xf]
    %v370 = vld [vmem:[#allocation4 + $0x3c] sm:$0xff]
    %v371 = vld [vmem:[#allocation4 + $0x44] sm:$0xff]
    %v372 = vld [vmem:[#allocation4 + $0x4c] sm:$0xf]
    %v373 = vld [vmem:[#allocation4 + $0x50] sm:$0xff]
    %v374 = vld [vmem:[#allocation4 + $0x58] sm:$0xff]
    %v375 = vld [vmem:[#allocation4 + $0x60] sm:$0xf]
    %v376 = vld [vmem:[#allocation4 + $0x64] sm:$0xff]
    %v377 = vld [vmem:[#allocation4 + $0x6c] sm:$0xff]
    %v378 = vld [vmem:[#allocation4 + $0x74] sm:$0xf]
    %v379 = vld [vmem:[#allocation4 + $0x78] sm:$0xff]
    %v380 = vld [vmem:[#allocation4 + $0x80] sm:$0xff]
    %v381 = vld [vmem:[#allocation4 + $0x88] sm:$0xf]
    %v382 = vld [vmem:[#allocation4 + $0x8c] sm:$0xff]
    %v383 = vld [vmem:[#allocation4 + $0x94] sm:$0xff]
    %v384 = vld [vmem:[#allocation4 + $0x9c] sm:$0xf]
    %v385 = vld [vmem:[#allocation4 + $0xa0] sm:$0xff]
    %v386 = vld [vmem:[#allocation4 + $0xa8] sm:$0xff]
    %v387 = vld [vmem:[#allocation4 + $0xb0] sm:$0xf]
    %v388 = vld [vmem:[#allocation4 + $0xb4] sm:$0xff]
    %v389 = vld [vmem:[#allocation4 + $0xbc] sm:$0xff]
    %v390 = vld [vmem:[#allocation4 + $0xc4] sm:$0xf]
    %v391 = vld [vmem:[#allocation4 + $0xc8] sm:$0xff]
    %v392 = vld [vmem:[#allocation4 + $0xd0] sm:$0xff]
    %v393 = vld [vmem:[#allocation4 + $0xd8] sm:$0xf]
    %v394 = vld [vmem:[#allocation4 + $0xdc] sm:$0xff]
    %v395 = vld [vmem:[#allocation4 + $0xe4] sm:$0xff]
    %v396 = vld [vmem:[#allocation4 + $0xec] sm:$0xf]
    %v397 = vld [vmem:[#allocation4 + $0xf0] sm:$0xff]
    %v398 = vld [vmem:[#allocation4 + $0xf8] sm:$0xff]
    %v399 = vld [vmem:[#allocation4 + $0x100] sm:$0xf]
    %v400 = vld [vmem:[#allocation4 + $0x104] sm:$0xff]
    %v401 = vld [vmem:[#allocation4 + $0x10c] sm:$0xff]
    %v402 = vld [vmem:[#allocation4 + $0x114] sm:$0xf]
    %v403 = vld [vmem:[#allocation4 + $0x118] sm:$0xff]
    %v404 = vld [vmem:[#allocation4 + $0x120] sm:$0xff]
    %v405 = vld [vmem:[#allocation4 + $0x128] sm:$0xf]
    %v406 = vld [vmem:[#allocation4 + $0x12c] sm:$0xff]
    %v407 = vld [vmem:[#allocation4 + $0x134] sm:$0xff]
    %v408 = vld [vmem:[#allocation4 + $0x13c] sm:$0xf]
    %v409 = vld [vmem:[#allocation4 + $0x140] sm:$0xff]
    %v410 = vld [vmem:[#allocation4 + $0x148] sm:$0xff]
    %v411 = vld [vmem:[#allocation4 + $0x150] sm:$0xf]
    %v412 = vld [vmem:[#allocation4 + $0x154] sm:$0xff]
    %v413 = vld [vmem:[#allocation4 + $0x15c] sm:$0xff]
    %v414 = vld [vmem:[#allocation4 + $0x164] sm:$0xf]
    %v415 = vld [vmem:[#allocation4 + $0x168] sm:$0xff]
    %v416 = vld [vmem:[#allocation4 + $0x170] sm:$0xff]
    %v417 = vld [vmem:[#allocation4 + $0x178] sm:$0xf]
    %v418 = vld [vmem:[#allocation4 + $0x17c] sm:$0xff]
    %v419 = vld [vmem:[#allocation4 + $0x184] sm:$0xff]
    %v420 = vld [vmem:[#allocation4 + $0x18c] sm:$0xf]
    %v421 = vld [vmem:[#allocation4 + $0x190] sm:$0xff]
    %v422 = vld [vmem:[#allocation4 + $0x198] sm:$0xff]
    %v423 = vld [vmem:[#allocation4 + $0x1a0] sm:$0xf]
    %v424 = vld [vmem:[#allocation4 + $0x1a4] sm:$0xff]
    %v425 = vld [vmem:[#allocation4 + $0x1ac] sm:$0xff]
    %v426 = vld [vmem:[#allocation4 + $0x1b4] sm:$0xf]
    %v427 = vld [vmem:[#allocation4 + $0x1b8] sm:$0xff]
    %v428 = vld [vmem:[#allocation4 + $0x1c0] sm:$0xff]
    %v429 = vld [vmem:[#allocation4 + $0x1c8] sm:$0xf]
    %v430 = vld [vmem:[#allocation4 + $0x1cc] sm:$0xff]
    %v431 = vld [vmem:[#allocation4 + $0x1d4] sm:$0xff]
    %v432 = vld [vmem:[#allocation4 + $0x1dc] sm:$0xf]
    %v433 = vld [vmem:[#allocation4 + $0x1e0] sm:$0xff]
    %v434 = vld [vmem:[#allocation4 + $0x1e8] sm:$0xff]
    %v435 = vld [vmem:[#allocation4 + $0x1f0] sm:$0xf]
    %v436 = vld [vmem:[#allocation4 + $0x1f4] sm:$0xff]
    %v437 = vld [vmem:[#allocation4 + $0x1fc] sm:$0xff]
    %v438 = vld [vmem:[#allocation4 + $0x204] sm:$0xf]
    %v439 = vld [vmem:[#allocation4 + $0x208] sm:$0xff]
    %v440 = vld [vmem:[#allocation4 + $0x210] sm:$0xff]
    %v441 = vld [vmem:[#allocation4 + $0x218] sm:$0xf]
    %v442 = vld [vmem:[#allocation4 + $0x21c] sm:$0xff]
    %v443 = vld [vmem:[#allocation4 + $0x224] sm:$0xff]
    %v444 = vld [vmem:[#allocation4 + $0x22c] sm:$0xf]
    %v445 = vld [vmem:[#allocation4 + $0x230] sm:$0xff]
    %v446 = vld [vmem:[#allocation4 + $0x238] sm:$0xff]
    %v447 = vld [vmem:[#allocation4 + $0x240] sm:$0xf]
    %v448 = vld [vmem:[#allocation4 + $0x244] sm:$0xff]
    %v449 = vld [vmem:[#allocation4 + $0x24c] sm:$0xff]
    %v450 = vld [vmem:[#allocation4 + $0x254] sm:$0xf]
    %v451 = vld [vmem:[#allocation4 + $0x258] sm:$0xff]
    %v452 = vld [vmem:[#allocation4 + $0x260] sm:$0xff]
    %v453 = vld [vmem:[#allocation4 + $0x268] sm:$0xf]
    %v454 = vld [vmem:[#allocation4 + $0x26c] sm:$0xff]
    %v455 = vld [vmem:[#allocation4 + $0x274] sm:$0xff]
    %v456 = vld [vmem:[#allocation4 + $0x27c] sm:$0xf]
    %v457 = vld [vmem:[#allocation4 + $0x280] sm:$0xff]
    %v458 = vld [vmem:[#allocation4 + $0x288] sm:$0xff]
    %v459 = vld [vmem:[#allocation4 + $0x290] sm:$0xf]
    %v460 = vld [vmem:[#allocation4 + $0x294] sm:$0xff]
    %v461 = vld [vmem:[#allocation4 + $0x29c] sm:$0xff]
    %v462 = vld [vmem:[#allocation4 + $0x2a4] sm:$0xf]
    %v463 = vld [vmem:[#allocation4 + $0x2a8] sm:$0xff]
    %v464 = vld [vmem:[#allocation4 + $0x2b0] sm:$0xff]
    %v465 = vld [vmem:[#allocation4 + $0x2b8] sm:$0xf]
    %v466 = vld [vmem:[#allocation4 + $0x2bc] sm:$0xff]
    %v467 = vld [vmem:[#allocation4 + $0x2c4] sm:$0xff]
    %v468 = vld [vmem:[#allocation4 + $0x2cc] sm:$0xf]
    %v469 = vld [vmem:[#allocation4 + $0x2d0] sm:$0xff]
    %v470 = vld [vmem:[#allocation4 + $0x2d8] sm:$0xff]
    %v471 = vld [vmem:[#allocation4 + $0x2e0] sm:$0xf]
    %v472 = vld [vmem:[#allocation4 + $0x2e4] sm:$0xff]
    %v473 = vld [vmem:[#allocation4 + $0x2ec] sm:$0xff]
    %v474 = vld [vmem:[#allocation4 + $0x2f4] sm:$0xf]
    %v475 = vld [vmem:[#allocation4 + $0x2f8] sm:$0xff]
    %v476 = vld [vmem:[#allocation4 + $0x300] sm:$0xff]
    %v477 = vld [vmem:[#allocation4 + $0x308] sm:$0xf]
    %v478 = vld [vmem:[#allocation4 + $0x30c] sm:$0xff]
    %v479 = vld [vmem:[#allocation4 + $0x314] sm:$0xff]
    %v480 = vld [vmem:[#allocation4 + $0x31c] sm:$0xf]
    %v481 = vld [vmem:[#allocation4 + $0x320] sm:$0xff]
    %v482 = vld [vmem:[#allocation4 + $0x328] sm:$0xff]
    %v483 = vld [vmem:[#allocation4 + $0x330] sm:$0xf]
    %v484 = vld [vmem:[#allocation4 + $0x334] sm:$0xff]
    %v485 = vld [vmem:[#allocation4 + $0x33c] sm:$0xff]
    %v486 = vld [vmem:[#allocation4 + $0x344] sm:$0xf]
    %v487 = vld [vmem:[#allocation4 + $0x348] sm:$0xff]
    %v488 = vld [vmem:[#allocation4 + $0x350] sm:$0xff]
    %v489 = vld [vmem:[#allocation4 + $0x358] sm:$0xf]
    %v490 = vld [vmem:[#allocation4 + $0x35c] sm:$0xff]
    %v491 = vld [vmem:[#allocation4 + $0x364] sm:$0xff]
    %v492 = vld [vmem:[#allocation4 + $0x36c] sm:$0xf]
    %v493 = vld [vmem:[#allocation4 + $0x370] sm:$0xff]
    %v494 = vld [vmem:[#allocation4 + $0x378] sm:$0xff]
    %v495 = vld [vmem:[#allocation4 + $0x380] sm:$0xf]
    %v496 = vld [vmem:[#allocation4 + $0x384] sm:$0xff]
    %v497 = vld [vmem:[#allocation4 + $0x38c] sm:$0xff]
    %v498 = vld [vmem:[#allocation4 + $0x394] sm:$0xf]
    %v499 = vld [vmem:[#allocation4 + $0x398] sm:$0xff]
    %v500 = vld [vmem:[#allocation4 + $0x3a0] sm:$0xff]
    %v501 = vld [vmem:[#allocation4 + $0x3a8] sm:$0xf]
    %v502 = vld [vmem:[#allocation4 + $0x3ac] sm:$0xff]
    %v503 = vld [vmem:[#allocation4 + $0x3b4] sm:$0xff]
    %v504 = vld [vmem:[#allocation4 + $0x3bc] sm:$0xf]
    %v505 = vld [vmem:[#allocation4 + $0x3c0] sm:$0xff]
    %v506 = vld [vmem:[#allocation4 + $0x3c8] sm:$0xff]
    %v507 = vld [vmem:[#allocation4 + $0x3d0] sm:$0xf]
    %v508 = vld [vmem:[#allocation4 + $0x3d4] sm:$0xff]
    %v509 = vld [vmem:[#allocation4 + $0x3dc] sm:$0xff]
    %v510 = vld [vmem:[#allocation4 + $0x3e4] sm:$0xf]
    %v511 = vld [vmem:[#allocation4 + $0x3e8] sm:$0xff]
    %v512 = vld [vmem:[#allocation4 + $0x3f0] sm:$0xff]
    %v513 = vld [vmem:[#allocation4 + $0x3f8] sm:$0xf]
    %v514 = vld [vmem:[#allocation4 + $0x3fc] sm:$0xff]
    %v515 = vld [vmem:[#allocation4 + $0x404] sm:$0xff]
    %v516 = vld [vmem:[#allocation4 + $0x40c] sm:$0xf]
    %v517 = vld [vmem:[#allocation4 + $0x410] sm:$0xff]
    %v518 = vld [vmem:[#allocation4 + $0x418] sm:$0xff]
    %v519 = vld [vmem:[#allocation4 + $0x420] sm:$0xf]
    %v520 = vld [vmem:[#allocation4 + $0x424] sm:$0xff]
    %v521 = vld [vmem:[#allocation4 + $0x42c] sm:$0xff]
    %v522 = vld [vmem:[#allocation4 + $0x434] sm:$0xf]
    %v523 = vld [vmem:[#allocation4 + $0x438] sm:$0xff]
    %v524 = vld [vmem:[#allocation4 + $0x440] sm:$0xff]
    %v525 = vld [vmem:[#allocation4 + $0x448] sm:$0xf]
    %v526 = vld [vmem:[#allocation4 + $0x44c] sm:$0xff]
    %v527 = vld [vmem:[#allocation4 + $0x454] sm:$0xff]
    %v528 = vld [vmem:[#allocation4 + $0x45c] sm:$0xf]
    %v529 = vld [vmem:[#allocation4 + $0x460] sm:$0xff]
    %v530 = vld [vmem:[#allocation4 + $0x468] sm:$0xff]
    %v531 = vld [vmem:[#allocation4 + $0x470] sm:$0xf]
    %v532 = vld [vmem:[#allocation4 + $0x474] sm:$0xff]
    %v533 = vld [vmem:[#allocation4 + $0x47c] sm:$0xff]
    %v534 = vld [vmem:[#allocation4 + $0x484] sm:$0xf]
    %v535 = vld [vmem:[#allocation4 + $0x488] sm:$0xff]
    %v536 = vld [vmem:[#allocation4 + $0x490] sm:$0xff]
    %v537 = vld [vmem:[#allocation4 + $0x498] sm:$0xf]
    %v538 = vld [vmem:[#allocation4 + $0x49c] sm:$0xff]
    %v539 = vld [vmem:[#allocation4 + $0x4a4] sm:$0xff]
    %v540 = vld [vmem:[#allocation4 + $0x4ac] sm:$0xf]
    %v541 = vld [vmem:[#allocation4 + $0x4b0] sm:$0xff]
    %v542 = vld [vmem:[#allocation4 + $0x4b8] sm:$0xff]
    %v543 = vld [vmem:[#allocation4 + $0x4c0] sm:$0xf]
    %v544 = vld [vmem:[#allocation4 + $0x4c4] sm:$0xff]
    %v545 = vld [vmem:[#allocation4 + $0x4cc] sm:$0xff]
    %v546 = vld [vmem:[#allocation4 + $0x4d4] sm:$0xf]
    %v547 = vld [vmem:[#allocation4 + $0x4d8] sm:$0xff]
    %v548 = vld [vmem:[#allocation4 + $0x4e0] sm:$0xff]
    %v549 = vld [vmem:[#allocation4 + $0x4e8] sm:$0xf]
    %v550 = vld [vmem:[#allocation4 + $0x4ec] sm:$0xff]
    %v551 = vld [vmem:[#allocation4 + $0x4f4] sm:$0xff]
    %v552 = vld [vmem:[#allocation4 + $0x4fc] sm:$0xf]
    %v553 = vld [vmem:[#allocation4 + $0x500] sm:$0xff]
    %v554 = vld [vmem:[#allocation4 + $0x508] sm:$0xff]
    %v555 = vld [vmem:[#allocation4 + $0x510] sm:$0xf]
    %v556 = vld [vmem:[#allocation4 + $0x514] sm:$0xff]
    %v557 = vld [vmem:[#allocation4 + $0x51c] sm:$0xff]
    %v558 = vld [vmem:[#allocation4 + $0x524] sm:$0xf]
    %v559 = vld [vmem:[#allocation4 + $0x528] sm:$0xff]
    %v560 = vld [vmem:[#allocation4 + $0x530] sm:$0xff]
    %v561 = vld [vmem:[#allocation4 + $0x538] sm:$0xf]
    %v562 = vld [vmem:[#allocation4 + $0x53c] sm:$0xff]
    %v563 = vld [vmem:[#allocation4 + $0x544] sm:$0xff]
    %v564 = vld [vmem:[#allocation4 + $0x54c] sm:$0xf]
    %v565 = vld [vmem:[#allocation4 + $0x550] sm:$0xff]
    %v566 = vld [vmem:[#allocation4 + $0x558] sm:$0xff]
    %v567 = vld [vmem:[#allocation4 + $0x560] sm:$0xf]
    %v568 = vld [vmem:[#allocation4 + $0x564] sm:$0xff]
    %v569 = vld [vmem:[#allocation4 + $0x56c] sm:$0xff]
    %v570 = vld [vmem:[#allocation4 + $0x574] sm:$0xf]
    %v571 = vld [vmem:[#allocation4 + $0x578] sm:$0xff]
    %v572 = vld [vmem:[#allocation4 + $0x580] sm:$0xff]
    %v573 = vld [vmem:[#allocation4 + $0x588] sm:$0xf]
    %v574 = vld [vmem:[#allocation4 + $0x58c] sm:$0xff]
    %v575 = vld [vmem:[#allocation4 + $0x594] sm:$0xff]
    %v576 = vld [vmem:[#allocation4 + $0x59c] sm:$0xf]
    %v577 = vld [vmem:[#allocation4 + $0x5a0] sm:$0xff]
    %v578 = vld [vmem:[#allocation4 + $0x5a8] sm:$0xff]
    %v579 = vld [vmem:[#allocation4 + $0x5b0] sm:$0xf]
    %v580 = vld [vmem:[#allocation4 + $0x5b4] sm:$0xff]
    %v581 = vld [vmem:[#allocation4 + $0x5bc] sm:$0xff]
    %v582 = vld [vmem:[#allocation4 + $0x5c4] sm:$0xf]
    %v583 = vld [vmem:[#allocation4 + $0x5c8] sm:$0xff]
    %v584 = vld [vmem:[#allocation4 + $0x5d0] sm:$0xff]
    %v585 = vld [vmem:[#allocation4 + $0x5d8] sm:$0xf]
    %v586 = vld [vmem:[#allocation4 + $0x5dc] sm:$0xff]
    %v587 = vld [vmem:[#allocation4 + $0x5e4] sm:$0xff]
    %v588 = vld [vmem:[#allocation4 + $0x5ec] sm:$0xf]
    %v589 = vld [vmem:[#allocation4 + $0x5f0] sm:$0xff]
    %v590 = vld [vmem:[#allocation4 + $0x5f8] sm:$0xff]
    %v591 = vld [vmem:[#allocation4 + $0x600] sm:$0xf]
    %v592 = vld [vmem:[#allocation4 + $0x604] sm:$0xff]
    %v593 = vld [vmem:[#allocation4 + $0x60c] sm:$0xff]
    %v594 = vld [vmem:[#allocation4 + $0x614] sm:$0xf]
    %v595 = vld [vmem:[#allocation4 + $0x618] sm:$0xff]
    %v596 = vld [vmem:[#allocation4 + $0x620] sm:$0xff]
    %v597 = vld [vmem:[#allocation4 + $0x628] sm:$0xf]
    %v598 = vld [vmem:[#allocation4 + $0x62c] sm:$0xff]
    %v599 = vld [vmem:[#allocation4 + $0x634] sm:$0xff]
    %v600 = vld [vmem:[#allocation4 + $0x63c] sm:$0xf]
    %v841 = vunpack.c.l.b16 %v361
    %v842 = vunpack.c.h.b16 %v361
    %v843 = vunpack.c.l.b16 %v362
    %v844 = vunpack.c.h.b16 %v362
    %v845 = vunpack.c.l.b16 %v363
    %v846 = vunpack.c.l.b16 %v364
    %v847 = vunpack.c.h.b16 %v364
    %v848 = vunpack.c.l.b16 %v365
    %v849 = vunpack.c.h.b16 %v365
    %v850 = vunpack.c.l.b16 %v366
    %v851 = vunpack.c.l.b16 %v367
    %v852 = vunpack.c.h.b16 %v367
    %v853 = vunpack.c.l.b16 %v368
    %v854 = vunpack.c.h.b16 %v368
    %v855 = vunpack.c.l.b16 %v369
    %v856 = vunpack.c.l.b16 %v370
    %v857 = vunpack.c.h.b16 %v370
    %v858 = vunpack.c.l.b16 %v371
    %v859 = vunpack.c.h.b16 %v371
    %v860 = vunpack.c.l.b16 %v372
    %v861 = vunpack.c.l.b16 %v373
    %v862 = vunpack.c.h.b16 %v373
    %v863 = vunpack.c.l.b16 %v374
    %v864 = vunpack.c.h.b16 %v374
    %v865 = vunpack.c.l.b16 %v375
    %v866 = vunpack.c.l.b16 %v376
    %v867 = vunpack.c.h.b16 %v376
    %v868 = vunpack.c.l.b16 %v377
    %v869 = vunpack.c.h.b16 %v377
    %v870 = vunpack.c.l.b16 %v378
    %v871 = vunpack.c.l.b16 %v379
    %v872 = vunpack.c.h.b16 %v379
    %v873 = vunpack.c.l.b16 %v380
    %v874 = vunpack.c.h.b16 %v380
    %v875 = vunpack.c.l.b16 %v381
    %v876 = vunpack.c.l.b16 %v382
    %v877 = vunpack.c.h.b16 %v382
    %v878 = vunpack.c.l.b16 %v383
    %v879 = vunpack.c.h.b16 %v383
    %v880 = vunpack.c.l.b16 %v384
    %v881 = vunpack.c.l.b16 %v385
    %v882 = vunpack.c.h.b16 %v385
    %v883 = vunpack.c.l.b16 %v386
    %v884 = vunpack.c.h.b16 %v386
    %v885 = vunpack.c.l.b16 %v387
    %v886 = vunpack.c.l.b16 %v388
    %v887 = vunpack.c.h.b16 %v388
    %v888 = vunpack.c.l.b16 %v389
    %v889 = vunpack.c.h.b16 %v389
    %v890 = vunpack.c.l.b16 %v390
    %v891 = vunpack.c.l.b16 %v391
    %v892 = vunpack.c.h.b16 %v391
    %v893 = vunpack.c.l.b16 %v392
    %v894 = vunpack.c.h.b16 %v392
    %v895 = vunpack.c.l.b16 %v393
    %v896 = vunpack.c.l.b16 %v394
    %v897 = vunpack.c.h.b16 %v394
    %v898 = vunpack.c.l.b16 %v395
    %v899 = vunpack.c.h.b16 %v395
    %v900 = vunpack.c.l.b16 %v396
    %v901 = vunpack.c.l.b16 %v397
    %v902 = vunpack.c.h.b16 %v397
    %v903 = vunpack.c.l.b16 %v398
    %v904 = vunpack.c.h.b16 %v398
    %v905 = vunpack.c.l.b16 %v399
    %v906 = vunpack.c.l.b16 %v400
    %v907 = vunpack.c.h.b16 %v400
    %v908 = vunpack.c.l.b16 %v401
    %v909 = vunpack.c.h.b16 %v401
    %v910 = vunpack.c.l.b16 %v402
    %v911 = vunpack.c.l.b16 %v403
    %v912 = vunpack.c.h.b16 %v403
    %v913 = vunpack.c.l.b16 %v404
    %v914 = vunpack.c.h.b16 %v404
    %v915 = vunpack.c.l.b16 %v405
    %v916 = vunpack.c.l.b16 %v406
    %v917 = vunpack.c.h.b16 %v406
    %v918 = vunpack.c.l.b16 %v407
    %v919 = vunpack.c.h.b16 %v407
    %v920 = vunpack.c.l.b16 %v408
    %v921 = vunpack.c.l.b16 %v409
    %v922 = vunpack.c.h.b16 %v409
    %v923 = vunpack.c.l.b16 %v410
    %v924 = vunpack.c.h.b16 %v410
    %v925 = vunpack.c.l.b16 %v411
    %v926 = vunpack.c.l.b16 %v412
    %v927 = vunpack.c.h.b16 %v412
    %v928 = vunpack.c.l.b16 %v413
    %v929 = vunpack.c.h.b16 %v413
    %v930 = vunpack.c.l.b16 %v414
    %v931 = vunpack.c.l.b16 %v415
    %v932 = vunpack.c.h.b16 %v415
    %v933 = vunpack.c.l.b16 %v416
    %v934 = vunpack.c.h.b16 %v416
    %v935 = vunpack.c.l.b16 %v417
    %v936 = vunpack.c.l.b16 %v418
    %v937 = vunpack.c.h.b16 %v418
    %v938 = vunpack.c.l.b16 %v419
    %v939 = vunpack.c.h.b16 %v419
    %v940 = vunpack.c.l.b16 %v420
    %v941 = vunpack.c.l.b16 %v421
    %v942 = vunpack.c.h.b16 %v421
    %v943 = vunpack.c.l.b16 %v422
    %v944 = vunpack.c.h.b16 %v422
    %v945 = vunpack.c.l.b16 %v423
    %v946 = vunpack.c.l.b16 %v424
    %v947 = vunpack.c.h.b16 %v424
    %v948 = vunpack.c.l.b16 %v425
    %v949 = vunpack.c.h.b16 %v425
    %v950 = vunpack.c.l.b16 %v426
    %v951 = vunpack.c.l.b16 %v427
    %v952 = vunpack.c.h.b16 %v427
    %v953 = vunpack.c.l.b16 %v428
    %v954 = vunpack.c.h.b16 %v428
    %v955 = vunpack.c.l.b16 %v429
    %v956 = vunpack.c.l.b16 %v430
    %v957 = vunpack.c.h.b16 %v430
    %v958 = vunpack.c.l.b16 %v431
    %v959 = vunpack.c.h.b16 %v431
    %v960 = vunpack.c.l.b16 %v432
    %v961 = vunpack.c.l.b16 %v433
    %v962 = vunpack.c.h.b16 %v433
    %v963 = vunpack.c.l.b16 %v434
    %v964 = vunpack.c.h.b16 %v434
    %v965 = vunpack.c.l.b16 %v435
    %v966 = vunpack.c.l.b16 %v436
    %v967 = vunpack.c.h.b16 %v436
    %v968 = vunpack.c.l.b16 %v437
    %v969 = vunpack.c.h.b16 %v437
    %v970 = vunpack.c.l.b16 %v438
    %v971 = vunpack.c.l.b16 %v439
    %v972 = vunpack.c.h.b16 %v439
    %v973 = vunpack.c.l.b16 %v440
    %v974 = vunpack.c.h.b16 %v440
    %v975 = vunpack.c.l.b16 %v441
    %v976 = vunpack.c.l.b16 %v442
    %v977 = vunpack.c.h.b16 %v442
    %v978 = vunpack.c.l.b16 %v443
    %v979 = vunpack.c.h.b16 %v443
    %v980 = vunpack.c.l.b16 %v444
    %v981 = vunpack.c.l.b16 %v445
    %v982 = vunpack.c.h.b16 %v445
    %v983 = vunpack.c.l.b16 %v446
    %v984 = vunpack.c.h.b16 %v446
    %v985 = vunpack.c.l.b16 %v447
    %v986 = vunpack.c.l.b16 %v448
    %v987 = vunpack.c.h.b16 %v448
    %v988 = vunpack.c.l.b16 %v449
    %v989 = vunpack.c.h.b16 %v449
    %v990 = vunpack.c.l.b16 %v450
    %v991 = vunpack.c.l.b16 %v451
    %v992 = vunpack.c.h.b16 %v451
    %v993 = vunpack.c.l.b16 %v452
    %v994 = vunpack.c.h.b16 %v452
    %v995 = vunpack.c.l.b16 %v453
    %v996 = vunpack.c.l.b16 %v454
    %v997 = vunpack.c.h.b16 %v454
    %v998 = vunpack.c.l.b16 %v455
    %v999 = vunpack.c.h.b16 %v455
    %v1000 = vunpack.c.l.b16 %v456
    %v1001 = vunpack.c.l.b16 %v457
    %v1002 = vunpack.c.h.b16 %v457
    %v1003 = vunpack.c.l.b16 %v458
    %v1004 = vunpack.c.h.b16 %v458
    %v1005 = vunpack.c.l.b16 %v459
    %v1006 = vunpack.c.l.b16 %v460
    %v1007 = vunpack.c.h.b16 %v460
    %v1008 = vunpack.c.l.b16 %v461
    %v1009 = vunpack.c.h.b16 %v461
    %v1010 = vunpack.c.l.b16 %v462
    %v1011 = vunpack.c.l.b16 %v463
    %v1012 = vunpack.c.h.b16 %v463
    %v1013 = vunpack.c.l.b16 %v464
    %v1014 = vunpack.c.h.b16 %v464
    %v1015 = vunpack.c.l.b16 %v465
    %v1016 = vunpack.c.l.b16 %v466
    %v1017 = vunpack.c.h.b16 %v466
    %v1018 = vunpack.c.l.b16 %v467
    %v1019 = vunpack.c.h.b16 %v467
    %v1020 = vunpack.c.l.b16 %v468
    %v1021 = vunpack.c.l.b16 %v469
    %v1022 = vunpack.c.h.b16 %v469
    %v1023 = vunpack.c.l.b16 %v470
    %v1024 = vunpack.c.h.b16 %v470
    %v1025 = vunpack.c.l.b16 %v471
    %v1026 = vunpack.c.l.b16 %v472
    %v1027 = vunpack.c.h.b16 %v472
    %v1028 = vunpack.c.l.b16 %v473
    %v1029 = vunpack.c.h.b16 %v473
    %v1030 = vunpack.c.l.b16 %v474
    %v1031 = vunpack.c.l.b16 %v475
    %v1032 = vunpack.c.h.b16 %v475
    %v1033 = vunpack.c.l.b16 %v476
    %v1034 = vunpack.c.h.b16 %v476
    %v1035 = vunpack.c.l.b16 %v477
    %v1036 = vunpack.c.l.b16 %v478
    %v1037 = vunpack.c.h.b16 %v478
    %v1038 = vunpack.c.l.b16 %v479
    %v1039 = vunpack.c.h.b16 %v479
    %v1040 = vunpack.c.l.b16 %v480
    %v1041 = vunpack.c.l.b16 %v481
    %v1042 = vunpack.c.h.b16 %v481
    %v1043 = vunpack.c.l.b16 %v482
    %v1044 = vunpack.c.h.b16 %v482
    %v1045 = vunpack.c.l.b16 %v483
    %v1046 = vunpack.c.l.b16 %v484
    %v1047 = vunpack.c.h.b16 %v484
    %v1048 = vunpack.c.l.b16 %v485
    %v1049 = vunpack.c.h.b16 %v485
    %v1050 = vunpack.c.l.b16 %v486
    %v1051 = vunpack.c.l.b16 %v487
    %v1052 = vunpack.c.h.b16 %v487
    %v1053 = vunpack.c.l.b16 %v488
    %v1054 = vunpack.c.h.b16 %v488
    %v1055 = vunpack.c.l.b16 %v489
    %v1056 = vunpack.c.l.b16 %v490
    %v1057 = vunpack.c.h.b16 %v490
    %v1058 = vunpack.c.l.b16 %v491
    %v1059 = vunpack.c.h.b16 %v491
    %v1060 = vunpack.c.l.b16 %v492
    %v1061 = vunpack.c.l.b16 %v493
    %v1062 = vunpack.c.h.b16 %v493
    %v1063 = vunpack.c.l.b16 %v494
    %v1064 = vunpack.c.h.b16 %v494
    %v1065 = vunpack.c.l.b16 %v495
    %v1066 = vunpack.c.l.b16 %v496
    %v1067 = vunpack.c.h.b16 %v496
    %v1068 = vunpack.c.l.b16 %v497
    %v1069 = vunpack.c.h.b16 %v497
    %v1070 = vunpack.c.l.b16 %v498
    %v1071 = vunpack.c.l.b16 %v499
    %v1072 = vunpack.c.h.b16 %v499
    %v1073 = vunpack.c.l.b16 %v500
    %v1074 = vunpack.c.h.b16 %v500
    %v1075 = vunpack.c.l.b16 %v501
    %v1076 = vunpack.c.l.b16 %v502
    %v1077 = vunpack.c.h.b16 %v502
    %v1078 = vunpack.c.l.b16 %v503
    %v1079 = vunpack.c.h.b16 %v503
    %v1080 = vunpack.c.l.b16 %v504
    %v1081 = vunpack.c.l.b16 %v505
    %v1082 = vunpack.c.h.b16 %v505
    %v1083 = vunpack.c.l.b16 %v506
    %v1084 = vunpack.c.h.b16 %v506
    %v1085 = vunpack.c.l.b16 %v507
    %v1086 = vunpack.c.l.b16 %v508
    %v1087 = vunpack.c.h.b16 %v508
    %v1088 = vunpack.c.l.b16 %v509
    %v1089 = vunpack.c.h.b16 %v509
    %v1090 = vunpack.c.l.b16 %v510
    %v1091 = vunpack.c.l.b16 %v511
    %v1092 = vunpack.c.h.b16 %v511
    %v1093 = vunpack.c.l.b16 %v512
    %v1094 = vunpack.c.h.b16 %v512
    %v1095 = vunpack.c.l.b16 %v513
    %v1096 = vunpack.c.l.b16 %v514
    %v1097 = vunpack.c.h.b16 %v514
    %v1098 = vunpack.c.l.b16 %v515
    %v1099 = vunpack.c.h.b16 %v515
    %v1100 = vunpack.c.l.b16 %v516
    %v1101 = vunpack.c.l.b16 %v517
    %v1102 = vunpack.c.h.b16 %v517
    %v1103 = vunpack.c.l.b16 %v518
    %v1104 = vunpack.c.h.b16 %v518
    %v1105 = vunpack.c.l.b16 %v519
    %v1106 = vunpack.c.l.b16 %v520
    %v1107 = vunpack.c.h.b16 %v520
    %v1108 = vunpack.c.l.b16 %v521
    %v1109 = vunpack.c.h.b16 %v521
    %v1110 = vunpack.c.l.b16 %v522
    %v1111 = vunpack.c.l.b16 %v523
    %v1112 = vunpack.c.h.b16 %v523
    %v1113 = vunpack.c.l.b16 %v524
    %v1114 = vunpack.c.h.b16 %v524
    %v1115 = vunpack.c.l.b16 %v525
    %v1116 = vunpack.c.l.b16 %v526
    %v1117 = vunpack.c.h.b16 %v526
    %v1118 = vunpack.c.l.b16 %v527
    %v1119 = vunpack.c.h.b16 %v527
    %v1120 = vunpack.c.l.b16 %v528
    %v1121 = vunpack.c.l.b16 %v529
    %v1122 = vunpack.c.h.b16 %v529
    %v1123 = vunpack.c.l.b16 %v530
    %v1124 = vunpack.c.h.b16 %v530
    %v1125 = vunpack.c.l.b16 %v531
    %v1126 = vunpack.c.l.b16 %v532
    %v1127 = vunpack.c.h.b16 %v532
    %v1128 = vunpack.c.l.b16 %v533
    %v1129 = vunpack.c.h.b16 %v533
    %v1130 = vunpack.c.l.b16 %v534
    %v1131 = vunpack.c.l.b16 %v535
    %v1132 = vunpack.c.h.b16 %v535
    %v1133 = vunpack.c.l.b16 %v536
    %v1134 = vunpack.c.h.b16 %v536
    %v1135 = vunpack.c.l.b16 %v537
    %v1136 = vunpack.c.l.b16 %v538
    %v1137 = vunpack.c.h.b16 %v538
    %v1138 = vunpack.c.l.b16 %v539
    %v1139 = vunpack.c.h.b16 %v539
    %v1140 = vunpack.c.l.b16 %v540
    %v1141 = vunpack.c.l.b16 %v541
    %v1142 = vunpack.c.h.b16 %v541
    %v1143 = vunpack.c.l.b16 %v542
    %v1144 = vunpack.c.h.b16 %v542
    %v1145 = vunpack.c.l.b16 %v543
    %v1146 = vunpack.c.l.b16 %v544
    %v1147 = vunpack.c.h.b16 %v544
    %v1148 = vunpack.c.l.b16 %v545
    %v1149 = vunpack.c.h.b16 %v545
    %v1150 = vunpack.c.l.b16 %v546
    %v1151 = vunpack.c.l.b16 %v547
    %v1152 = vunpack.c.h.b16 %v547
    %v1153 = vunpack.c.l.b16 %v548
    %v1154 = vunpack.c.h.b16 %v548
    %v1155 = vunpack.c.l.b16 %v549
    %v1156 = vunpack.c.l.b16 %v550
    %v1157 = vunpack.c.h.b16 %v550
    %v1158 = vunpack.c.l.b16 %v551
    %v1159 = vunpack.c.h.b16 %v551
    %v1160 = vunpack.c.l.b16 %v552
    %v1161 = vunpack.c.l.b16 %v553
    %v1162 = vunpack.c.h.b16 %v553
    %v1163 = vunpack.c.l.b16 %v554
    %v1164 = vunpack.c.h.b16 %v554
    %v1165 = vunpack.c.l.b16 %v555
    %v1166 = vunpack.c.l.b16 %v556
    %v1167 = vunpack.c.h.b16 %v556
    %v1168 = vunpack.c.l.b16 %v557
    %v1169 = vunpack.c.h.b16 %v557
    %v1170 = vunpack.c.l.b16 %v558
    %v1171 = vunpack.c.l.b16 %v559
    %v1172 = vunpack.c.h.b16 %v559
    %v1173 = vunpack.c.l.b16 %v560
    %v1174 = vunpack.c.h.b16 %v560
    %v1175 = vunpack.c.l.b16 %v561
    %v1176 = vunpack.c.l.b16 %v562
    %v1177 = vunpack.c.h.b16 %v562
    %v1178 = vunpack.c.l.b16 %v563
    %v1179 = vunpack.c.h.b16 %v563
    %v1180 = vunpack.c.l.b16 %v564
    %v1181 = vunpack.c.l.b16 %v565
    %v1182 = vunpack.c.h.b16 %v565
    %v1183 = vunpack.c.l.b16 %v566
    %v1184 = vunpack.c.h.b16 %v566
    %v1185 = vunpack.c.l.b16 %v567
    %v1186 = vunpack.c.l.b16 %v568
    %v1187 = vunpack.c.h.b16 %v568
    %v1188 = vunpack.c.l.b16 %v569
    %v1189 = vunpack.c.h.b16 %v569
    %v1190 = vunpack.c.l.b16 %v570
    %v1191 = vunpack.c.l.b16 %v571
    %v1192 = vunpack.c.h.b16 %v571
    %v1193 = vunpack.c.l.b16 %v572
    %v1194 = vunpack.c.h.b16 %v572
    %v1195 = vunpack.c.l.b16 %v573
    %v1196 = vunpack.c.l.b16 %v574
    %v1197 = vunpack.c.h.b16 %v574
    %v1198 = vunpack.c.l.b16 %v575
    %v1199 = vunpack.c.h.b16 %v575
    %v1200 = vunpack.c.l.b16 %v576
    %v1201 = vunpack.c.l.b16 %v577
    %v1202 = vunpack.c.h.b16 %v577
    %v1203 = vunpack.c.l.b16 %v578
    %v1204 = vunpack.c.h.b16 %v578
    %v1205 = vunpack.c.l.b16 %v579
    %v1206 = vunpack.c.l.b16 %v580
    %v1207 = vunpack.c.h.b16 %v580
    %v1208 = vunpack.c.l.b16 %v581
    %v1209 = vunpack.c.h.b16 %v581
    %v1210 = vunpack.c.l.b16 %v582
    %v1211 = vunpack.c.l.b16 %v583
    %v1212 = vunpack.c.h.b16 %v583
    %v1213 = vunpack.c.l.b16 %v584
    %v1214 = vunpack.c.h.b16 %v584
    %v1215 = vunpack.c.l.b16 %v585
    %v1216 = vunpack.c.l.b16 %v586
    %v1217 = vunpack.c.h.b16 %v586
    %v1218 = vunpack.c.l.b16 %v587
    %v1219 = vunpack.c.h.b16 %v587
    %v1220 = vunpack.c.l.b16 %v588
    %v1221 = vunpack.c.l.b16 %v589
    %v1222 = vunpack.c.h.b16 %v589
    %v1223 = vunpack.c.l.b16 %v590
    %v1224 = vunpack.c.h.b16 %v590
    %v1225 = vunpack.c.l.b16 %v591
    %v1226 = vunpack.c.l.b16 %v592
    %v1227 = vunpack.c.h.b16 %v592
    %v1228 = vunpack.c.l.b16 %v593
    %v1229 = vunpack.c.h.b16 %v593
    %v1230 = vunpack.c.l.b16 %v594
    %v1231 = vunpack.c.l.b16 %v595
    %v1232 = vunpack.c.h.b16 %v595
    %v1233 = vunpack.c.l.b16 %v596
    %v1234 = vunpack.c.h.b16 %v596
    %v1235 = vunpack.c.l.b16 %v597
    %v1236 = vunpack.c.l.b16 %v598
    %v1237 = vunpack.c.h.b16 %v598
    %v1238 = vunpack.c.l.b16 %v599
    %v1239 = vunpack.c.h.b16 %v599
    %v1240 = vunpack.c.l.b16 %v600
    %v1241 = vpack.c.b16 %v846, %v841
    %v1242 = vpack.c.b16 %v847, %v842
    %v1243 = vpack.c.b16 %v848, %v843
    %v1244 = vpack.c.b16 %v849, %v844
    %v1245 = vpack.c.b16 %v850, %v845
    %v1246 = vpack.c.b16 %v856, %v851
    %v1247 = vpack.c.b16 %v857, %v852
    %v1248 = vpack.c.b16 %v858, %v853
    %v1249 = vpack.c.b16 %v859, %v854
    %v1250 = vpack.c.b16 %v860, %v855
    %v1251 = vpack.c.b16 %v866, %v861
    %v1252 = vpack.c.b16 %v867, %v862
    %v1253 = vpack.c.b16 %v868, %v863
    %v1254 = vpack.c.b16 %v869, %v864
    %v1255 = vpack.c.b16 %v870, %v865
    %v1256 = vpack.c.b16 %v876, %v871
    %v1257 = vpack.c.b16 %v877, %v872
    %v1258 = vpack.c.b16 %v878, %v873
    %v1259 = vpack.c.b16 %v879, %v874
    %v1260 = vpack.c.b16 %v880, %v875
    %v1261 = vpack.c.b16 %v886, %v881
    %v1262 = vpack.c.b16 %v887, %v882
    %v1263 = vpack.c.b16 %v888, %v883
    %v1264 = vpack.c.b16 %v889, %v884
    %v1265 = vpack.c.b16 %v890, %v885
    %v1266 = vpack.c.b16 %v896, %v891
    %v1267 = vpack.c.b16 %v897, %v892
    %v1268 = vpack.c.b16 %v898, %v893
    %v1269 = vpack.c.b16 %v899, %v894
    %v1270 = vpack.c.b16 %v900, %v895
    %v1271 = vpack.c.b16 %v906, %v901
    %v1272 = vpack.c.b16 %v907, %v902
    %v1273 = vpack.c.b16 %v908, %v903
    %v1274 = vpack.c.b16 %v909, %v904
    %v1275 = vpack.c.b16 %v910, %v905
    %v1276 = vpack.c.b16 %v916, %v911
    %v1277 = vpack.c.b16 %v917, %v912
    %v1278 = vpack.c.b16 %v918, %v913
    %v1279 = vpack.c.b16 %v919, %v914
    %v1280 = vpack.c.b16 %v920, %v915
    %v1281 = vpack.c.b16 %v926, %v921
    %v1282 = vpack.c.b16 %v927, %v922
    %v1283 = vpack.c.b16 %v928, %v923
    %v1284 = vpack.c.b16 %v929, %v924
    %v1285 = vpack.c.b16 %v930, %v925
    %v1286 = vpack.c.b16 %v936, %v931
    %v1287 = vpack.c.b16 %v937, %v932
    %v1288 = vpack.c.b16 %v938, %v933
    %v1289 = vpack.c.b16 %v939, %v934
    %v1290 = vpack.c.b16 %v940, %v935
    %v1291 = vpack.c.b16 %v946, %v941
    %v1292 = vpack.c.b16 %v947, %v942
    %v1293 = vpack.c.b16 %v948, %v943
    %v1294 = vpack.c.b16 %v949, %v944
    %v1295 = vpack.c.b16 %v950, %v945
    %v1296 = vpack.c.b16 %v956, %v951
    %v1297 = vpack.c.b16 %v957, %v952
    %v1298 = vpack.c.b16 %v958, %v953
    %v1299 = vpack.c.b16 %v959, %v954
    %v1300 = vpack.c.b16 %v960, %v955
    %v1301 = vpack.c.b16 %v966, %v961
    %v1302 = vpack.c.b16 %v967, %v962
    %v1303 = vpack.c.b16 %v968, %v963
    %v1304 = vpack.c.b16 %v969, %v964
    %v1305 = vpack.c.b16 %v970, %v965
    %v1306 = vpack.c.b16 %v976, %v971
    %v1307 = vpack.c.b16 %v977, %v972
    %v1308 = vpack.c.b16 %v978, %v973
    %v1309 = vpack.c.b16 %v979, %v974
    %v1310 = vpack.c.b16 %v980, %v975
    %v1311 = vpack.c.b16 %v986, %v981
    %v1312 = vpack.c.b16 %v987, %v982
    %v1313 = vpack.c.b16 %v988, %v983
    %v1314 = vpack.c.b16 %v989, %v984
    %v1315 = vpack.c.b16 %v990, %v985
    %v1316 = vpack.c.b16 %v996, %v991
    %v1317 = vpack.c.b16 %v997, %v992
    %v1318 = vpack.c.b16 %v998, %v993
    %v1319 = vpack.c.b16 %v999, %v994
    %v1320 = vpack.c.b16 %v1000, %v995
    %v1321 = vpack.c.b16 %v1006, %v1001
    %v1322 = vpack.c.b16 %v1007, %v1002
    %v1323 = vpack.c.b16 %v1008, %v1003
    %v1324 = vpack.c.b16 %v1009, %v1004
    %v1325 = vpack.c.b16 %v1010, %v1005
    %v1326 = vpack.c.b16 %v1016, %v1011
    %v1327 = vpack.c.b16 %v1017, %v1012
    %v1328 = vpack.c.b16 %v1018, %v1013
    %v1329 = vpack.c.b16 %v1019, %v1014
    %v1330 = vpack.c.b16 %v1020, %v1015
    %v1331 = vpack.c.b16 %v1026, %v1021
    %v1332 = vpack.c.b16 %v1027, %v1022
    %v1333 = vpack.c.b16 %v1028, %v1023
    %v1334 = vpack.c.b16 %v1029, %v1024
    %v1335 = vpack.c.b16 %v1030, %v1025
    %v1336 = vpack.c.b16 %v1036, %v1031
    %v1337 = vpack.c.b16 %v1037, %v1032
    %v1338 = vpack.c.b16 %v1038, %v1033
    %v1339 = vpack.c.b16 %v1039, %v1034
    %v1340 = vpack.c.b16 %v1040, %v1035
    %v1341 = vpack.c.b16 %v1046, %v1041
    %v1342 = vpack.c.b16 %v1047, %v1042
    %v1343 = vpack.c.b16 %v1048, %v1043
    %v1344 = vpack.c.b16 %v1049, %v1044
    %v1345 = vpack.c.b16 %v1050, %v1045
    %v1346 = vpack.c.b16 %v1056, %v1051
    %v1347 = vpack.c.b16 %v1057, %v1052
    %v1348 = vpack.c.b16 %v1058, %v1053
    %v1349 = vpack.c.b16 %v1059, %v1054
    %v1350 = vpack.c.b16 %v1060, %v1055
    %v1351 = vpack.c.b16 %v1066, %v1061
    %v1352 = vpack.c.b16 %v1067, %v1062
    %v1353 = vpack.c.b16 %v1068, %v1063
    %v1354 = vpack.c.b16 %v1069, %v1064
    %v1355 = vpack.c.b16 %v1070, %v1065
    %v1356 = vpack.c.b16 %v1076, %v1071
    %v1357 = vpack.c.b16 %v1077, %v1072
    %v1358 = vpack.c.b16 %v1078, %v1073
    %v1359 = vpack.c.b16 %v1079, %v1074
    %v1360 = vpack.c.b16 %v1080, %v1075
    %v1361 = vpack.c.b16 %v1086, %v1081
    %v1362 = vpack.c.b16 %v1087, %v1082
    %v1363 = vpack.c.b16 %v1088, %v1083
    %v1364 = vpack.c.b16 %v1089, %v1084
    %v1365 = vpack.c.b16 %v1090, %v1085
    %v1366 = vpack.c.b16 %v1096, %v1091
    %v1367 = vpack.c.b16 %v1097, %v1092
    %v1368 = vpack.c.b16 %v1098, %v1093
    %v1369 = vpack.c.b16 %v1099, %v1094
    %v1370 = vpack.c.b16 %v1100, %v1095
    %v1371 = vpack.c.b16 %v1106, %v1101
    %v1372 = vpack.c.b16 %v1107, %v1102
    %v1373 = vpack.c.b16 %v1108, %v1103
    %v1374 = vpack.c.b16 %v1109, %v1104
    %v1375 = vpack.c.b16 %v1110, %v1105
    %v1376 = vpack.c.b16 %v1116, %v1111
    %v1377 = vpack.c.b16 %v1117, %v1112
    %v1378 = vpack.c.b16 %v1118, %v1113
    %v1379 = vpack.c.b16 %v1119, %v1114
    %v1380 = vpack.c.b16 %v1120, %v1115
    %v1381 = vpack.c.b16 %v1126, %v1121
    %v1382 = vpack.c.b16 %v1127, %v1122
    %v1383 = vpack.c.b16 %v1128, %v1123
    %v1384 = vpack.c.b16 %v1129, %v1124
    %v1385 = vpack.c.b16 %v1130, %v1125
    %v1386 = vpack.c.b16 %v1136, %v1131
    %v1387 = vpack.c.b16 %v1137, %v1132
    %v1388 = vpack.c.b16 %v1138, %v1133
    %v1389 = vpack.c.b16 %v1139, %v1134
    %v1390 = vpack.c.b16 %v1140, %v1135
    %v1391 = vpack.c.b16 %v1146, %v1141
    %v1392 = vpack.c.b16 %v1147, %v1142
    %v1393 = vpack.c.b16 %v1148, %v1143
    %v1394 = vpack.c.b16 %v1149, %v1144
    %v1395 = vpack.c.b16 %v1150, %v1145
    %v1396 = vpack.c.b16 %v1156, %v1151
    %v1397 = vpack.c.b16 %v1157, %v1152
    %v1398 = vpack.c.b16 %v1158, %v1153
    %v1399 = vpack.c.b16 %v1159, %v1154
    %v1400 = vpack.c.b16 %v1160, %v1155
    %v1401 = vpack.c.b16 %v1166, %v1161
    %v1402 = vpack.c.b16 %v1167, %v1162
    %v1403 = vpack.c.b16 %v1168, %v1163
    %v1404 = vpack.c.b16 %v1169, %v1164
    %v1405 = vpack.c.b16 %v1170, %v1165
    %v1406 = vpack.c.b16 %v1176, %v1171
    %v1407 = vpack.c.b16 %v1177, %v1172
    %v1408 = vpack.c.b16 %v1178, %v1173
    %v1409 = vpack.c.b16 %v1179, %v1174
    %v1410 = vpack.c.b16 %v1180, %v1175
    %v1411 = vpack.c.b16 %v1186, %v1181
    %v1412 = vpack.c.b16 %v1187, %v1182
    %v1413 = vpack.c.b16 %v1188, %v1183
    %v1414 = vpack.c.b16 %v1189, %v1184
    %v1415 = vpack.c.b16 %v1190, %v1185
    %v1416 = vpack.c.b16 %v1196, %v1191
    %v1417 = vpack.c.b16 %v1197, %v1192
    %v1418 = vpack.c.b16 %v1198, %v1193
    %v1419 = vpack.c.b16 %v1199, %v1194
    %v1420 = vpack.c.b16 %v1200, %v1195
    %v1421 = vpack.c.b16 %v1206, %v1201
    %v1422 = vpack.c.b16 %v1207, %v1202
    %v1423 = vpack.c.b16 %v1208, %v1203
    %v1424 = vpack.c.b16 %v1209, %v1204
    %v1425 = vpack.c.b16 %v1210, %v1205
    %v1426 = vpack.c.b16 %v1216, %v1211
    %v1427 = vpack.c.b16 %v1217, %v1212
    %v1428 = vpack.c.b16 %v1218, %v1213
    %v1429 = vpack.c.b16 %v1219, %v1214
    %v1430 = vpack.c.b16 %v1220, %v1215
    %v1431 = vpack.c.b16 %v1226, %v1221
    %v1432 = vpack.c.b16 %v1227, %v1222
    %v1433 = vpack.c.b16 %v1228, %v1223
    %v1434 = vpack.c.b16 %v1229, %v1224
    %v1435 = vpack.c.b16 %v1230, %v1225
    %v1436 = vpack.c.b16 %v1236, %v1231
    %v1437 = vpack.c.b16 %v1237, %v1232
    %v1438 = vpack.c.b16 %v1238, %v1233
    %v1439 = vpack.c.b16 %v1239, %v1234
    %v1440 = vpack.c.b16 %v1240, %v1235
    %1641 = vmatprep.subr.bf16.mxu0 %v1242
    %1642 = vmatpush1.bf16.msra.mxu0 %v1241
    %1643 = vmatprep.subr.bf16.mxu0 %v1247
    %1644 = vmatpush1.bf16.msra.mxu0 %v1246
    %1645 = vmatprep.subr.bf16.mxu0 %v1252
    %1646 = vmatpush1.bf16.msra.mxu0 %v1251
    %1647 = vmatprep.subr.bf16.mxu0 %v1257
    %1648 = vmatpush1.bf16.msra.mxu0 %v1256
    %1649 = vmatprep.subr.bf16.mxu0 %v1262
    %1650 = vmatpush1.bf16.msra.mxu0 %v1261
    %1651 = vmatprep.subr.bf16.mxu0 %v1267
    %1652 = vmatpush1.bf16.msra.mxu0 %v1266
    %1653 = vmatprep.subr.bf16.mxu0 %v1272
    %1654 = vmatpush1.bf16.msra.mxu0 %v1271
    %1655 = vmatprep.subr.bf16.mxu0 %v1277
    %1656 = vmatpush1.bf16.msra.mxu0 %v1276
    %1657 = vmatprep.subr.bf16.mxu0 %v1282
    %1658 = vmatpush1.bf16.msra.mxu0 %v1281
    %1659 = vmatprep.subr.bf16.mxu0 %v1287
    %1660 = vmatpush1.bf16.msra.mxu0 %v1286
    %1661 = vmatprep.subr.bf16.mxu0 %v1292
    %1662 = vmatpush1.bf16.msra.mxu0 %v1291
    %1663 = vmatprep.subr.bf16.mxu0 %v1297
    %1664 = vmatpush1.bf16.msra.mxu0 %v1296
    %1665 = vmatprep.subr.bf16.mxu0 %v1302
    %1666 = vmatpush1.bf16.msra.mxu0 %v1301
    %1667 = vmatprep.subr.bf16.mxu0 %v1307
    %1668 = vmatpush1.bf16.msra.mxu0 %v1306
    %1669 = vmatprep.subr.bf16.mxu0 %v1312
    %1670 = vmatpush1.bf16.msra.mxu0 %v1311
    %1671 = vmatprep.subr.bf16.mxu0 %v1317
    %1672 = vmatpush1.bf16.msra.mxu0 %v1316
    %1673 = vmatprep.mubr.bf16.mxu0 %v357
    %1674 = vmatmul.mubr.bf16.gmra.mrb[0].mxu0 %v356
    %v1675 = vpop.f32.mrb[0].mxu0
    %v1676 = vadd.f32 0.0, %v1675
    %v1677 = vpop.f32.mrb[0].mxu0
    %v1678 = vadd.f32 0.0, %v1677
    %v1679 = vpop.f32.mrb[0].mxu0
    %v1680 = vadd.f32 0.0, %v1679
    %v1681 = vpop.f32.mrb[0].mxu0
    %v1682 = vadd.f32 0.0, %v1681
    %1683 = vdwg.mxu0
    %1684 = vmatprep.subr.bf16.mxu0 %v1322
    %1685 = vmatpush1.bf16.msra.mxu0 %v1321
    %1686 = vmatprep.subr.bf16.mxu0 %v1327
    %1687 = vmatpush1.bf16.msra.mxu0 %v1326
    %1688 = vmatprep.subr.bf16.mxu0 %v1332
    %1689 = vmatpush1.bf16.msra.mxu0 %v1331
    %1690 = vmatprep.subr.bf16.mxu0 %v1337
    %1691 = vmatpush1.bf16.msra.mxu0 %v1336
    %1692 = vmatprep.subr.bf16.mxu0 %v1342
    %1693 = vmatpush1.bf16.msra.mxu0 %v1341
    %1694 = vmatprep.subr.bf16.mxu0 %v1347
    %1695 = vmatpush1.bf16.msra.mxu0 %v1346
    %1696 = vmatprep.subr.bf16.mxu0 %v1352
    %1697 = vmatpush1.bf16.msra.mxu0 %v1351
    %1698 = vmatprep.subr.bf16.mxu0 %v1357
    %1699 = vmatpush1.bf16.msra.mxu0 %v1356
    %1700 = vmatprep.subr.bf16.mxu0 %v1362
    %1701 = vmatpush1.bf16.msra.mxu0 %v1361
    %1702 = vmatprep.subr.bf16.mxu0 %v1367
    %1703 = vmatpush1.bf16.msra.mxu0 %v1366
    %1704 = vmatprep.subr.bf16.mxu0 %v1372
    %1705 = vmatpush1.bf16.msra.mxu0 %v1371
    %1706 = vmatprep.subr.bf16.mxu0 %v1377
    %1707 = vmatpush1.bf16.msra.mxu0 %v1376
    %1708 = vmatprep.subr.bf16.mxu0 %v1382
    %1709 = vmatpush1.bf16.msra.mxu0 %v1381
    %1710 = vmatprep.subr.bf16.mxu0 %v1387
    %1711 = vmatpush1.bf16.msra.mxu0 %v1386
    %1712 = vmatprep.subr.bf16.mxu0 %v1392
    %1713 = vmatpush1.bf16.msra.mxu0 %v1391
    %1714 = vmatprep.subr.bf16.mxu0 %v1397
    %1715 = vmatpush1.bf16.msra.mxu0 %v1396
    %1716 = vmatprep.mubr.bf16.mxu0 %v359
    %1717 = vmatmul.mubr.bf16.gmra.mrb[0].mxu0 %v358
    %v1718 = vpop.f32.mrb[0].mxu0
    %v1719 = vadd.f32 %v1676, %v1718
    %v1720 = vpop.f32.mrb[0].mxu0
    %v1721 = vadd.f32 %v1678, %v1720
    %v1722 = vpop.f32.mrb[0].mxu0
    %v1723 = vadd.f32 %v1680, %v1722
    %v1724 = vpop.f32.mrb[0].mxu0
    %v1725 = vadd.f32 %v1682, %v1724
    %1726 = vdwg.mxu0
    %1727 = vmatprep.subr.bf16.mxu0 %v1402
    %1728 = vmatpush1.bf16.msra.mxu0 %v1401
    %1729 = vmatprep.subr.bf16.mxu0 %v1407
    %1730 = vmatpush1.bf16.msra.mxu0 %v1406
    %1731 = vmatprep.subr.bf16.mxu0 %v1412
    %1732 = vmatpush1.bf16.msra.mxu0 %v1411
    %1733 = vmatprep.subr.bf16.mxu0 %v1417
    %1734 = vmatpush1.bf16.msra.mxu0 %v1416
    %1735 = vmatprep.subr.bf16.mxu0 %v1422
    %1736 = vmatpush1.bf16.msra.mxu0 %v1421
    %1737 = vmatprep.subr.bf16.mxu0 %v1427
    %1738 = vmatpush1.bf16.msra.mxu0 %v1426
    %1739 = vmatprep.subr.bf16.mxu0 %v1432
    %1740 = vmatpush1.bf16.msra.mxu0 %v1431
    %1741 = vmatprep.subr.bf16.mxu0 %v1437
    %1742 = vmatpush1.bf16.msra.mxu0 %v1436
    %1743 = vmatprep.subr.bf16.mxu0 0
    %1744 = vmatpush1.bf16.msra.mxu0 0
    %1745 = vmatprep.subr.bf16.mxu0 0
    %1746 = vmatpush1.bf16.msra.mxu0 0
    %1747 = vmatprep.subr.bf16.mxu0 0
    %1748 = vmatpush1.bf16.msra.mxu0 0
    %1749 = vmatprep.subr.bf16.mxu0 0
    %1750 = vmatpush1.bf16.msra.mxu0 0
    %1751 = vmatprep.subr.bf16.mxu0 0
    %1752 = vmatpush1.bf16.msra.mxu0 0
    %1753 = vmatprep.subr.bf16.mxu0 0
    %1754 = vmatpush1.bf16.msra.mxu0 0
    %1755 = vmatprep.subr.bf16.mxu0 0
    %1756 = vmatpush1.bf16.msra.mxu0 0
    %1757 = vmatprep.subr.bf16.mxu0 0
    %1758 = vmatpush1.bf16.msra.mxu0 0
    %1759 = vmatprep.mubr.bf16.mxu0 0
    %1760 = vmatmul.mubr.bf16.gmra.mrb[0].mxu0 %v360
    %v1761 = vpop.f32.mrb[0].mxu0
    %v1762 = vadd.f32 %v1719, %v1761
    %v1763 = vpop.f32.mrb[0].mxu0
    %v1764 = vadd.f32 %v1721, %v1763
    %v1765 = vpop.f32.mrb[0].mxu0
    %v1766 = vadd.f32 %v1723, %v1765
    %v1767 = vpop.f32.mrb[0].mxu0
    %v1768 = vadd.f32 %v1725, %v1767
    %1769 = vdwg.mxu0
    %1770 = vmatprep.subr.bf16.mxu0 %v1244
    %1771 = vmatpush1.bf16.msra.mxu0 %v1243
    %1772 = vmatprep.subr.bf16.mxu0 %v1249
    %1773 = vmatpush1.bf16.msra.mxu0 %v1248
    %1774 = vmatprep.subr.bf16.mxu0 %v1254
    %1775 = vmatpush1.bf16.msra.mxu0 %v1253
    %1776 = vmatprep.subr.bf16.mxu0 %v1259
    %1777 = vmatpush1.bf16.msra.mxu0 %v1258
    %1778 = vmatprep.subr.bf16.mxu0 %v1264
    %1779 = vmatpush1.bf16.msra.mxu0 %v1263
    %1780 = vmatprep.subr.bf16.mxu0 %v1269
    %1781 = vmatpush1.bf16.msra.mxu0 %v1268
    %1782 = vmatprep.subr.bf16.mxu0 %v1274
    %1783 = vmatpush1.bf16.msra.mxu0 %v1273
    %1784 = vmatprep.subr.bf16.mxu0 %v1279
    %1785 = vmatpush1.bf16.msra.mxu0 %v1278
    %1786 = vmatprep.subr.bf16.mxu0 %v1284
    %1787 = vmatpush1.bf16.msra.mxu0 %v1283
    %1788 = vmatprep.subr.bf16.mxu0 %v1289
    %1789 = vmatpush1.bf16.msra.mxu0 %v1288
    %1790 = vmatprep.subr.bf16.mxu0 %v1294
    %1791 = vmatpush1.bf16.msra.mxu0 %v1293
    %1792 = vmatprep.subr.bf16.mxu0 %v1299
    %1793 = vmatpush1.bf16.msra.mxu0 %v1298
    %1794 = vmatprep.subr.bf16.mxu0 %v1304
    %1795 = vmatpush1.bf16.msra.mxu0 %v1303
    %1796 = vmatprep.subr.bf16.mxu0 %v1309
    %1797 = vmatpush1.bf16.msra.mxu0 %v1308
    %1798 = vmatprep.subr.bf16.mxu0 %v1314
    %1799 = vmatpush1.bf16.msra.mxu0 %v1313
    %1800 = vmatprep.subr.bf16.mxu0 %v1319
    %1801 = vmatpush1.bf16.msra.mxu0 %v1318
    %1802 = vmatprep.mubr.bf16.mxu0 %v357
    %1803 = vmatmul.mubr.bf16.gmra.mrb[0].mxu0 %v356
    %v1804 = vpop.f32.mrb[0].mxu0
    %v1805 = vadd.f32 0.0, %v1804
    %v1806 = vpop.f32.mrb[0].mxu0
    %v1807 = vadd.f32 0.0, %v1806
    %v1808 = vpop.f32.mrb[0].mxu0
    %v1809 = vadd.f32 0.0, %v1808
    %v1810 = vpop.f32.mrb[0].mxu0
    %v1811 = vadd.f32 0.0, %v1810
    %1812 = vdwg.mxu0
    %1813 = vmatprep.subr.bf16.mxu0 %v1324
    %1814 = vmatpush1.bf16.msra.mxu0 %v1323
    %1815 = vmatprep.subr.bf16.mxu0 %v1329
    %1816 = vmatpush1.bf16.msra.mxu0 %v1328
    %1817 = vmatprep.subr.bf16.mxu0 %v1334
    %1818 = vmatpush1.bf16.msra.mxu0 %v1333
    %1819 = vmatprep.subr.bf16.mxu0 %v1339
    %1820 = vmatpush1.bf16.msra.mxu0 %v1338
    %1821 = vmatprep.subr.bf16.mxu0 %v1344
    %1822 = vmatpush1.bf16.msra.mxu0 %v1343
    %1823 = vmatprep.subr.bf16.mxu0 %v1349
    %1824 = vmatpush1.bf16.msra.mxu0 %v1348
    %1825 = vmatprep.subr.bf16.mxu0 %v1354
    %1826 = vmatpush1.bf16.msra.mxu0 %v1353
    %1827 = vmatprep.subr.bf16.mxu0 %v1359
    %1828 = vmatpush1.bf16.msra.mxu0 %v1358
    %1829 = vmatprep.subr.bf16.mxu0 %v1364
    %1830 = vmatpush1.bf16.msra.mxu0 %v1363
    %1831 = vmatprep.subr.bf16.mxu0 %v1369
    %1832 = vmatpush1.bf16.msra.mxu0 %v1368
    %1833 = vmatprep.subr.bf16.mxu0 %v1374
    %1834 = vmatpush1.bf16.msra.mxu0 %v1373
    %1835 = vmatprep.subr.bf16.mxu0 %v1379
    %1836 = vmatpush1.bf16.msra.mxu0 %v1378
    %1837 = vmatprep.subr.bf16.mxu0 %v1384
    %1838 = vmatpush1.bf16.msra.mxu0 %v1383
    %1839 = vmatprep.subr.bf16.mxu0 %v1389
    %1840 = vmatpush1.bf16.msra.mxu0 %v1388
    %1841 = vmatprep.subr.bf16.mxu0 %v1394
    %1842 = vmatpush1.bf16.msra.mxu0 %v1393
    %1843 = vmatprep.subr.bf16.mxu0 %v1399
    %1844 = vmatpush1.bf16.msra.mxu0 %v1398
    %1845 = vmatprep.mubr.bf16.mxu0 %v359
    %1846 = vmatmul.mubr.bf16.gmra.mrb[0].mxu0 %v358
    %v1847 = vpop.f32.mrb[0].mxu0
    %v1848 = vadd.f32 %v1805, %v1847
    %v1849 = vpop.f32.mrb[0].mxu0
    %v1850 = vadd.f32 %v1807, %v1849
    %v1851 = vpop.f32.mrb[0].mxu0
    %v1852 = vadd.f32 %v1809, %v1851
    %v1853 = vpop.f32.mrb[0].mxu0
    %v1854 = vadd.f32 %v1811, %v1853
    %1855 = vdwg.mxu0
    %1856 = vmatprep.subr.bf16.mxu0 %v1404
    %1857 = vmatpush1.bf16.msra.mxu0 %v1403
    %1858 = vmatprep.subr.bf16.mxu0 %v1409
    %1859 = vmatpush1.bf16.msra.mxu0 %v1408
    %1860 = vmatprep.subr.bf16.mxu0 %v1414
    %1861 = vmatpush1.bf16.msra.mxu0 %v1413
    %1862 = vmatprep.subr.bf16.mxu0 %v1419
    %1863 = vmatpush1.bf16.msra.mxu0 %v1418
    %1864 = vmatprep.subr.bf16.mxu0 %v1424
    %1865 = vmatpush1.bf16.msra.mxu0 %v1423
    %1866 = vmatprep.subr.bf16.mxu0 %v1429
    %1867 = vmatpush1.bf16.msra.mxu0 %v1428
    %1868 = vmatprep.subr.bf16.mxu0 %v1434
    %1869 = vmatpush1.bf16.msra.mxu0 %v1433
    %1870 = vmatprep.subr.bf16.mxu0 %v1439
    %1871 = vmatpush1.bf16.msra.mxu0 %v1438
    %1872 = vmatprep.subr.bf16.mxu0 0
    %1873 = vmatpush1.bf16.msra.mxu0 0
    %1874 = vmatprep.subr.bf16.mxu0 0
    %1875 = vmatpush1.bf16.msra.mxu0 0
    %1876 = vmatprep.subr.bf16.mxu0 0
    %1877 = vmatpush1.bf16.msra.mxu0 0
    %1878 = vmatprep.subr.bf16.mxu0 0
    %1879 = vmatpush1.bf16.msra.mxu0 0
    %1880 = vmatprep.subr.bf16.mxu0 0
    %1881 = vmatpush1.bf16.msra.mxu0 0
    %1882 = vmatprep.subr.bf16.mxu0 0
    %1883 = vmatpush1.bf16.msra.mxu0 0
    %1884 = vmatprep.subr.bf16.mxu0 0
    %1885 = vmatpush1.bf16.msra.mxu0 0
    %1886 = vmatprep.subr.bf16.mxu0 0
    %1887 = vmatpush1.bf16.msra.mxu0 0
    %1888 = vmatprep.mubr.bf16.mxu0 0
    %1889 = vmatmul.mubr.bf16.gmra.mrb[0].mxu0 %v360
    %v1890 = vpop.f32.mrb[0].mxu0
    %v1891 = vadd.f32 %v1848, %v1890
    %v1892 = vpop.f32.mrb[0].mxu0
    %v1893 = vadd.f32 %v1850, %v1892
    %v1894 = vpop.f32.mrb[0].mxu0
    %v1895 = vadd.f32 %v1852, %v1894
    %v1896 = vpop.f32.mrb[0].mxu0
    %v1897 = vadd.f32 %v1854, %v1896
    %1898 = vdwg.mxu0
    %1899 = vmatprep.subr.bf16.mxu0 0
    %1900 = vmatpush1.bf16.msra.mxu0 %v1245
    %1901 = vmatprep.subr.bf16.mxu0 0
    %1902 = vmatpush1.bf16.msra.mxu0 %v1250
    %1903 = vmatprep.subr.bf16.mxu0 0
    %1904 = vmatpush1.bf16.msra.mxu0 %v1255
    %1905 = vmatprep.subr.bf16.mxu0 0
    %1906 = vmatpush1.bf16.msra.mxu0 %v1260
    %1907 = vmatprep.subr.bf16.mxu0 0
    %1908 = vmatpush1.bf16.msra.mxu0 %v1265
    %1909 = vmatprep.subr.bf16.mxu0 0
    %1910 = vmatpush1.bf16.msra.mxu0 %v1270
    %1911 = vmatprep.subr.bf16.mxu0 0
    %1912 = vmatpush1.bf16.msra.mxu0 %v1275
    %1913 = vmatprep.subr.bf16.mxu0 0
    %1914 = vmatpush1.bf16.msra.mxu0 %v1280
    %1915 = vmatprep.subr.bf16.mxu0 0
    %1916 = vmatpush1.bf16.msra.mxu0 %v1285
    %1917 = vmatprep.subr.bf16.mxu0 0
    %1918 = vmatpush1.bf16.msra.mxu0 %v1290
    %1919 = vmatprep.subr.bf16.mxu0 0
    %1920 = vmatpush1.bf16.msra.mxu0 %v1295
    %1921 = vmatprep.subr.bf16.mxu0 0
    %1922 = vmatpush1.bf16.msra.mxu0 %v1300
    %1923 = vmatprep.subr.bf16.mxu0 0
    %1924 = vmatpush1.bf16.msra.mxu0 %v1305
    %1925 = vmatprep.subr.bf16.mxu0 0
    %1926 = vmatpush1.bf16.msra.mxu0 %v1310
    %1927 = vmatprep.subr.bf16.mxu0 0
    %1928 = vmatpush1.bf16.msra.mxu0 %v1315
    %1929 = vmatprep.subr.bf16.mxu0 0
    %1930 = vmatpush1.bf16.msra.mxu0 %v1320
    %1931 = vmatprep.mubr.bf16.mxu0 %v357
    %1932 = vmatmul.mubr.bf16.gmra.mrb[0].mxu0 %v356
    %v1933 = vpop.f32.mrb[0].mxu0
    %v1934 = vadd.f32 0.0, %v1933
    %v1935 = vpop.f32.mrb[0].mxu0
    %v1936 = vpop.f32.mrb[0].mxu0
    %v1937 = vadd.f32 0.0, %v1936
    %v1938 = vpop.f32.mrb[0].mxu0
    %1939 = vdwg.mxu0
    %1940 = vmatprep.subr.bf16.mxu0 0
    %1941 = vmatpush1.bf16.msra.mxu0 %v1325
    %1942 = vmatprep.subr.bf16.mxu0 0
    %1943 = vmatpush1.bf16.msra.mxu0 %v1330
    %1944 = vmatprep.subr.bf16.mxu0 0
    %1945 = vmatpush1.bf16.msra.mxu0 %v1335
    %1946 = vmatprep.subr.bf16.mxu0 0
    %1947 = vmatpush1.bf16.msra.mxu0 %v1340
    %1948 = vmatprep.subr.bf16.mxu0 0
    %1949 = vmatpush1.bf16.msra.mxu0 %v1345
    %1950 = vmatprep.subr.bf16.mxu0 0
    %1951 = vmatpush1.bf16.msra.mxu0 %v1350
    %1952 = vmatprep.subr.bf16.mxu0 0
    %1953 = vmatpush1.bf16.msra.mxu0 %v1355
    %1954 = vmatprep.subr.bf16.mxu0 0
    %1955 = vmatpush1.bf16.msra.mxu0 %v1360
    %1956 = vmatprep.subr.bf16.mxu0 0
    %1957 = vmatpush1.bf16.msra.mxu0 %v1365
    %1958 = vmatprep.subr.bf16.mxu0 0
    %1959 = vmatpush1.bf16.msra.mxu0 %v1370
    %1960 = vmatprep.subr.bf16.mxu0 0
    %1961 = vmatpush1.bf16.msra.mxu0 %v1375
    %1962 = vmatprep.subr.bf16.mxu0 0
    %1963 = vmatpush1.bf16.msra.mxu0 %v1380
    %1964 = vmatprep.subr.bf16.mxu0 0
    %1965 = vmatpush1.bf16.msra.mxu0 %v1385
    %1966 = vmatprep.subr.bf16.mxu0 0
    %1967 = vmatpush1.bf16.msra.mxu0 %v1390
    %1968 = vmatprep.subr.bf16.mxu0 0
    %1969 = vmatpush1.bf16.msra.mxu0 %v1395
    %1970 = vmatprep.subr.bf16.mxu0 0
    %1971 = vmatpush1.bf16.msra.mxu0 %v1400
    %1972 = vmatprep.mubr.bf16.mxu0 %v359
    %1973 = vmatmul.mubr.bf16.gmra.mrb[0].mxu0 %v358
    %v1974 = vpop.f32.mrb[0].mxu0
    %v1975 = vadd.f32 %v1934, %v1974
    %v1976 = vpop.f32.mrb[0].mxu0
    %v1977 = vpop.f32.mrb[0].mxu0
    %v1978 = vadd.f32 %v1937, %v1977
    %v1979 = vpop.f32.mrb[0].mxu0
    %1980 = vdwg.mxu0
    %1981 = vmatprep.subr.bf16.mxu0 0
    %1982 = vmatpush1.bf16.msra.mxu0 %v1405
    %1983 = vmatprep.subr.bf16.mxu0 0
    %1984 = vmatpush1.bf16.msra.mxu0 %v1410
    %1985 = vmatprep.subr.bf16.mxu0 0
    %1986 = vmatpush1.bf16.msra.mxu0 %v1415
    %1987 = vmatprep.subr.bf16.mxu0 0
    %1988 = vmatpush1.bf16.msra.mxu0 %v1420
    %1989 = vmatprep.subr.bf16.mxu0 0
    %1990 = vmatpush1.bf16.msra.mxu0 %v1425
    %1991 = vmatprep.subr.bf16.mxu0 0
    %1992 = vmatpush1.bf16.msra.mxu0 %v1430
    %1993 = vmatprep.subr.bf16.mxu0 0
    %1994 = vmatpush1.bf16.msra.mxu0 %v1435
    %1995 = vmatprep.subr.bf16.mxu0 0
    %1996 = vmatpush1.bf16.msra.mxu0 %v1440
    %1997 = vmatprep.subr.bf16.mxu0 0
    %1998 = vmatpush1.bf16.msra.mxu0 0
    %1999 = vmatprep.subr.bf16.mxu0 0
    %2000 = vmatpush1.bf16.msra.mxu0 0
    %2001 = vmatprep.subr.bf16.mxu0 0
    %2002 = vmatpush1.bf16.msra.mxu0 0
    %2003 = vmatprep.subr.bf16.mxu0 0
    %2004 = vmatpush1.bf16.msra.mxu0 0
    %2005 = vmatprep.subr.bf16.mxu0 0
    %2006 = vmatpush1.bf16.msra.mxu0 0
    %2007 = vmatprep.subr.bf16.mxu0 0
    %2008 = vmatpush1.bf16.msra.mxu0 0
    %2009 = vmatprep.subr.bf16.mxu0 0
    %2010 = vmatpush1.bf16.msra.mxu0 0
    %2011 = vmatprep.subr.bf16.mxu0 0
    %2012 = vmatpush1.bf16.msra.mxu0 0
    %2013 = vmatprep.mubr.bf16.mxu0 0
    %2014 = vmatmul.mubr.bf16.gmra.mrb[0].mxu0 %v360
    %v2015 = vpop.f32.mrb[0].mxu0
    %v2016 = vadd.f32 %v1975, %v2015
    %v2017 = vpop.f32.mrb[0].mxu0
    %v2018 = vpop.f32.mrb[0].mxu0
    %v2019 = vadd.f32 %v1978, %v2018
    %v2020 = vpop.f32.mrb[0].mxu0
    %2021 = vdwg.mxu0
    %s2022 = scalar_lea.vmem %s6, 11
    %v2023 = vld [vmem:[%s2022] ss:$2 sm:$0x1f]
    %v2025 = vlaneseq
    %v2026 = vshrl.u32 %v2025, 7
    %v2027 = vsub.s32 0, %v2026
    %v2028 = vrot.slane %v2023, %v2027
    %v2029 = vlaneseq
    %v2030 = vshrl.u32 %v2029, 7
    %v2031 = vsub.s32 1, %v2030
    %v2032 = vrot.slane %v2023, %v2031
    %v2033 = vlaneseq
    %v2034 = vshrl.u32 %v2033, 7
    %v2035 = vsub.s32 2, %v2034
    %v2036 = vrot.slane %v2023, %v2035
    %v2037 = vlaneseq
    %v2038 = vshrl.u32 %v2037, 7
    %v2039 = vsub.s32 3, %v2038
    %v2040 = vrot.slane %v2023, %v2039
    %v2041 = vlaneseq
    %v2042 = vshrl.u32 %v2041, 7
    %v2043 = vsub.s32 4, %v2042
    %v2044 = vrot.slane %v2023, %v2043
    %v2050 = vmul.f32 %v1762, %v2028
    %v2051 = vmul.f32 %v1764, %v2032
    %v2052 = vmul.f32 %v1891, %v2036
    %v2053 = vmul.f32 %v1893, %v2040
    %v2054 = vmul.f32 %v2016, %v2044
    %v2055 = vmul.f32 %v1766, %v2028
    %v2056 = vmul.f32 %v1768, %v2032
    %v2057 = vmul.f32 %v1895, %v2036
    %v2058 = vmul.f32 %v1897, %v2040
    %v2059 = vmul.f32 %v2019, %v2044
    %s2060 = scalar_lea.vmem %s6, 10
    %v2061 = vld [vmem:[%s2060] ss:$2 sm:$0x1f]
    %v2063 = vlaneseq
    %v2064 = vshrl.u32 %v2063, 7
    %v2065 = vsub.s32 0, %v2064
    %v2066 = vrot.slane %v2061, %v2065
    %v2067 = vlaneseq
    %v2068 = vshrl.u32 %v2067, 7
    %v2069 = vsub.s32 1, %v2068
    %v2070 = vrot.slane %v2061, %v2069
    %v2071 = vlaneseq
    %v2072 = vshrl.u32 %v2071, 7
    %v2073 = vsub.s32 2, %v2072
    %v2074 = vrot.slane %v2061, %v2073
    %v2075 = vlaneseq
    %v2076 = vshrl.u32 %v2075, 7
    %v2077 = vsub.s32 3, %v2076
    %v2078 = vrot.slane %v2061, %v2077
    %v2079 = vlaneseq
    %v2080 = vshrl.u32 %v2079, 7
    %v2081 = vsub.s32 4, %v2080
    %v2082 = vrot.slane %v2061, %v2081
    %v2088 = vadd.f32 %v2050, %v2066
    %v2089 = vadd.f32 %v2051, %v2070
    %v2090 = vadd.f32 %v2052, %v2074
    %v2091 = vadd.f32 %v2053, %v2078
    %v2092 = vadd.f32 %v2054, %v2082
    %v2093 = vadd.f32 %v2055, %v2066
    %v2094 = vadd.f32 %v2056, %v2070
    %v2095 = vadd.f32 %v2057, %v2074
    %v2096 = vadd.f32 %v2058, %v2078
    %v2097 = vadd.f32 %v2059, %v2082
    %v2098 = vmul.f32 %v2088, 0.1
    %v2099 = vmul.f32 %v2089, 0.1
    %v2100 = vmul.f32 %v2090, 0.1
    %v2101 = vmul.f32 %v2091, 0.1
    %v2102 = vmul.f32 %v2092, 0.1
    %v2103 = vmul.f32 %v2093, 0.1
    %v2104 = vmul.f32 %v2094, 0.1
    %v2105 = vmul.f32 %v2095, 0.1
    %v2106 = vmul.f32 %v2096, 0.1
    %v2107 = vmul.f32 %v2097, 0.1
    %v2108 = vmax.f32 %v2088, %v2098
    %v2109 = vmax.f32 %v2089, %v2099
    %v2110 = vmax.f32 %v2090, %v2100
    %v2111 = vmax.f32 %v2091, %v2101
    %v2112 = vmax.f32 %v2092, %v2102
    %v2113 = vmax.f32 %v2093, %v2103
    %v2114 = vmax.f32 %v2094, %v2104
    %v2115 = vmax.f32 %v2095, %v2105
    %v2116 = vmax.f32 %v2096, %v2106
    %v2117 = vmax.f32 %v2097, %v2107
    %v2118 = vpack.c.bf16 %v2113, %v2108
    %v2119 = vpack.c.bf16 %v2114, %v2109
    %v2120 = vpack.c.bf16 %v2115, %v2110
    %v2121 = vpack.c.bf16 %v2116, %v2111
    %v2122 = vpack.c.bf16 %v2117, %v2112
    %v2123 = vld [vmem:[#allocation6] sm:$0xff]
    %v2124 = vld [vmem:[#allocation6 + $0x8] sm:$0xf]
    %v2125 = vld [vmem:[#allocation6 + $0xc] sm:$0xff]
    %v2126 = vld [vmem:[#allocation6 + $0x14] sm:$0xf]
    %v2127 = vld [vmem:[#allocation6 + $0x18] sm:$0xff]
    %v2128 = vld [vmem:[#allocation6 + $0x20] sm:$0xf]
    %v2129 = vld [vmem:[#allocation6 + $0x24] sm:$0xff]
    %v2130 = vld [vmem:[#allocation6 + $0x2c] sm:$0xf]
    %v2131 = vld [vmem:[#allocation6 + $0x30] sm:$0xff]
    %v2132 = vld [vmem:[#allocation6 + $0x38] sm:$0xf]
    %v2133 = vld [vmem:[#allocation6 + $0x3c] sm:$0xff]
    %v2134 = vld [vmem:[#allocation6 + $0x44] sm:$0xf]
    %v2135 = vld [vmem:[#allocation6 + $0x48] sm:$0xff]
    %v2136 = vld [vmem:[#allocation6 + $0x50] sm:$0xf]
    %v2137 = vld [vmem:[#allocation6 + $0x54] sm:$0xff]
    %v2138 = vld [vmem:[#allocation6 + $0x5c] sm:$0xf]
    %v2139 = vld [vmem:[#allocation6 + $0x60] sm:$0xff]
    %v2140 = vld [vmem:[#allocation6 + $0x68] sm:$0xf]
    %v2141 = vld [vmem:[#allocation6 + $0x6c] sm:$0xff]
    %v2142 = vld [vmem:[#allocation6 + $0x74] sm:$0xf]
    %v2143 = vld [vmem:[#allocation6 + $0x78] sm:$0xff]
    %v2144 = vld [vmem:[#allocation6 + $0x80] sm:$0xf]
    %v2145 = vld [vmem:[#allocation6 + $0x84] sm:$0xff]
    %v2146 = vld [vmem:[#allocation6 + $0x8c] sm:$0xf]
    %v2147 = vld [vmem:[#allocation6 + $0x90] sm:$0xff]
    %v2148 = vld [vmem:[#allocation6 + $0x98] sm:$0xf]
    %v2149 = vld [vmem:[#allocation6 + $0x9c] sm:$0xff]
    %v2150 = vld [vmem:[#allocation6 + $0xa4] sm:$0xf]
    %v2151 = vld [vmem:[#allocation6 + $0xa8] sm:$0xff]
    %v2152 = vld [vmem:[#allocation6 + $0xb0] sm:$0xf]
    %v2153 = vld [vmem:[#allocation6 + $0xb4] sm:$0xff]
    %v2154 = vld [vmem:[#allocation6 + $0xbc] sm:$0xf]
    %v2155 = vld [vmem:[#allocation6 + $0xc0] sm:$0xff]
    %v2156 = vld [vmem:[#allocation6 + $0xc8] sm:$0xf]
    %v2157 = vld [vmem:[#allocation6 + $0xcc] sm:$0xff]
    %v2158 = vld [vmem:[#allocation6 + $0xd4] sm:$0xf]
    %v2159 = vld [vmem:[#allocation6 + $0xd8] sm:$0xff]
    %v2160 = vld [vmem:[#allocation6 + $0xe0] sm:$0xf]
    %v2161 = vld [vmem:[#allocation6 + $0xe4] sm:$0xff]
    %v2162 = vld [vmem:[#allocation6 + $0xec] sm:$0xf]
    %v2163 = vld [vmem:[#allocation6 + $0xf0] sm:$0xff]
    %v2164 = vld [vmem:[#allocation6 + $0xf8] sm:$0xf]
    %v2165 = vld [vmem:[#allocation6 + $0xfc] sm:$0xff]
    %v2166 = vld [vmem:[#allocation6 + $0x104] sm:$0xf]
    %v2167 = vld [vmem:[#allocation6 + $0x108] sm:$0xff]
    %v2168 = vld [vmem:[#allocation6 + $0x110] sm:$0xf]
    %v2169 = vld [vmem:[#allocation6 + $0x114] sm:$0xff]
    %v2170 = vld [vmem:[#allocation6 + $0x11c] sm:$0xf]
    %v2171 = vld [vmem:[#allocation6 + $0x120] sm:$0xff]
    %v2172 = vld [vmem:[#allocation6 + $0x128] sm:$0xf]
    %v2173 = vld [vmem:[#allocation6 + $0x12c] sm:$0xff]
    %v2174 = vld [vmem:[#allocation6 + $0x134] sm:$0xf]
    %v2175 = vld [vmem:[#allocation6 + $0x138] sm:$0xff]
    %v2176 = vld [vmem:[#allocation6 + $0x140] sm:$0xf]
    %v2177 = vld [vmem:[#allocation6 + $0x144] sm:$0xff]
    %v2178 = vld [vmem:[#allocation6 + $0x14c] sm:$0xf]
    %v2179 = vld [vmem:[#allocation6 + $0x150] sm:$0xff]
    %v2180 = vld [vmem:[#allocation6 + $0x158] sm:$0xf]
    %v2181 = vld [vmem:[#allocation6 + $0x15c] sm:$0xff]
    %v2182 = vld [vmem:[#allocation6 + $0x164] sm:$0xf]
    %v2183 = vld [vmem:[#allocation6 + $0x168] sm:$0xff]
    %v2184 = vld [vmem:[#allocation6 + $0x170] sm:$0xf]
    %v2185 = vld [vmem:[#allocation6 + $0x174] sm:$0xff]
    %v2186 = vld [vmem:[#allocation6 + $0x17c] sm:$0xf]
    %v2187 = vld [vmem:[#allocation6 + $0x180] sm:$0xff]
    %v2188 = vld [vmem:[#allocation6 + $0x188] sm:$0xf]
    %v2189 = vld [vmem:[#allocation6 + $0x18c] sm:$0xff]
    %v2190 = vld [vmem:[#allocation6 + $0x194] sm:$0xf]
    %v2191 = vld [vmem:[#allocation6 + $0x198] sm:$0xff]
    %v2192 = vld [vmem:[#allocation6 + $0x1a0] sm:$0xf]
    %v2193 = vld [vmem:[#allocation6 + $0x1a4] sm:$0xff]
    %v2194 = vld [vmem:[#allocation6 + $0x1ac] sm:$0xf]
    %v2195 = vld [vmem:[#allocation6 + $0x1b0] sm:$0xff]
    %v2196 = vld [vmem:[#allocation6 + $0x1b8] sm:$0xf]
    %v2197 = vld [vmem:[#allocation6 + $0x1bc] sm:$0xff]
    %v2198 = vld [vmem:[#allocation6 + $0x1c4] sm:$0xf]
    %v2199 = vld [vmem:[#allocation6 + $0x1c8] sm:$0xff]
    %v2200 = vld [vmem:[#allocation6 + $0x1d0] sm:$0xf]
    %v2201 = vld [vmem:[#allocation6 + $0x1d4] sm:$0xff]
    %v2202 = vld [vmem:[#allocation6 + $0x1dc] sm:$0xf]
    %v2203 = vld [vmem:[#allocation6 + $0x1e0] sm:$0xff]
    %v2204 = vld [vmem:[#allocation6 + $0x1e8] sm:$0xf]
    %v2205 = vld [vmem:[#allocation6 + $0x1ec] sm:$0xff]
    %v2206 = vld [vmem:[#allocation6 + $0x1f4] sm:$0xf]
    %v2207 = vld [vmem:[#allocation6 + $0x1f8] sm:$0xff]
    %v2208 = vld [vmem:[#allocation6 + $0x200] sm:$0xf]
    %v2209 = vld [vmem:[#allocation6 + $0x204] sm:$0xff]
    %v2210 = vld [vmem:[#allocation6 + $0x20c] sm:$0xf]
    %v2211 = vld [vmem:[#allocation6 + $0x210] sm:$0xff]
    %v2212 = vld [vmem:[#allocation6 + $0x218] sm:$0xf]
    %v2213 = vld [vmem:[#allocation6 + $0x21c] sm:$0xff]
    %v2214 = vld [vmem:[#allocation6 + $0x224] sm:$0xf]
    %v2215 = vld [vmem:[#allocation6 + $0x228] sm:$0xff]
    %v2216 = vld [vmem:[#allocation6 + $0x230] sm:$0xf]
    %v2217 = vld [vmem:[#allocation6 + $0x234] sm:$0xff]
    %v2218 = vld [vmem:[#allocation6 + $0x23c] sm:$0xf]
    %v2219 = vld [vmem:[#allocation6 + $0x240] sm:$0xff]
    %v2220 = vld [vmem:[#allocation6 + $0x248] sm:$0xf]
    %v2221 = vld [vmem:[#allocation6 + $0x24c] sm:$0xff]
    %v2222 = vld [vmem:[#allocation6 + $0x254] sm:$0xf]
    %v2223 = vld [vmem:[#allocation6 + $0x258] sm:$0xff]
    %v2224 = vld [vmem:[#allocation6 + $0x260] sm:$0xf]
    %v2225 = vld [vmem:[#allocation6 + $0x264] sm:$0xff]
    %v2226 = vld [vmem:[#allocation6 + $0x26c] sm:$0xf]
    %v2227 = vld [vmem:[#allocation6 + $0x270] sm:$0xff]
    %v2228 = vld [vmem:[#allocation6 + $0x278] sm:$0xf]
    %v2229 = vld [vmem:[#allocation6 + $0x27c] sm:$0xff]
    %v2230 = vld [vmem:[#allocation6 + $0x284] sm:$0xf]
    %v2231 = vld [vmem:[#allocation6 + $0x288] sm:$0xff]
    %v2232 = vld [vmem:[#allocation6 + $0x290] sm:$0xf]
    %v2233 = vld [vmem:[#allocation6 + $0x294] sm:$0xff]
    %v2234 = vld [vmem:[#allocation6 + $0x29c] sm:$0xf]
    %v2235 = vld [vmem:[#allocation6 + $0x2a0] sm:$0xff]
    %v2236 = vld [vmem:[#allocation6 + $0x2a8] sm:$0xf]
    %v2237 = vld [vmem:[#allocation6 + $0x2ac] sm:$0xff]
    %v2238 = vld [vmem:[#allocation6 + $0x2b4] sm:$0xf]
    %v2239 = vld [vmem:[#allocation6 + $0x2b8] sm:$0xff]
    %v2240 = vld [vmem:[#allocation6 + $0x2c0] sm:$0xf]
    %v2241 = vld [vmem:[#allocation6 + $0x2c4] sm:$0xff]
    %v2242 = vld [vmem:[#allocation6 + $0x2cc] sm:$0xf]
    %v2243 = vld [vmem:[#allocation6 + $0x2d0] sm:$0xff]
    %v2244 = vld [vmem:[#allocation6 + $0x2d8] sm:$0xf]
    %v2245 = vld [vmem:[#allocation6 + $0x2dc] sm:$0xff]
    %v2246 = vld [vmem:[#allocation6 + $0x2e4] sm:$0xf]
    %v2247 = vld [vmem:[#allocation6 + $0x2e8] sm:$0xff]
    %v2248 = vld [vmem:[#allocation6 + $0x2f0] sm:$0xf]
    %v2249 = vld [vmem:[#allocation6 + $0x2f4] sm:$0xff]
    %v2250 = vld [vmem:[#allocation6 + $0x2fc] sm:$0xf]
    %v2251 = vld [vmem:[#allocation6 + $0x300] sm:$0xff]
    %v2252 = vld [vmem:[#allocation6 + $0x308] sm:$0xf]
    %v2253 = vld [vmem:[#allocation6 + $0x30c] sm:$0xff]
    %v2254 = vld [vmem:[#allocation6 + $0x314] sm:$0xf]
    %v2255 = vld [vmem:[#allocation6 + $0x318] sm:$0xff]
    %v2256 = vld [vmem:[#allocation6 + $0x320] sm:$0xf]
    %v2257 = vld [vmem:[#allocation6 + $0x324] sm:$0xff]
    %v2258 = vld [vmem:[#allocation6 + $0x32c] sm:$0xf]
    %v2259 = vld [vmem:[#allocation6 + $0x330] sm:$0xff]
    %v2260 = vld [vmem:[#allocation6 + $0x338] sm:$0xf]
    %v2261 = vld [vmem:[#allocation6 + $0x33c] sm:$0xff]
    %v2262 = vld [vmem:[#allocation6 + $0x344] sm:$0xf]
    %v2263 = vld [vmem:[#allocation6 + $0x348] sm:$0xff]
    %v2264 = vld [vmem:[#allocation6 + $0x350] sm:$0xf]
    %v2265 = vld [vmem:[#allocation6 + $0x354] sm:$0xff]
    %v2266 = vld [vmem:[#allocation6 + $0x35c] sm:$0xf]
    %v2267 = vld [vmem:[#allocation6 + $0x360] sm:$0xff]
    %v2268 = vld [vmem:[#allocation6 + $0x368] sm:$0xf]
    %v2269 = vld [vmem:[#allocation6 + $0x36c] sm:$0xff]
    %v2270 = vld [vmem:[#allocation6 + $0x374] sm:$0xf]
    %v2271 = vld [vmem:[#allocation6 + $0x378] sm:$0xff]
    %v2272 = vld [vmem:[#allocation6 + $0x380] sm:$0xf]
    %v2273 = vld [vmem:[#allocation6 + $0x384] sm:$0xff]
    %v2274 = vld [vmem:[#allocation6 + $0x38c] sm:$0xf]
    %v2275 = vld [vmem:[#allocation6 + $0x390] sm:$0xff]
    %v2276 = vld [vmem:[#allocation6 + $0x398] sm:$0xf]
    %v2277 = vld [vmem:[#allocation6 + $0x39c] sm:$0xff]
    %v2278 = vld [vmem:[#allocation6 + $0x3a4] sm:$0xf]
    %v2279 = vld [vmem:[#allocation6 + $0x3a8] sm:$0xff]
    %v2280 = vld [vmem:[#allocation6 + $0x3b0] sm:$0xf]
    %v2281 = vld [vmem:[#allocation6 + $0x3b4] sm:$0xff]
    %v2282 = vld [vmem:[#allocation6 + $0x3bc] sm:$0xf]
    %v2443 = vunpack.c.l.b16 %v2123
    %v2444 = vunpack.c.h.b16 %v2123
    %v2445 = vunpack.c.l.b16 %v2124
    %v2446 = vunpack.c.l.b16 %v2125
    %v2447 = vunpack.c.h.b16 %v2125
    %v2448 = vunpack.c.l.b16 %v2126
    %v2449 = vunpack.c.l.b16 %v2127
    %v2450 = vunpack.c.h.b16 %v2127
    %v2451 = vunpack.c.l.b16 %v2128
    %v2452 = vunpack.c.l.b16 %v2129
    %v2453 = vunpack.c.h.b16 %v2129
    %v2454 = vunpack.c.l.b16 %v2130
    %v2455 = vunpack.c.l.b16 %v2131
    %v2456 = vunpack.c.h.b16 %v2131
    %v2457 = vunpack.c.l.b16 %v2132
    %v2458 = vunpack.c.l.b16 %v2133
    %v2459 = vunpack.c.h.b16 %v2133
    %v2460 = vunpack.c.l.b16 %v2134
    %v2461 = vunpack.c.l.b16 %v2135
    %v2462 = vunpack.c.h.b16 %v2135
    %v2463 = vunpack.c.l.b16 %v2136
    %v2464 = vunpack.c.l.b16 %v2137
    %v2465 = vunpack.c.h.b16 %v2137
    %v2466 = vunpack.c.l.b16 %v2138
    %v2467 = vunpack.c.l.b16 %v2139
    %v2468 = vunpack.c.h.b16 %v2139
    %v2469 = vunpack.c.l.b16 %v2140
    %v2470 = vunpack.c.l.b16 %v2141
    %v2471 = vunpack.c.h.b16 %v2141
    %v2472 = vunpack.c.l.b16 %v2142
    %v2473 = vunpack.c.l.b16 %v2143
    %v2474 = vunpack.c.h.b16 %v2143
    %v2475 = vunpack.c.l.b16 %v2144
    %v2476 = vunpack.c.l.b16 %v2145
    %v2477 = vunpack.c.h.b16 %v2145
    %v2478 = vunpack.c.l.b16 %v2146
    %v2479 = vunpack.c.l.b16 %v2147
    %v2480 = vunpack.c.h.b16 %v2147
    %v2481 = vunpack.c.l.b16 %v2148
    %v2482 = vunpack.c.l.b16 %v2149
    %v2483 = vunpack.c.h.b16 %v2149
    %v2484 = vunpack.c.l.b16 %v2150
    %v2485 = vunpack.c.l.b16 %v2151
    %v2486 = vunpack.c.h.b16 %v2151
    %v2487 = vunpack.c.l.b16 %v2152
    %v2488 = vunpack.c.l.b16 %v2153
    %v2489 = vunpack.c.h.b16 %v2153
    %v2490 = vunpack.c.l.b16 %v2154
    %v2491 = vunpack.c.l.b16 %v2155
    %v2492 = vunpack.c.h.b16 %v2155
    %v2493 = vunpack.c.l.b16 %v2156
    %v2494 = vunpack.c.l.b16 %v2157
    %v2495 = vunpack.c.h.b16 %v2157
    %v2496 = vunpack.c.l.b16 %v2158
    %v2497 = vunpack.c.l.b16 %v2159
    %v2498 = vunpack.c.h.b16 %v2159
    %v2499 = vunpack.c.l.b16 %v2160
    %v2500 = vunpack.c.l.b16 %v2161
    %v2501 = vunpack.c.h.b16 %v2161
    %v2502 = vunpack.c.l.b16 %v2162
    %v2503 = vunpack.c.l.b16 %v2163
    %v2504 = vunpack.c.h.b16 %v2163
    %v2505 = vunpack.c.l.b16 %v2164
    %v2506 = vunpack.c.l.b16 %v2165
    %v2507 = vunpack.c.h.b16 %v2165
    %v2508 = vunpack.c.l.b16 %v2166
    %v2509 = vunpack.c.l.b16 %v2167
    %v2510 = vunpack.c.h.b16 %v2167
    %v2511 = vunpack.c.l.b16 %v2168
    %v2512 = vunpack.c.l.b16 %v2169
    %v2513 = vunpack.c.h.b16 %v2169
    %v2514 = vunpack.c.l.b16 %v2170
    %v2515 = vunpack.c.l.b16 %v2171
    %v2516 = vunpack.c.h.b16 %v2171
    %v2517 = vunpack.c.l.b16 %v2172
    %v2518 = vunpack.c.l.b16 %v2173
    %v2519 = vunpack.c.h.b16 %v2173
    %v2520 = vunpack.c.l.b16 %v2174
    %v2521 = vunpack.c.l.b16 %v2175
    %v2522 = vunpack.c.h.b16 %v2175
    %v2523 = vunpack.c.l.b16 %v2176
    %v2524 = vunpack.c.l.b16 %v2177
    %v2525 = vunpack.c.h.b16 %v2177
    %v2526 = vunpack.c.l.b16 %v2178
    %v2527 = vunpack.c.l.b16 %v2179
    %v2528 = vunpack.c.h.b16 %v2179
    %v2529 = vunpack.c.l.b16 %v2180
    %v2530 = vunpack.c.l.b16 %v2181
    %v2531 = vunpack.c.h.b16 %v2181
    %v2532 = vunpack.c.l.b16 %v2182
    %v2533 = vunpack.c.l.b16 %v2183
    %v2534 = vunpack.c.h.b16 %v2183
    %v2535 = vunpack.c.l.b16 %v2184
    %v2536 = vunpack.c.l.b16 %v2185
    %v2537 = vunpack.c.h.b16 %v2185
    %v2538 = vunpack.c.l.b16 %v2186
    %v2539 = vunpack.c.l.b16 %v2187
    %v2540 = vunpack.c.h.b16 %v2187
    %v2541 = vunpack.c.l.b16 %v2188
    %v2542 = vunpack.c.l.b16 %v2189
    %v2543 = vunpack.c.h.b16 %v2189
    %v2544 = vunpack.c.l.b16 %v2190
    %v2545 = vunpack.c.l.b16 %v2191
    %v2546 = vunpack.c.h.b16 %v2191
    %v2547 = vunpack.c.l.b16 %v2192
    %v2548 = vunpack.c.l.b16 %v2193
    %v2549 = vunpack.c.h.b16 %v2193
    %v2550 = vunpack.c.l.b16 %v2194
    %v2551 = vunpack.c.l.b16 %v2195
    %v2552 = vunpack.c.h.b16 %v2195
    %v2553 = vunpack.c.l.b16 %v2196
    %v2554 = vunpack.c.l.b16 %v2197
    %v2555 = vunpack.c.h.b16 %v2197
    %v2556 = vunpack.c.l.b16 %v2198
    %v2557 = vunpack.c.l.b16 %v2199
    %v2558 = vunpack.c.h.b16 %v2199
    %v2559 = vunpack.c.l.b16 %v2200
    %v2560 = vunpack.c.l.b16 %v2201
    %v2561 = vunpack.c.h.b16 %v2201
    %v2562 = vunpack.c.l.b16 %v2202
    %v2563 = vunpack.c.l.b16 %v2203
    %v2564 = vunpack.c.h.b16 %v2203
    %v2565 = vunpack.c.l.b16 %v2204
    %v2566 = vunpack.c.l.b16 %v2205
    %v2567 = vunpack.c.h.b16 %v2205
    %v2568 = vunpack.c.l.b16 %v2206
    %v2569 = vunpack.c.l.b16 %v2207
    %v2570 = vunpack.c.h.b16 %v2207
    %v2571 = vunpack.c.l.b16 %v2208
    %v2572 = vunpack.c.l.b16 %v2209
    %v2573 = vunpack.c.h.b16 %v2209
    %v2574 = vunpack.c.l.b16 %v2210
    %v2575 = vunpack.c.l.b16 %v2211
    %v2576 = vunpack.c.h.b16 %v2211
    %v2577 = vunpack.c.l.b16 %v2212
    %v2578 = vunpack.c.l.b16 %v2213
    %v2579 = vunpack.c.h.b16 %v2213
    %v2580 = vunpack.c.l.b16 %v2214
    %v2581 = vunpack.c.l.b16 %v2215
    %v2582 = vunpack.c.h.b16 %v2215
    %v2583 = vunpack.c.l.b16 %v2216
    %v2584 = vunpack.c.l.b16 %v2217
    %v2585 = vunpack.c.h.b16 %v2217
    %v2586 = vunpack.c.l.b16 %v2218
    %v2587 = vunpack.c.l.b16 %v2219
    %v2588 = vunpack.c.h.b16 %v2219
    %v2589 = vunpack.c.l.b16 %v2220
    %v2590 = vunpack.c.l.b16 %v2221
    %v2591 = vunpack.c.h.b16 %v2221
    %v2592 = vunpack.c.l.b16 %v2222
    %v2593 = vunpack.c.l.b16 %v2223
    %v2594 = vunpack.c.h.b16 %v2223
    %v2595 = vunpack.c.l.b16 %v2224
    %v2596 = vunpack.c.l.b16 %v2225
    %v2597 = vunpack.c.h.b16 %v2225
    %v2598 = vunpack.c.l.b16 %v2226
    %v2599 = vunpack.c.l.b16 %v2227
    %v2600 = vunpack.c.h.b16 %v2227
    %v2601 = vunpack.c.l.b16 %v2228
    %v2602 = vunpack.c.l.b16 %v2229
    %v2603 = vunpack.c.h.b16 %v2229
    %v2604 = vunpack.c.l.b16 %v2230
    %v2605 = vunpack.c.l.b16 %v2231
    %v2606 = vunpack.c.h.b16 %v2231
    %v2607 = vunpack.c.l.b16 %v2232
    %v2608 = vunpack.c.l.b16 %v2233
    %v2609 = vunpack.c.h.b16 %v2233
    %v2610 = vunpack.c.l.b16 %v2234
    %v2611 = vunpack.c.l.b16 %v2235
    %v2612 = vunpack.c.h.b16 %v2235
    %v2613 = vunpack.c.l.b16 %v2236
    %v2614 = vunpack.c.l.b16 %v2237
    %v2615 = vunpack.c.h.b16 %v2237
    %v2616 = vunpack.c.l.b16 %v2238
    %v2617 = vunpack.c.l.b16 %v2239
    %v2618 = vunpack.c.h.b16 %v2239
    %v2619 = vunpack.c.l.b16 %v2240
    %v2620 = vunpack.c.l.b16 %v2241
    %v2621 = vunpack.c.h.b16 %v2241
    %v2622 = vunpack.c.l.b16 %v2242
    %v2623 = vunpack.c.l.b16 %v2243
    %v2624 = vunpack.c.h.b16 %v2243
    %v2625 = vunpack.c.l.b16 %v2244
    %v2626 = vunpack.c.l.b16 %v2245
    %v2627 = vunpack.c.h.b16 %v2245
    %v2628 = vunpack.c.l.b16 %v2246
    %v2629 = vunpack.c.l.b16 %v2247
    %v2630 = vunpack.c.h.b16 %v2247
    %v2631 = vunpack.c.l.b16 %v2248
    %v2632 = vunpack.c.l.b16 %v2249
    %v2633 = vunpack.c.h.b16 %v2249
    %v2634 = vunpack.c.l.b16 %v2250
    %v2635 = vunpack.c.l.b16 %v2251
    %v2636 = vunpack.c.h.b16 %v2251
    %v2637 = vunpack.c.l.b16 %v2252
    %v2638 = vunpack.c.l.b16 %v2253
    %v2639 = vunpack.c.h.b16 %v2253
    %v2640 = vunpack.c.l.b16 %v2254
    %v2641 = vunpack.c.l.b16 %v2255
    %v2642 = vunpack.c.h.b16 %v2255
    %v2643 = vunpack.c.l.b16 %v2256
    %v2644 = vunpack.c.l.b16 %v2257
    %v2645 = vunpack.c.h.b16 %v2257
    %v2646 = vunpack.c.l.b16 %v2258
    %v2647 = vunpack.c.l.b16 %v2259
    %v2648 = vunpack.c.h.b16 %v2259
    %v2649 = vunpack.c.l.b16 %v2260
    %v2650 = vunpack.c.l.b16 %v2261
    %v2651 = vunpack.c.h.b16 %v2261
    %v2652 = vunpack.c.l.b16 %v2262
    %v2653 = vunpack.c.l.b16 %v2263
    %v2654 = vunpack.c.h.b16 %v2263
    %v2655 = vunpack.c.l.b16 %v2264
    %v2656 = vunpack.c.l.b16 %v2265
    %v2657 = vunpack.c.h.b16 %v2265
    %v2658 = vunpack.c.l.b16 %v2266
    %v2659 = vunpack.c.l.b16 %v2267
    %v2660 = vunpack.c.h.b16 %v2267
    %v2661 = vunpack.c.l.b16 %v2268
    %v2662 = vunpack.c.l.b16 %v2269
    %v2663 = vunpack.c.h.b16 %v2269
    %v2664 = vunpack.c.l.b16 %v2270
    %v2665 = vunpack.c.l.b16 %v2271
    %v2666 = vunpack.c.h.b16 %v2271
    %v2667 = vunpack.c.l.b16 %v2272
    %v2668 = vunpack.c.l.b16 %v2273
    %v2669 = vunpack.c.h.b16 %v2273
    %v2670 = vunpack.c.l.b16 %v2274
    %v2671 = vunpack.c.l.b16 %v2275
    %v2672 = vunpack.c.h.b16 %v2275
    %v2673 = vunpack.c.l.b16 %v2276
    %v2674 = vunpack.c.l.b16 %v2277
    %v2675 = vunpack.c.h.b16 %v2277
    %v2676 = vunpack.c.l.b16 %v2278
    %v2677 = vunpack.c.l.b16 %v2279
    %v2678 = vunpack.c.h.b16 %v2279
    %v2679 = vunpack.c.l.b16 %v2280
    %v2680 = vunpack.c.l.b16 %v2281
    %v2681 = vunpack.c.h.b16 %v2281
    %v2682 = vunpack.c.l.b16 %v2282
    %v2683 = vpack.c.b16 %v2446, %v2443
    %v2684 = vpack.c.b16 %v2447, %v2444
    %v2685 = vpack.c.b16 %v2448, %v2445
    %v2686 = vpack.c.b16 %v2452, %v2449
    %v2687 = vpack.c.b16 %v2453, %v2450
    %v2688 = vpack.c.b16 %v2454, %v2451
    %v2689 = vpack.c.b16 %v2458, %v2455
    %v2690 = vpack.c.b16 %v2459, %v2456
    %v2691 = vpack.c.b16 %v2460, %v2457
    %v2692 = vpack.c.b16 %v2464, %v2461
    %v2693 = vpack.c.b16 %v2465, %v2462
    %v2694 = vpack.c.b16 %v2466, %v2463
    %v2695 = vpack.c.b16 %v2470, %v2467
    %v2696 = vpack.c.b16 %v2471, %v2468
    %v2697 = vpack.c.b16 %v2472, %v2469
    %v2698 = vpack.c.b16 %v2476, %v2473
    %v2699 = vpack.c.b16 %v2477, %v2474
    %v2700 = vpack.c.b16 %v2478, %v2475
    %v2701 = vpack.c.b16 %v2482, %v2479
    %v2702 = vpack.c.b16 %v2483, %v2480
    %v2703 = vpack.c.b16 %v2484, %v2481
    %v2704 = vpack.c.b16 %v2488, %v2485
    %v2705 = vpack.c.b16 %v2489, %v2486
    %v2706 = vpack.c.b16 %v2490, %v2487
    %v2707 = vpack.c.b16 %v2494, %v2491
    %v2708 = vpack.c.b16 %v2495, %v2492
    %v2709 = vpack.c.b16 %v2496, %v2493
    %v2710 = vpack.c.b16 %v2500, %v2497
    %v2711 = vpack.c.b16 %v2501, %v2498
    %v2712 = vpack.c.b16 %v2502, %v2499
    %v2713 = vpack.c.b16 %v2506, %v2503
    %v2714 = vpack.c.b16 %v2507, %v2504
    %v2715 = vpack.c.b16 %v2508, %v2505
    %v2716 = vpack.c.b16 %v2512, %v2509
    %v2717 = vpack.c.b16 %v2513, %v2510
    %v2718 = vpack.c.b16 %v2514, %v2511
    %v2719 = vpack.c.b16 %v2518, %v2515
    %v2720 = vpack.c.b16 %v2519, %v2516
    %v2721 = vpack.c.b16 %v2520, %v2517
    %v2722 = vpack.c.b16 %v2524, %v2521
    %v2723 = vpack.c.b16 %v2525, %v2522
    %v2724 = vpack.c.b16 %v2526, %v2523
    %v2725 = vpack.c.b16 %v2530, %v2527
    %v2726 = vpack.c.b16 %v2531, %v2528
    %v2727 = vpack.c.b16 %v2532, %v2529
    %v2728 = vpack.c.b16 %v2536, %v2533
    %v2729 = vpack.c.b16 %v2537, %v2534
    %v2730 = vpack.c.b16 %v2538, %v2535
    %v2731 = vpack.c.b16 %v2542, %v2539
    %v2732 = vpack.c.b16 %v2543, %v2540
    %v2733 = vpack.c.b16 %v2544, %v2541
    %v2734 = vpack.c.b16 %v2548, %v2545
    %v2735 = vpack.c.b16 %v2549, %v2546
    %v2736 = vpack.c.b16 %v2550, %v2547
    %v2737 = vpack.c.b16 %v2554, %v2551
    %v2738 = vpack.c.b16 %v2555, %v2552
    %v2739 = vpack.c.b16 %v2556, %v2553
    %v2740 = vpack.c.b16 %v2560, %v2557
    %v2741 = vpack.c.b16 %v2561, %v2558
    %v2742 = vpack.c.b16 %v2562, %v2559
    %v2743 = vpack.c.b16 %v2566, %v2563
    %v2744 = vpack.c.b16 %v2567, %v2564
    %v2745 = vpack.c.b16 %v2568, %v2565
    %v2746 = vpack.c.b16 %v2572, %v2569
    %v2747 = vpack.c.b16 %v2573, %v2570
    %v2748 = vpack.c.b16 %v2574, %v2571
    %v2749 = vpack.c.b16 %v2578, %v2575
    %v2750 = vpack.c.b16 %v2579, %v2576
    %v2751 = vpack.c.b16 %v2580, %v2577
    %v2752 = vpack.c.b16 %v2584, %v2581
    %v2753 = vpack.c.b16 %v2585, %v2582
    %v2754 = vpack.c.b16 %v2586, %v2583
    %v2755 = vpack.c.b16 %v2590, %v2587
    %v2756 = vpack.c.b16 %v2591, %v2588
    %v2757 = vpack.c.b16 %v2592, %v2589
    %v2758 = vpack.c.b16 %v2596, %v2593
    %v2759 = vpack.c.b16 %v2597, %v2594
    %v2760 = vpack.c.b16 %v2598, %v2595
    %v2761 = vpack.c.b16 %v2602, %v2599
    %v2762 = vpack.c.b16 %v2603, %v2600
    %v2763 = vpack.c.b16 %v2604, %v2601
    %v2764 = vpack.c.b16 %v2608, %v2605
    %v2765 = vpack.c.b16 %v2609, %v2606
    %v2766 = vpack.c.b16 %v2610, %v2607
    %v2767 = vpack.c.b16 %v2614, %v2611
    %v2768 = vpack.c.b16 %v2615, %v2612
    %v2769 = vpack.c.b16 %v2616, %v2613
    %v2770 = vpack.c.b16 %v2620, %v2617
    %v2771 = vpack.c.b16 %v2621, %v2618
    %v2772 = vpack.c.b16 %v2622, %v2619
    %v2773 = vpack.c.b16 %v2626, %v2623
    %v2774 = vpack.c.b16 %v2627, %v2624
    %v2775 = vpack.c.b16 %v2628, %v2625
    %v2776 = vpack.c.b16 %v2632, %v2629
    %v2777 = vpack.c.b16 %v2633, %v2630
    %v2778 = vpack.c.b16 %v2634, %v2631
    %v2779 = vpack.c.b16 %v2638, %v2635
    %v2780 = vpack.c.b16 %v2639, %v2636
    %v2781 = vpack.c.b16 %v2640, %v2637
    %v2782 = vpack.c.b16 %v2644, %v2641
    %v2783 = vpack.c.b16 %v2645, %v2642
    %v2784 = vpack.c.b16 %v2646, %v2643
    %v2785 = vpack.c.b16 %v2650, %v2647
    %v2786 = vpack.c.b16 %v2651, %v2648
    %v2787 = vpack.c.b16 %v2652, %v2649
    %v2788 = vpack.c.b16 %v2656, %v2653
    %v2789 = vpack.c.b16 %v2657, %v2654
    %v2790 = vpack.c.b16 %v2658, %v2655
    %v2791 = vpack.c.b16 %v2662, %v2659
    %v2792 = vpack.c.b16 %v2663, %v2660
    %v2793 = vpack.c.b16 %v2664, %v2661
    %v2794 = vpack.c.b16 %v2668, %v2665
    %v2795 = vpack.c.b16 %v2669, %v2666
    %v2796 = vpack.c.b16 %v2670, %v2667
    %v2797 = vpack.c.b16 %v2674, %v2671
    %v2798 = vpack.c.b16 %v2675, %v2672
    %v2799 = vpack.c.b16 %v2676, %v2673
    %v2800 = vpack.c.b16 %v2680, %v2677
    %v2801 = vpack.c.b16 %v2681, %v2678
    %v2802 = vpack.c.b16 %v2682, %v2679
    %2923 = vmatprep.subr.bf16.mxu0 %v2684
    %2924 = vmatpush1.bf16.msra.mxu0 %v2683
    %2925 = vmatprep.subr.bf16.mxu0 %v2687
    %2926 = vmatpush1.bf16.msra.mxu0 %v2686
    %2927 = vmatprep.subr.bf16.mxu0 %v2690
    %2928 = vmatpush1.bf16.msra.mxu0 %v2689
    %2929 = vmatprep.subr.bf16.mxu0 %v2693
    %2930 = vmatpush1.bf16.msra.mxu0 %v2692
    %2931 = vmatprep.subr.bf16.mxu0 %v2696
    %2932 = vmatpush1.bf16.msra.mxu0 %v2695
    %2933 = vmatprep.subr.bf16.mxu0 %v2699
    %2934 = vmatpush1.bf16.msra.mxu0 %v2698
    %2935 = vmatprep.subr.bf16.mxu0 %v2702
    %2936 = vmatpush1.bf16.msra.mxu0 %v2701
    %2937 = vmatprep.subr.bf16.mxu0 %v2705
    %2938 = vmatpush1.bf16.msra.mxu0 %v2704
    %2939 = vmatprep.subr.bf16.mxu0 %v2708
    %2940 = vmatpush1.bf16.msra.mxu0 %v2707
    %2941 = vmatprep.subr.bf16.mxu0 %v2711
    %2942 = vmatpush1.bf16.msra.mxu0 %v2710
    %2943 = vmatprep.subr.bf16.mxu0 %v2714
    %2944 = vmatpush1.bf16.msra.mxu0 %v2713
    %2945 = vmatprep.subr.bf16.mxu0 %v2717
    %2946 = vmatpush1.bf16.msra.mxu0 %v2716
    %2947 = vmatprep.subr.bf16.mxu0 %v2720
    %2948 = vmatpush1.bf16.msra.mxu0 %v2719
    %2949 = vmatprep.subr.bf16.mxu0 %v2723
    %2950 = vmatpush1.bf16.msra.mxu0 %v2722
    %2951 = vmatprep.subr.bf16.mxu0 %v2726
    %2952 = vmatpush1.bf16.msra.mxu0 %v2725
    %2953 = vmatprep.subr.bf16.mxu0 %v2729
    %2954 = vmatpush1.bf16.msra.mxu0 %v2728
    %2955 = vmatprep.mubr.bf16.mxu0 %v2119
    %2956 = vmatmul.mubr.bf16.gmra.mrb[0].mxu0 %v2118
    %v2957 = vpop.f32.mrb[0].mxu0
    %v2958 = vadd.f32 0.0, %v2957
    %v2959 = vpop.f32.mrb[0].mxu0
    %v2960 = vadd.f32 0.0, %v2959
    %v2961 = vpop.f32.mrb[0].mxu0
    %v2962 = vadd.f32 0.0, %v2961
    %v2963 = vpop.f32.mrb[0].mxu0
    %v2964 = vadd.f32 0.0, %v2963
    %2965 = vdwg.mxu0
    %2966 = vmatprep.subr.bf16.mxu0 %v2732
    %2967 = vmatpush1.bf16.msra.mxu0 %v2731
    %2968 = vmatprep.subr.bf16.mxu0 %v2735
    %2969 = vmatpush1.bf16.msra.mxu0 %v2734
    %2970 = vmatprep.subr.bf16.mxu0 %v2738
    %2971 = vmatpush1.bf16.msra.mxu0 %v2737
    %2972 = vmatprep.subr.bf16.mxu0 %v2741
    %2973 = vmatpush1.bf16.msra.mxu0 %v2740
    %2974 = vmatprep.subr.bf16.mxu0 %v2744
    %2975 = vmatpush1.bf16.msra.mxu0 %v2743
    %2976 = vmatprep.subr.bf16.mxu0 %v2747
    %2977 = vmatpush1.bf16.msra.mxu0 %v2746
    %2978 = vmatprep.subr.bf16.mxu0 %v2750
    %2979 = vmatpush1.bf16.msra.mxu0 %v2749
    %2980 = vmatprep.subr.bf16.mxu0 %v2753
    %2981 = vmatpush1.bf16.msra.mxu0 %v2752
    %2982 = vmatprep.subr.bf16.mxu0 %v2756
    %2983 = vmatpush1.bf16.msra.mxu0 %v2755
    %2984 = vmatprep.subr.bf16.mxu0 %v2759
    %2985 = vmatpush1.bf16.msra.mxu0 %v2758
    %2986 = vmatprep.subr.bf16.mxu0 %v2762
    %2987 = vmatpush1.bf16.msra.mxu0 %v2761
    %2988 = vmatprep.subr.bf16.mxu0 %v2765
    %2989 = vmatpush1.bf16.msra.mxu0 %v2764
    %2990 = vmatprep.subr.bf16.mxu0 %v2768
    %2991 = vmatpush1.bf16.msra.mxu0 %v2767
    %2992 = vmatprep.subr.bf16.mxu0 %v2771
    %2993 = vmatpush1.bf16.msra.mxu0 %v2770
    %2994 = vmatprep.subr.bf16.mxu0 %v2774
    %2995 = vmatpush1.bf16.msra.mxu0 %v2773
    %2996 = vmatprep.subr.bf16.mxu0 %v2777
    %2997 = vmatpush1.bf16.msra.mxu0 %v2776
    %2998 = vmatprep.mubr.bf16.mxu0 %v2121
    %2999 = vmatmul.mubr.bf16.gmra.mrb[0].mxu0 %v2120
    %v3000 = vpop.f32.mrb[0].mxu0
    %v3001 = vadd.f32 %v2958, %v3000
    %v3002 = vpop.f32.mrb[0].mxu0
    %v3003 = vadd.f32 %v2960, %v3002
    %v3004 = vpop.f32.mrb[0].mxu0
    %v3005 = vadd.f32 %v2962, %v3004
    %v3006 = vpop.f32.mrb[0].mxu0
    %v3007 = vadd.f32 %v2964, %v3006
    %3008 = vdwg.mxu0
    %3009 = vmatprep.subr.bf16.mxu0 %v2780
    %3010 = vmatpush1.bf16.msra.mxu0 %v2779
    %3011 = vmatprep.subr.bf16.mxu0 %v2783
    %3012 = vmatpush1.bf16.msra.mxu0 %v2782
    %3013 = vmatprep.subr.bf16.mxu0 %v2786
    %3014 = vmatpush1.bf16.msra.mxu0 %v2785
    %3015 = vmatprep.subr.bf16.mxu0 %v2789
    %3016 = vmatpush1.bf16.msra.mxu0 %v2788
    %3017 = vmatprep.subr.bf16.mxu0 %v2792
    %3018 = vmatpush1.bf16.msra.mxu0 %v2791
    %3019 = vmatprep.subr.bf16.mxu0 %v2795
    %3020 = vmatpush1.bf16.msra.mxu0 %v2794
    %3021 = vmatprep.subr.bf16.mxu0 %v2798
    %3022 = vmatpush1.bf16.msra.mxu0 %v2797
    %3023 = vmatprep.subr.bf16.mxu0 %v2801
    %3024 = vmatpush1.bf16.msra.mxu0 %v2800
    %3025 = vmatprep.subr.bf16.mxu0 0
    %3026 = vmatpush1.bf16.msra.mxu0 0
    %3027 = vmatprep.subr.bf16.mxu0 0
    %3028 = vmatpush1.bf16.msra.mxu0 0
    %3029 = vmatprep.subr.bf16.mxu0 0
    %3030 = vmatpush1.bf16.msra.mxu0 0
    %3031 = vmatprep.subr.bf16.mxu0 0
    %3032 = vmatpush1.bf16.msra.mxu0 0
    %3033 = vmatprep.subr.bf16.mxu0 0
    %3034 = vmatpush1.bf16.msra.mxu0 0
    %3035 = vmatprep.subr.bf16.mxu0 0
    %3036 = vmatpush1.bf16.msra.mxu0 0
    %3037 = vmatprep.subr.bf16.mxu0 0
    %3038 = vmatpush1.bf16.msra.mxu0 0
    %3039 = vmatprep.subr.bf16.mxu0 0
    %3040 = vmatpush1.bf16.msra.mxu0 0
    %3041 = vmatprep.mubr.bf16.mxu0 0
    %3042 = vmatmul.mubr.bf16.gmra.mrb[0].mxu0 %v2122
    %v3043 = vpop.f32.mrb[0].mxu0
    %v3044 = vadd.f32 %v3001, %v3043
    %v3045 = vpop.f32.mrb[0].mxu0
    %v3046 = vadd.f32 %v3003, %v3045
    %v3047 = vpop.f32.mrb[0].mxu0
    %v3048 = vadd.f32 %v3005, %v3047
    %v3049 = vpop.f32.mrb[0].mxu0
    %v3050 = vadd.f32 %v3007, %v3049
    %3051 = vdwg.mxu0
    %3052 = vmatprep.subr.bf16.mxu0 0
    %3053 = vmatpush1.bf16.msra.mxu0 %v2685
    %3054 = vmatprep.subr.bf16.mxu0 0
    %3055 = vmatpush1.bf16.msra.mxu0 %v2688
    %3056 = vmatprep.subr.bf16.mxu0 0
    %3057 = vmatpush1.bf16.msra.mxu0 %v2691
    %3058 = vmatprep.subr.bf16.mxu0 0
    %3059 = vmatpush1.bf16.msra.mxu0 %v2694
    %3060 = vmatprep.subr.bf16.mxu0 0
    %3061 = vmatpush1.bf16.msra.mxu0 %v2697
    %3062 = vmatprep.subr.bf16.mxu0 0
    %3063 = vmatpush1.bf16.msra.mxu0 %v2700
    %3064 = vmatprep.subr.bf16.mxu0 0
    %3065 = vmatpush1.bf16.msra.mxu0 %v2703
    %3066 = vmatprep.subr.bf16.mxu0 0
    %3067 = vmatpush1.bf16.msra.mxu0 %v2706
    %3068 = vmatprep.subr.bf16.mxu0 0
    %3069 = vmatpush1.bf16.msra.mxu0 %v2709
    %3070 = vmatprep.subr.bf16.mxu0 0
    %3071 = vmatpush1.bf16.msra.mxu0 %v2712
    %3072 = vmatprep.subr.bf16.mxu0 0
    %3073 = vmatpush1.bf16.msra.mxu0 %v2715
    %3074 = vmatprep.subr.bf16.mxu0 0
    %3075 = vmatpush1.bf16.msra.mxu0 %v2718
    %3076 = vmatprep.subr.bf16.mxu0 0
    %3077 = vmatpush1.bf16.msra.mxu0 %v2721
    %3078 = vmatprep.subr.bf16.mxu0 0
    %3079 = vmatpush1.bf16.msra.mxu0 %v2724
    %3080 = vmatprep.subr.bf16.mxu0 0
    %3081 = vmatpush1.bf16.msra.mxu0 %v2727
    %3082 = vmatprep.subr.bf16.mxu0 0
    %3083 = vmatpush1.bf16.msra.mxu0 %v2730
    %3084 = vmatprep.mubr.bf16.mxu0 %v2119
    %3085 = vmatmul.mubr.bf16.gmra.mrb[0].mxu0 %v2118
    %v3086 = vpop.f32.mrb[0].mxu0
    %v3087 = vadd.f32 0.0, %v3086
    %v3088 = vpop.f32.mrb[0].mxu0
    %v3089 = vpop.f32.mrb[0].mxu0
    %v3090 = vadd.f32 0.0, %v3089
    %v3091 = vpop.f32.mrb[0].mxu0
    %3092 = vdwg.mxu0
    %3093 = vmatprep.subr.bf16.mxu0 0
    %3094 = vmatpush1.bf16.msra.mxu0 %v2733
    %3095 = vmatprep.subr.bf16.mxu0 0
    %3096 = vmatpush1.bf16.msra.mxu0 %v2736
    %3097 = vmatprep.subr.bf16.mxu0 0
    %3098 = vmatpush1.bf16.msra.mxu0 %v2739
    %3099 = vmatprep.subr.bf16.mxu0 0
    %3100 = vmatpush1.bf16.msra.mxu0 %v2742
    %3101 = vmatprep.subr.bf16.mxu0 0
    %3102 = vmatpush1.bf16.msra.mxu0 %v2745
    %3103 = vmatprep.subr.bf16.mxu0 0
    %3104 = vmatpush1.bf16.msra.mxu0 %v2748
    %3105 = vmatprep.subr.bf16.mxu0 0
    %3106 = vmatpush1.bf16.msra.mxu0 %v2751
    %3107 = vmatprep.subr.bf16.mxu0 0
    %3108 = vmatpush1.bf16.msra.mxu0 %v2754
    %3109 = vmatprep.subr.bf16.mxu0 0
    %3110 = vmatpush1.bf16.msra.mxu0 %v2757
    %3111 = vmatprep.subr.bf16.mxu0 0
    %3112 = vmatpush1.bf16.msra.mxu0 %v2760
    %3113 = vmatprep.subr.bf16.mxu0 0
    %3114 = vmatpush1.bf16.msra.mxu0 %v2763
    %3115 = vmatprep.subr.bf16.mxu0 0
    %3116 = vmatpush1.bf16.msra.mxu0 %v2766
    %3117 = vmatprep.subr.bf16.mxu0 0
    %3118 = vmatpush1.bf16.msra.mxu0 %v2769
    %3119 = vmatprep.subr.bf16.mxu0 0
    %3120 = vmatpush1.bf16.msra.mxu0 %v2772
    %3121 = vmatprep.subr.bf16.mxu0 0
    %3122 = vmatpush1.bf16.msra.mxu0 %v2775
    %3123 = vmatprep.subr.bf16.mxu0 0
    %3124 = vmatpush1.bf16.msra.mxu0 %v2778
    %3125 = vmatprep.mubr.bf16.mxu0 %v2121
    %3126 = vmatmul.mubr.bf16.gmra.mrb[0].mxu0 %v2120
    %v3127 = vpop.f32.mrb[0].mxu0
    %v3128 = vadd.f32 %v3087, %v3127
    %v3129 = vpop.f32.mrb[0].mxu0
    %v3130 = vpop.f32.mrb[0].mxu0
    %v3131 = vadd.f32 %v3090, %v3130
    %v3132 = vpop.f32.mrb[0].mxu0
    %3133 = vdwg.mxu0
    %3134 = vmatprep.subr.bf16.mxu0 0
    %3135 = vmatpush1.bf16.msra.mxu0 %v2781
    %3136 = vmatprep.subr.bf16.mxu0 0
    %3137 = vmatpush1.bf16.msra.mxu0 %v2784
    %3138 = vmatprep.subr.bf16.mxu0 0
    %3139 = vmatpush1.bf16.msra.mxu0 %v2787
    %3140 = vmatprep.subr.bf16.mxu0 0
    %3141 = vmatpush1.bf16.msra.mxu0 %v2790
    %3142 = vmatprep.subr.bf16.mxu0 0
    %3143 = vmatpush1.bf16.msra.mxu0 %v2793
    %3144 = vmatprep.subr.bf16.mxu0 0
    %3145 = vmatpush1.bf16.msra.mxu0 %v2796
    %3146 = vmatprep.subr.bf16.mxu0 0
    %3147 = vmatpush1.bf16.msra.mxu0 %v2799
    %3148 = vmatprep.subr.bf16.mxu0 0
    %3149 = vmatpush1.bf16.msra.mxu0 %v2802
    %3150 = vmatprep.subr.bf16.mxu0 0
    %3151 = vmatpush1.bf16.msra.mxu0 0
    %3152 = vmatprep.subr.bf16.mxu0 0
    %3153 = vmatpush1.bf16.msra.mxu0 0
    %3154 = vmatprep.subr.bf16.mxu0 0
    %3155 = vmatpush1.bf16.msra.mxu0 0
    %3156 = vmatprep.subr.bf16.mxu0 0
    %3157 = vmatpush1.bf16.msra.mxu0 0
    %3158 = vmatprep.subr.bf16.mxu0 0
    %3159 = vmatpush1.bf16.msra.mxu0 0
    %3160 = vmatprep.subr.bf16.mxu0 0
    %3161 = vmatpush1.bf16.msra.mxu0 0
    %3162 = vmatprep.subr.bf16.mxu0 0
    %3163 = vmatpush1.bf16.msra.mxu0 0
    %3164 = vmatprep.subr.bf16.mxu0 0
    %3165 = vmatpush1.bf16.msra.mxu0 0
    %3166 = vmatprep.mubr.bf16.mxu0 0
    %3167 = vmatmul.mubr.bf16.gmra.mrb[0].mxu0 %v2122
    %v3168 = vpop.f32.mrb[0].mxu0
    %v3169 = vadd.f32 %v3128, %v3168
    %v3170 = vpop.f32.mrb[0].mxu0
    %v3171 = vpop.f32.mrb[0].mxu0
    %v3172 = vadd.f32 %v3131, %v3171
    %v3173 = vpop.f32.mrb[0].mxu0
    %3174 = vdwg.mxu0
    %s3175 = scalar_lea.vmem %s6, 21
    %v3176 = vld [vmem:[%s3175] ss:$2 sm:$0x7]
    %v3178 = vlaneseq
    %v3179 = vshrl.u32 %v3178, 7
    %v3180 = vsub.s32 0, %v3179
    %v3181 = vrot.slane %v3176, %v3180
    %v3182 = vlaneseq
    %v3183 = vshrl.u32 %v3182, 7
    %v3184 = vsub.s32 1, %v3183
    %v3185 = vrot.slane %v3176, %v3184
    %v3186 = vlaneseq
    %v3187 = vshrl.u32 %v3186, 7
    %v3188 = vsub.s32 2, %v3187
    %v3189 = vrot.slane %v3176, %v3188
    %v3193 = vmul.f32 %v3044, %v3181
    %v3194 = vmul.f32 %v3046, %v3185
    %v3195 = vmul.f32 %v3169, %v3189
    %v3196 = vmul.f32 %v3048, %v3181
    %v3197 = vmul.f32 %v3050, %v3185
    %v3198 = vmul.f32 %v3172, %v3189
    %s3199 = scalar_lea.vmem %s6, 20
    %v3200 = vld [vmem:[%s3199] ss:$2 sm:$0x7]
    %v3202 = vlaneseq
    %v3203 = vshrl.u32 %v3202, 7
    %v3204 = vsub.s32 0, %v3203
    %v3205 = vrot.slane %v3200, %v3204
    %v3206 = vlaneseq
    %v3207 = vshrl.u32 %v3206, 7
    %v3208 = vsub.s32 1, %v3207
    %v3209 = vrot.slane %v3200, %v3208
    %v3210 = vlaneseq
    %v3211 = vshrl.u32 %v3210, 7
    %v3212 = vsub.s32 2, %v3211
    %v3213 = vrot.slane %v3200, %v3212
    %v3217 = vadd.f32 %v3193, %v3205
    %v3218 = vadd.f32 %v3194, %v3209
    %v3219 = vadd.f32 %v3195, %v3213
    %v3220 = vadd.f32 %v3196, %v3205
    %v3221 = vadd.f32 %v3197, %v3209
    %v3222 = vadd.f32 %v3198, %v3213
    %v3223 = vmul.f32 %v3217, 0.1
    %v3224 = vmul.f32 %v3218, 0.1
    %v3225 = vmul.f32 %v3219, 0.1
    %v3226 = vmul.f32 %v3220, 0.1
    %v3227 = vmul.f32 %v3221, 0.1
    %v3228 = vmul.f32 %v3222, 0.1
    %v3229 = vmax.f32 %v3217, %v3223
    %v3230 = vmax.f32 %v3218, %v3224
    %v3231 = vmax.f32 %v3219, %v3225
    %v3232 = vmax.f32 %v3220, %v3226
    %v3233 = vmax.f32 %v3221, %v3227
    %v3234 = vmax.f32 %v3222, %v3228
    %v3235 = vpack.c.bf16 %v3232, %v3229
    %v3236 = vpack.c.bf16 %v3233, %v3230
    %v3237 = vpack.c.bf16 %v3234, %v3231
    %v3238 = vld [vmem:[#allocation7] sm:$0xff]
    %v3239 = vld [vmem:[#allocation7 + $0x8] sm:$0xf]
    %v3240 = vld [vmem:[#allocation7 + $0xc] sm:$0xff]
    %v3241 = vld [vmem:[#allocation7 + $0x14] sm:$0xf]
    %v3242 = vld [vmem:[#allocation7 + $0x18] sm:$0xff]
    %v3243 = vld [vmem:[#allocation7 + $0x20] sm:$0xf]
    %v3244 = vld [vmem:[#allocation7 + $0x24] sm:$0xff]
    %v3245 = vld [vmem:[#allocation7 + $0x2c] sm:$0xf]
    %v3246 = vld [vmem:[#allocation7 + $0x30] sm:$0xff]
    %v3247 = vld [vmem:[#allocation7 + $0x38] sm:$0xf]
    %v3248 = vld [vmem:[#allocation7 + $0x3c] sm:$0xff]
    %v3249 = vld [vmem:[#allocation7 + $0x44] sm:$0xf]
    %v3250 = vld [vmem:[#allocation7 + $0x48] sm:$0xff]
    %v3251 = vld [vmem:[#allocation7 + $0x50] sm:$0xf]
    %v3252 = vld [vmem:[#allocation7 + $0x54] sm:$0xff]
    %v3253 = vld [vmem:[#allocation7 + $0x5c] sm:$0xf]
    %v3254 = vld [vmem:[#allocation7 + $0x60] sm:$0xff]
    %v3255 = vld [vmem:[#allocation7 + $0x68] sm:$0xf]
    %v3256 = vld [vmem:[#allocation7 + $0x6c] sm:$0xff]
    %v3257 = vld [vmem:[#allocation7 + $0x74] sm:$0xf]
    %v3258 = vld [vmem:[#allocation7 + $0x78] sm:$0xff]
    %v3259 = vld [vmem:[#allocation7 + $0x80] sm:$0xf]
    %v3260 = vld [vmem:[#allocation7 + $0x84] sm:$0xff]
    %v3261 = vld [vmem:[#allocation7 + $0x8c] sm:$0xf]
    %v3262 = vld [vmem:[#allocation7 + $0x90] sm:$0xff]
    %v3263 = vld [vmem:[#allocation7 + $0x98] sm:$0xf]
    %v3264 = vld [vmem:[#allocation7 + $0x9c] sm:$0xff]
    %v3265 = vld [vmem:[#allocation7 + $0xa4] sm:$0xf]
    %v3266 = vld [vmem:[#allocation7 + $0xa8] sm:$0xff]
    %v3267 = vld [vmem:[#allocation7 + $0xb0] sm:$0xf]
    %v3268 = vld [vmem:[#allocation7 + $0xb4] sm:$0xff]
    %v3269 = vld [vmem:[#allocation7 + $0xbc] sm:$0xf]
    %v3270 = vld [vmem:[#allocation7 + $0xc0] sm:$0xff]
    %v3271 = vld [vmem:[#allocation7 + $0xc8] sm:$0xf]
    %v3272 = vld [vmem:[#allocation7 + $0xcc] sm:$0xff]
    %v3273 = vld [vmem:[#allocation7 + $0xd4] sm:$0xf]
    %v3274 = vld [vmem:[#allocation7 + $0xd8] sm:$0xff]
    %v3275 = vld [vmem:[#allocation7 + $0xe0] sm:$0xf]
    %v3276 = vld [vmem:[#allocation7 + $0xe4] sm:$0xff]
    %v3277 = vld [vmem:[#allocation7 + $0xec] sm:$0xf]
    %v3278 = vld [vmem:[#allocation7 + $0xf0] sm:$0xff]
    %v3279 = vld [vmem:[#allocation7 + $0xf8] sm:$0xf]
    %v3280 = vld [vmem:[#allocation7 + $0xfc] sm:$0xff]
    %v3281 = vld [vmem:[#allocation7 + $0x104] sm:$0xf]
    %v3282 = vld [vmem:[#allocation7 + $0x108] sm:$0xff]
    %v3283 = vld [vmem:[#allocation7 + $0x110] sm:$0xf]
    %v3284 = vld [vmem:[#allocation7 + $0x114] sm:$0xff]
    %v3285 = vld [vmem:[#allocation7 + $0x11c] sm:$0xf]
    %v3286 = vld [vmem:[#allocation7 + $0x120] sm:$0xff]
    %v3287 = vld [vmem:[#allocation7 + $0x128] sm:$0xf]
    %v3288 = vld [vmem:[#allocation7 + $0x12c] sm:$0xff]
    %v3289 = vld [vmem:[#allocation7 + $0x134] sm:$0xf]
    %v3290 = vld [vmem:[#allocation7 + $0x138] sm:$0xff]
    %v3291 = vld [vmem:[#allocation7 + $0x140] sm:$0xf]
    %v3292 = vld [vmem:[#allocation7 + $0x144] sm:$0xff]
    %v3293 = vld [vmem:[#allocation7 + $0x14c] sm:$0xf]
    %v3294 = vld [vmem:[#allocation7 + $0x150] sm:$0xff]
    %v3295 = vld [vmem:[#allocation7 + $0x158] sm:$0xf]
    %v3296 = vld [vmem:[#allocation7 + $0x15c] sm:$0xff]
    %v3297 = vld [vmem:[#allocation7 + $0x164] sm:$0xf]
    %v3298 = vld [vmem:[#allocation7 + $0x168] sm:$0xff]
    %v3299 = vld [vmem:[#allocation7 + $0x170] sm:$0xf]
    %v3300 = vld [vmem:[#allocation7 + $0x174] sm:$0xff]
    %v3301 = vld [vmem:[#allocation7 + $0x17c] sm:$0xf]
    %v3302 = vld [vmem:[#allocation7 + $0x180] sm:$0xff]
    %v3303 = vld [vmem:[#allocation7 + $0x188] sm:$0xf]
    %v3304 = vld [vmem:[#allocation7 + $0x18c] sm:$0xff]
    %v3305 = vld [vmem:[#allocation7 + $0x194] sm:$0xf]
    %v3306 = vld [vmem:[#allocation7 + $0x198] sm:$0xff]
    %v3307 = vld [vmem:[#allocation7 + $0x1a0] sm:$0xf]
    %v3308 = vld [vmem:[#allocation7 + $0x1a4] sm:$0xff]
    %v3309 = vld [vmem:[#allocation7 + $0x1ac] sm:$0xf]
    %v3310 = vld [vmem:[#allocation7 + $0x1b0] sm:$0xff]
    %v3311 = vld [vmem:[#allocation7 + $0x1b8] sm:$0xf]
    %v3312 = vld [vmem:[#allocation7 + $0x1bc] sm:$0xff]
    %v3313 = vld [vmem:[#allocation7 + $0x1c4] sm:$0xf]
    %v3314 = vld [vmem:[#allocation7 + $0x1c8] sm:$0xff]
    %v3315 = vld [vmem:[#allocation7 + $0x1d0] sm:$0xf]
    %v3316 = vld [vmem:[#allocation7 + $0x1d4] sm:$0xff]
    %v3317 = vld [vmem:[#allocation7 + $0x1dc] sm:$0xf]
    %v3318 = vld [vmem:[#allocation7 + $0x1e0] sm:$0xff]
    %v3319 = vld [vmem:[#allocation7 + $0x1e8] sm:$0xf]
    %v3320 = vld [vmem:[#allocation7 + $0x1ec] sm:$0xff]
    %v3321 = vld [vmem:[#allocation7 + $0x1f4] sm:$0xf]
    %v3322 = vld [vmem:[#allocation7 + $0x1f8] sm:$0xff]
    %v3323 = vld [vmem:[#allocation7 + $0x200] sm:$0xf]
    %v3324 = vld [vmem:[#allocation7 + $0x204] sm:$0xff]
    %v3325 = vld [vmem:[#allocation7 + $0x20c] sm:$0xf]
    %v3326 = vld [vmem:[#allocation7 + $0x210] sm:$0xff]
    %v3327 = vld [vmem:[#allocation7 + $0x218] sm:$0xf]
    %v3328 = vld [vmem:[#allocation7 + $0x21c] sm:$0xff]
    %v3329 = vld [vmem:[#allocation7 + $0x224] sm:$0xf]
    %v3330 = vld [vmem:[#allocation7 + $0x228] sm:$0xff]
    %v3331 = vld [vmem:[#allocation7 + $0x230] sm:$0xf]
    %v3332 = vld [vmem:[#allocation7 + $0x234] sm:$0xff]
    %v3333 = vld [vmem:[#allocation7 + $0x23c] sm:$0xf]
    %v3430 = vunpack.c.l.b16 %v3238
    %v3431 = vunpack.c.h.b16 %v3238
    %v3432 = vunpack.c.l.b16 %v3239
    %v3433 = vunpack.c.l.b16 %v3240
    %v3434 = vunpack.c.h.b16 %v3240
    %v3435 = vunpack.c.l.b16 %v3241
    %v3436 = vunpack.c.l.b16 %v3242
    %v3437 = vunpack.c.h.b16 %v3242
    %v3438 = vunpack.c.l.b16 %v3243
    %v3439 = vunpack.c.l.b16 %v3244
    %v3440 = vunpack.c.h.b16 %v3244
    %v3441 = vunpack.c.l.b16 %v3245
    %v3442 = vunpack.c.l.b16 %v3246
    %v3443 = vunpack.c.h.b16 %v3246
    %v3444 = vunpack.c.l.b16 %v3247
    %v3445 = vunpack.c.l.b16 %v3248
    %v3446 = vunpack.c.h.b16 %v3248
    %v3447 = vunpack.c.l.b16 %v3249
    %v3448 = vunpack.c.l.b16 %v3250
    %v3449 = vunpack.c.h.b16 %v3250
    %v3450 = vunpack.c.l.b16 %v3251
    %v3451 = vunpack.c.l.b16 %v3252
    %v3452 = vunpack.c.h.b16 %v3252
    %v3453 = vunpack.c.l.b16 %v3253
    %v3454 = vunpack.c.l.b16 %v3254
    %v3455 = vunpack.c.h.b16 %v3254
    %v3456 = vunpack.c.l.b16 %v3255
    %v3457 = vunpack.c.l.b16 %v3256
    %v3458 = vunpack.c.h.b16 %v3256
    %v3459 = vunpack.c.l.b16 %v3257
    %v3460 = vunpack.c.l.b16 %v3258
    %v3461 = vunpack.c.h.b16 %v3258
    %v3462 = vunpack.c.l.b16 %v3259
    %v3463 = vunpack.c.l.b16 %v3260
    %v3464 = vunpack.c.h.b16 %v3260
    %v3465 = vunpack.c.l.b16 %v3261
    %v3466 = vunpack.c.l.b16 %v3262
    %v3467 = vunpack.c.h.b16 %v3262
    %v3468 = vunpack.c.l.b16 %v3263
    %v3469 = vunpack.c.l.b16 %v3264
    %v3470 = vunpack.c.h.b16 %v3264
    %v3471 = vunpack.c.l.b16 %v3265
    %v3472 = vunpack.c.l.b16 %v3266
    %v3473 = vunpack.c.h.b16 %v3266
    %v3474 = vunpack.c.l.b16 %v3267
    %v3475 = vunpack.c.l.b16 %v3268
    %v3476 = vunpack.c.h.b16 %v3268
    %v3477 = vunpack.c.l.b16 %v3269
    %v3478 = vunpack.c.l.b16 %v3270
    %v3479 = vunpack.c.h.b16 %v3270
    %v3480 = vunpack.c.l.b16 %v3271
    %v3481 = vunpack.c.l.b16 %v3272
    %v3482 = vunpack.c.h.b16 %v3272
    %v3483 = vunpack.c.l.b16 %v3273
    %v3484 = vunpack.c.l.b16 %v3274
    %v3485 = vunpack.c.h.b16 %v3274
    %v3486 = vunpack.c.l.b16 %v3275
    %v3487 = vunpack.c.l.b16 %v3276
    %v3488 = vunpack.c.h.b16 %v3276
    %v3489 = vunpack.c.l.b16 %v3277
    %v3490 = vunpack.c.l.b16 %v3278
    %v3491 = vunpack.c.h.b16 %v3278
    %v3492 = vunpack.c.l.b16 %v3279
    %v3493 = vunpack.c.l.b16 %v3280
    %v3494 = vunpack.c.h.b16 %v3280
    %v3495 = vunpack.c.l.b16 %v3281
    %v3496 = vunpack.c.l.b16 %v3282
    %v3497 = vunpack.c.h.b16 %v3282
    %v3498 = vunpack.c.l.b16 %v3283
    %v3499 = vunpack.c.l.b16 %v3284
    %v3500 = vunpack.c.h.b16 %v3284
    %v3501 = vunpack.c.l.b16 %v3285
    %v3502 = vunpack.c.l.b16 %v3286
    %v3503 = vunpack.c.h.b16 %v3286
    %v3504 = vunpack.c.l.b16 %v3287
    %v3505 = vunpack.c.l.b16 %v3288
    %v3506 = vunpack.c.h.b16 %v3288
    %v3507 = vunpack.c.l.b16 %v3289
    %v3508 = vunpack.c.l.b16 %v3290
    %v3509 = vunpack.c.h.b16 %v3290
    %v3510 = vunpack.c.l.b16 %v3291
    %v3511 = vunpack.c.l.b16 %v3292
    %v3512 = vunpack.c.h.b16 %v3292
    %v3513 = vunpack.c.l.b16 %v3293
    %v3514 = vunpack.c.l.b16 %v3294
    %v3515 = vunpack.c.h.b16 %v3294
    %v3516 = vunpack.c.l.b16 %v3295
    %v3517 = vunpack.c.l.b16 %v3296
    %v3518 = vunpack.c.h.b16 %v3296
    %v3519 = vunpack.c.l.b16 %v3297
    %v3520 = vunpack.c.l.b16 %v3298
    %v3521 = vunpack.c.h.b16 %v3298
    %v3522 = vunpack.c.l.b16 %v3299
    %v3523 = vunpack.c.l.b16 %v3300
    %v3524 = vunpack.c.h.b16 %v3300
    %v3525 = vunpack.c.l.b16 %v3301
    %v3526 = vunpack.c.l.b16 %v3302
    %v3527 = vunpack.c.h.b16 %v3302
    %v3528 = vunpack.c.l.b16 %v3303
    %v3529 = vunpack.c.l.b16 %v3304
    %v3530 = vunpack.c.h.b16 %v3304
    %v3531 = vunpack.c.l.b16 %v3305
    %v3532 = vunpack.c.l.b16 %v3306
    %v3533 = vunpack.c.h.b16 %v3306
    %v3534 = vunpack.c.l.b16 %v3307
    %v3535 = vunpack.c.l.b16 %v3308
    %v3536 = vunpack.c.h.b16 %v3308
    %v3537 = vunpack.c.l.b16 %v3309
    %v3538 = vunpack.c.l.b16 %v3310
    %v3539 = vunpack.c.h.b16 %v3310
    %v3540 = vunpack.c.l.b16 %v3311
    %v3541 = vunpack.c.l.b16 %v3312
    %v3542 = vunpack.c.h.b16 %v3312
    %v3543 = vunpack.c.l.b16 %v3313
    %v3544 = vunpack.c.l.b16 %v3314
    %v3545 = vunpack.c.h.b16 %v3314
    %v3546 = vunpack.c.l.b16 %v3315
    %v3547 = vunpack.c.l.b16 %v3316
    %v3548 = vunpack.c.h.b16 %v3316
    %v3549 = vunpack.c.l.b16 %v3317
    %v3550 = vunpack.c.l.b16 %v3318
    %v3551 = vunpack.c.h.b16 %v3318
    %v3552 = vunpack.c.l.b16 %v3319
    %v3553 = vunpack.c.l.b16 %v3320
    %v3554 = vunpack.c.h.b16 %v3320
    %v3555 = vunpack.c.l.b16 %v3321
    %v3556 = vunpack.c.l.b16 %v3322
    %v3557 = vunpack.c.h.b16 %v3322
    %v3558 = vunpack.c.l.b16 %v3323
    %v3559 = vunpack.c.l.b16 %v3324
    %v3560 = vunpack.c.h.b16 %v3324
    %v3561 = vunpack.c.l.b16 %v3325
    %v3562 = vunpack.c.l.b16 %v3326
    %v3563 = vunpack.c.h.b16 %v3326
    %v3564 = vunpack.c.l.b16 %v3327
    %v3565 = vunpack.c.l.b16 %v3328
    %v3566 = vunpack.c.h.b16 %v3328
    %v3567 = vunpack.c.l.b16 %v3329
    %v3568 = vunpack.c.l.b16 %v3330
    %v3569 = vunpack.c.h.b16 %v3330
    %v3570 = vunpack.c.l.b16 %v3331
    %v3571 = vunpack.c.l.b16 %v3332
    %v3572 = vunpack.c.h.b16 %v3332
    %v3573 = vunpack.c.l.b16 %v3333
    %v3574 = vpack.c.b16 %v3433, %v3430
    %v3575 = vpack.c.b16 %v3434, %v3431
    %v3576 = vpack.c.b16 %v3435, %v3432
    %v3577 = vpack.c.b16 %v3439, %v3436
    %v3578 = vpack.c.b16 %v3440, %v3437
    %v3579 = vpack.c.b16 %v3441, %v3438
    %v3580 = vpack.c.b16 %v3445, %v3442
    %v3581 = vpack.c.b16 %v3446, %v3443
    %v3582 = vpack.c.b16 %v3447, %v3444
    %v3583 = vpack.c.b16 %v3451, %v3448
    %v3584 = vpack.c.b16 %v3452, %v3449
    %v3585 = vpack.c.b16 %v3453, %v3450
    %v3586 = vpack.c.b16 %v3457, %v3454
    %v3587 = vpack.c.b16 %v3458, %v3455
    %v3588 = vpack.c.b16 %v3459, %v3456
    %v3589 = vpack.c.b16 %v3463, %v3460
    %v3590 = vpack.c.b16 %v3464, %v3461
    %v3591 = vpack.c.b16 %v3465, %v3462
    %v3592 = vpack.c.b16 %v3469, %v3466
    %v3593 = vpack.c.b16 %v3470, %v3467
    %v3594 = vpack.c.b16 %v3471, %v3468
    %v3595 = vpack.c.b16 %v3475, %v3472
    %v3596 = vpack.c.b16 %v3476, %v3473
    %v3597 = vpack.c.b16 %v3477, %v3474
    %v3598 = vpack.c.b16 %v3481, %v3478
    %v3599 = vpack.c.b16 %v3482, %v3479
    %v3600 = vpack.c.b16 %v3483, %v3480
    %v3601 = vpack.c.b16 %v3487, %v3484
    %v3602 = vpack.c.b16 %v3488, %v3485
    %v3603 = vpack.c.b16 %v3489, %v3486
    %v3604 = vpack.c.b16 %v3493, %v3490
    %v3605 = vpack.c.b16 %v3494, %v3491
    %v3606 = vpack.c.b16 %v3495, %v3492
    %v3607 = vpack.c.b16 %v3499, %v3496
    %v3608 = vpack.c.b16 %v3500, %v3497
    %v3609 = vpack.c.b16 %v3501, %v3498
    %v3610 = vpack.c.b16 %v3505, %v3502
    %v3611 = vpack.c.b16 %v3506, %v3503
    %v3612 = vpack.c.b16 %v3507, %v3504
    %v3613 = vpack.c.b16 %v3511, %v3508
    %v3614 = vpack.c.b16 %v3512, %v3509
    %v3615 = vpack.c.b16 %v3513, %v3510
    %v3616 = vpack.c.b16 %v3517, %v3514
    %v3617 = vpack.c.b16 %v3518, %v3515
    %v3618 = vpack.c.b16 %v3519, %v3516
    %v3619 = vpack.c.b16 %v3523, %v3520
    %v3620 = vpack.c.b16 %v3524, %v3521
    %v3621 = vpack.c.b16 %v3525, %v3522
    %v3622 = vpack.c.b16 %v3529, %v3526
    %v3623 = vpack.c.b16 %v3530, %v3527
    %v3624 = vpack.c.b16 %v3531, %v3528
    %v3625 = vpack.c.b16 %v3535, %v3532
    %v3626 = vpack.c.b16 %v3536, %v3533
    %v3627 = vpack.c.b16 %v3537, %v3534
    %v3628 = vpack.c.b16 %v3541, %v3538
    %v3629 = vpack.c.b16 %v3542, %v3539
    %v3630 = vpack.c.b16 %v3543, %v3540
    %v3631 = vpack.c.b16 %v3547, %v3544
    %v3632 = vpack.c.b16 %v3548, %v3545
    %v3633 = vpack.c.b16 %v3549, %v3546
    %v3634 = vpack.c.b16 %v3553, %v3550
    %v3635 = vpack.c.b16 %v3554, %v3551
    %v3636 = vpack.c.b16 %v3555, %v3552
    %v3637 = vpack.c.b16 %v3559, %v3556
    %v3638 = vpack.c.b16 %v3560, %v3557
    %v3639 = vpack.c.b16 %v3561, %v3558
    %v3640 = vpack.c.b16 %v3565, %v3562
    %v3641 = vpack.c.b16 %v3566, %v3563
    %v3642 = vpack.c.b16 %v3567, %v3564
    %v3643 = vpack.c.b16 %v3571, %v3568
    %v3644 = vpack.c.b16 %v3572, %v3569
    %v3645 = vpack.c.b16 %v3573, %v3570
    %3718 = vmatprep.subr.bf16.mxu0 %v3575
    %3719 = vmatpush1.bf16.msra.mxu0 %v3574
    %3720 = vmatprep.subr.bf16.mxu0 %v3578
    %3721 = vmatpush1.bf16.msra.mxu0 %v3577
    %3722 = vmatprep.subr.bf16.mxu0 %v3581
    %3723 = vmatpush1.bf16.msra.mxu0 %v3580
    %3724 = vmatprep.subr.bf16.mxu0 %v3584
    %3725 = vmatpush1.bf16.msra.mxu0 %v3583
    %3726 = vmatprep.subr.bf16.mxu0 %v3587
    %3727 = vmatpush1.bf16.msra.mxu0 %v3586
    %3728 = vmatprep.subr.bf16.mxu0 %v3590
    %3729 = vmatpush1.bf16.msra.mxu0 %v3589
    %3730 = vmatprep.subr.bf16.mxu0 %v3593
    %3731 = vmatpush1.bf16.msra.mxu0 %v3592
    %3732 = vmatprep.subr.bf16.mxu0 %v3596
    %3733 = vmatpush1.bf16.msra.mxu0 %v3595
    %3734 = vmatprep.subr.bf16.mxu0 %v3599
    %3735 = vmatpush1.bf16.msra.mxu0 %v3598
    %3736 = vmatprep.subr.bf16.mxu0 %v3602
    %3737 = vmatpush1.bf16.msra.mxu0 %v3601
    %3738 = vmatprep.subr.bf16.mxu0 %v3605
    %3739 = vmatpush1.bf16.msra.mxu0 %v3604
    %3740 = vmatprep.subr.bf16.mxu0 %v3608
    %3741 = vmatpush1.bf16.msra.mxu0 %v3607
    %3742 = vmatprep.subr.bf16.mxu0 %v3611
    %3743 = vmatpush1.bf16.msra.mxu0 %v3610
    %3744 = vmatprep.subr.bf16.mxu0 %v3614
    %3745 = vmatpush1.bf16.msra.mxu0 %v3613
    %3746 = vmatprep.subr.bf16.mxu0 %v3617
    %3747 = vmatpush1.bf16.msra.mxu0 %v3616
    %3748 = vmatprep.subr.bf16.mxu0 %v3620
    %3749 = vmatpush1.bf16.msra.mxu0 %v3619
    %3750 = vmatprep.mubr.bf16.mxu0 %v3236
    %3751 = vmatmul.mubr.bf16.gmra.mrb[0].mxu0 %v3235
    %v3752 = vpop.f32.mrb[0].mxu0
    %v3753 = vadd.f32 0.0, %v3752
    %v3754 = vpop.f32.mrb[0].mxu0
    %v3755 = vadd.f32 0.0, %v3754
    %v3756 = vpop.f32.mrb[0].mxu0
    %v3757 = vadd.f32 0.0, %v3756
    %v3758 = vpop.f32.mrb[0].mxu0
    %v3759 = vadd.f32 0.0, %v3758
    %3760 = vdwg.mxu0
    %3761 = vmatprep.subr.bf16.mxu0 %v3623
    %3762 = vmatpush1.bf16.msra.mxu0 %v3622
    %3763 = vmatprep.subr.bf16.mxu0 %v3626
    %3764 = vmatpush1.bf16.msra.mxu0 %v3625
    %3765 = vmatprep.subr.bf16.mxu0 %v3629
    %3766 = vmatpush1.bf16.msra.mxu0 %v3628
    %3767 = vmatprep.subr.bf16.mxu0 %v3632
    %3768 = vmatpush1.bf16.msra.mxu0 %v3631
    %3769 = vmatprep.subr.bf16.mxu0 %v3635
    %3770 = vmatpush1.bf16.msra.mxu0 %v3634
    %3771 = vmatprep.subr.bf16.mxu0 %v3638
    %3772 = vmatpush1.bf16.msra.mxu0 %v3637
    %3773 = vmatprep.subr.bf16.mxu0 %v3641
    %3774 = vmatpush1.bf16.msra.mxu0 %v3640
    %3775 = vmatprep.subr.bf16.mxu0 %v3644
    %3776 = vmatpush1.bf16.msra.mxu0 %v3643
    %3777 = vmatprep.subr.bf16.mxu0 0
    %3778 = vmatpush1.bf16.msra.mxu0 0
    %3779 = vmatprep.subr.bf16.mxu0 0
    %3780 = vmatpush1.bf16.msra.mxu0 0
    %3781 = vmatprep.subr.bf16.mxu0 0
    %3782 = vmatpush1.bf16.msra.mxu0 0
    %3783 = vmatprep.subr.bf16.mxu0 0
    %3784 = vmatpush1.bf16.msra.mxu0 0
    %3785 = vmatprep.subr.bf16.mxu0 0
    %3786 = vmatpush1.bf16.msra.mxu0 0
    %3787 = vmatprep.subr.bf16.mxu0 0
    %3788 = vmatpush1.bf16.msra.mxu0 0
    %3789 = vmatprep.subr.bf16.mxu0 0
    %3790 = vmatpush1.bf16.msra.mxu0 0
    %3791 = vmatprep.subr.bf16.mxu0 0
    %3792 = vmatpush1.bf16.msra.mxu0 0
    %3793 = vmatprep.mubr.bf16.mxu0 0
    %3794 = vmatmul.mubr.bf16.gmra.mrb[0].mxu0 %v3237
    %v3795 = vpop.f32.mrb[0].mxu0
    %v3796 = vadd.f32 %v3753, %v3795
    %v3797 = vpop.f32.mrb[0].mxu0
    %v3798 = vadd.f32 %v3755, %v3797
    %v3799 = vpop.f32.mrb[0].mxu0
    %v3800 = vadd.f32 %v3757, %v3799
    %v3801 = vpop.f32.mrb[0].mxu0
    %v3802 = vadd.f32 %v3759, %v3801
    %3803 = vdwg.mxu0
    %3804 = vmatprep.subr.bf16.mxu0 0
    %3805 = vmatpush1.bf16.msra.mxu0 %v3576
    %3806 = vmatprep.subr.bf16.mxu0 0
    %3807 = vmatpush1.bf16.msra.mxu0 %v3579
    %3808 = vmatprep.subr.bf16.mxu0 0
    %3809 = vmatpush1.bf16.msra.mxu0 %v3582
    %3810 = vmatprep.subr.bf16.mxu0 0
    %3811 = vmatpush1.bf16.msra.mxu0 %v3585
    %3812 = vmatprep.subr.bf16.mxu0 0
    %3813 = vmatpush1.bf16.msra.mxu0 %v3588
    %3814 = vmatprep.subr.bf16.mxu0 0
    %3815 = vmatpush1.bf16.msra.mxu0 %v3591
    %3816 = vmatprep.subr.bf16.mxu0 0
    %3817 = vmatpush1.bf16.msra.mxu0 %v3594
    %3818 = vmatprep.subr.bf16.mxu0 0
    %3819 = vmatpush1.bf16.msra.mxu0 %v3597
    %3820 = vmatprep.subr.bf16.mxu0 0
    %3821 = vmatpush1.bf16.msra.mxu0 %v3600
    %3822 = vmatprep.subr.bf16.mxu0 0
    %3823 = vmatpush1.bf16.msra.mxu0 %v3603
    %3824 = vmatprep.subr.bf16.mxu0 0
    %3825 = vmatpush1.bf16.msra.mxu0 %v3606
    %3826 = vmatprep.subr.bf16.mxu0 0
    %3827 = vmatpush1.bf16.msra.mxu0 %v3609
    %3828 = vmatprep.subr.bf16.mxu0 0
    %3829 = vmatpush1.bf16.msra.mxu0 %v3612
    %3830 = vmatprep.subr.bf16.mxu0 0
    %3831 = vmatpush1.bf16.msra.mxu0 %v3615
    %3832 = vmatprep.subr.bf16.mxu0 0
    %3833 = vmatpush1.bf16.msra.mxu0 %v3618
    %3834 = vmatprep.subr.bf16.mxu0 0
    %3835 = vmatpush1.bf16.msra.mxu0 %v3621
    %3836 = vmatprep.mubr.bf16.mxu0 %v3236
    %3837 = vmatmul.mubr.bf16.gmra.mrb[0].mxu0 %v3235
    %v3838 = vpop.f32.mrb[0].mxu0
    %v3839 = vadd.f32 0.0, %v3838
    %v3840 = vpop.f32.mrb[0].mxu0
    %v3841 = vpop.f32.mrb[0].mxu0
    %v3842 = vadd.f32 0.0, %v3841
    %v3843 = vpop.f32.mrb[0].mxu0
    %3844 = vdwg.mxu0
    %3845 = vmatprep.subr.bf16.mxu0 0
    %3846 = vmatpush1.bf16.msra.mxu0 %v3624
    %3847 = vmatprep.subr.bf16.mxu0 0
    %3848 = vmatpush1.bf16.msra.mxu0 %v3627
    %3849 = vmatprep.subr.bf16.mxu0 0
    %3850 = vmatpush1.bf16.msra.mxu0 %v3630
    %3851 = vmatprep.subr.bf16.mxu0 0
    %3852 = vmatpush1.bf16.msra.mxu0 %v3633
    %3853 = vmatprep.subr.bf16.mxu0 0
    %3854 = vmatpush1.bf16.msra.mxu0 %v3636
    %3855 = vmatprep.subr.bf16.mxu0 0
    %3856 = vmatpush1.bf16.msra.mxu0 %v3639
    %3857 = vmatprep.subr.bf16.mxu0 0
    %3858 = vmatpush1.bf16.msra.mxu0 %v3642
    %3859 = vmatprep.subr.bf16.mxu0 0
    %3860 = vmatpush1.bf16.msra.mxu0 %v3645
    %3861 = vmatprep.subr.bf16.mxu0 0
    %3862 = vmatpush1.bf16.msra.mxu0 0
    %3863 = vmatprep.subr.bf16.mxu0 0
    %3864 = vmatpush1.bf16.msra.mxu0 0
    %3865 = vmatprep.subr.bf16.mxu0 0
    %3866 = vmatpush1.bf16.msra.mxu0 0
    %3867 = vmatprep.subr.bf16.mxu0 0
    %3868 = vmatpush1.bf16.msra.mxu0 0
    %3869 = vmatprep.subr.bf16.mxu0 0
    %3870 = vmatpush1.bf16.msra.mxu0 0
    %3871 = vmatprep.subr.bf16.mxu0 0
    %3872 = vmatpush1.bf16.msra.mxu0 0
    %3873 = vmatprep.subr.bf16.mxu0 0
    %3874 = vmatpush1.bf16.msra.mxu0 0
    %3875 = vmatprep.subr.bf16.mxu0 0
    %3876 = vmatpush1.bf16.msra.mxu0 0
    %3877 = vmatprep.mubr.bf16.mxu0 0
    %3878 = vmatmul.mubr.bf16.gmra.mrb[0].mxu0 %v3237
    %v3879 = vpop.f32.mrb[0].mxu0
    %v3880 = vadd.f32 %v3839, %v3879
    %v3881 = vpop.f32.mrb[0].mxu0
    %v3882 = vpop.f32.mrb[0].mxu0
    %v3883 = vadd.f32 %v3842, %v3882
    %v3884 = vpop.f32.mrb[0].mxu0
    %3885 = vdwg.mxu0
    %s3886 = scalar_lea.vmem %s6, 27
    %v3887 = vld [vmem:[%s3886] ss:$2 sm:$0x7]
    %v3889 = vlaneseq
    %v3890 = vshrl.u32 %v3889, 7
    %v3891 = vsub.s32 0, %v3890
    %v3892 = vrot.slane %v3887, %v3891
    %v3893 = vlaneseq
    %v3894 = vshrl.u32 %v3893, 7
    %v3895 = vsub.s32 1, %v3894
    %v3896 = vrot.slane %v3887, %v3895
    %v3897 = vlaneseq
    %v3898 = vshrl.u32 %v3897, 7
    %v3899 = vsub.s32 2, %v3898
    %v3900 = vrot.slane %v3887, %v3899
    %v3904 = vmul.f32 %v3796, %v3892
    %v3905 = vmul.f32 %v3798, %v3896
    %v3906 = vmul.f32 %v3880, %v3900
    %v3907 = vmul.f32 %v3800, %v3892
    %v3908 = vmul.f32 %v3802, %v3896
    %v3909 = vmul.f32 %v3883, %v3900
    %s3910 = scalar_lea.vmem %s6, 26
    %v3911 = vld [vmem:[%s3910] ss:$2 sm:$0x7]
    %v3913 = vlaneseq
    %v3914 = vshrl.u32 %v3913, 7
    %v3915 = vsub.s32 0, %v3914
    %v3916 = vrot.slane %v3911, %v3915
    %v3917 = vlaneseq
    %v3918 = vshrl.u32 %v3917, 7
    %v3919 = vsub.s32 1, %v3918
    %v3920 = vrot.slane %v3911, %v3919
    %v3921 = vlaneseq
    %v3922 = vshrl.u32 %v3921, 7
    %v3923 = vsub.s32 2, %v3922
    %v3924 = vrot.slane %v3911, %v3923
    %v3928 = vadd.f32 %v3904, %v3916
    %v3929 = vadd.f32 %v3905, %v3920
    %v3930 = vadd.f32 %v3906, %v3924
    %v3931 = vadd.f32 %v3907, %v3916
    %v3932 = vadd.f32 %v3908, %v3920
    %v3933 = vadd.f32 %v3909, %v3924
    %v3934 = vmul.f32 %v3928, 0.1
    %v3935 = vmul.f32 %v3929, 0.1
    %v3936 = vmul.f32 %v3930, 0.1
    %v3937 = vmul.f32 %v3931, 0.1
    %v3938 = vmul.f32 %v3932, 0.1
    %v3939 = vmul.f32 %v3933, 0.1
    %v3940 = vmax.f32 %v3928, %v3934
    %v3941 = vmax.f32 %v3929, %v3935
    %v3942 = vmax.f32 %v3930, %v3936
    %v3943 = vmax.f32 %v3931, %v3937
    %v3944 = vmax.f32 %v3932, %v3938
    %v3945 = vmax.f32 %v3933, %v3939
    %v3946 = vpack.c.bf16 %v3943, %v3940
    %v3947 = vpack.c.bf16 %v3944, %v3941
    %v3948 = vpack.c.bf16 %v3945, %v3942
    %v3949 = vld [vmem:[#allocation9] sm:$0xf]
    %v3950 = vld [vmem:[#allocation9 + $0x4] sm:$0xf]
    %v3951 = vld [vmem:[#allocation9 + $0x8] sm:$0xf]
    %v3952 = vld [vmem:[#allocation9 + $0xc] sm:$0xf]
    %v3953 = vld [vmem:[#allocation9 + $0x10] sm:$0xf]
    %v3954 = vld [vmem:[#allocation9 + $0x14] sm:$0xf]
    %v3955 = vld [vmem:[#allocation9 + $0x18] sm:$0xf]
    %v3956 = vld [vmem:[#allocation9 + $0x1c] sm:$0xf]
    %v3957 = vld [vmem:[#allocation9 + $0x20] sm:$0xf]
    %v3958 = vld [vmem:[#allocation9 + $0x24] sm:$0xf]
    %v3959 = vld [vmem:[#allocation9 + $0x28] sm:$0xf]
    %v3960 = vld [vmem:[#allocation9 + $0x2c] sm:$0xf]
    %v3961 = vld [vmem:[#allocation9 + $0x30] sm:$0xf]
    %v3962 = vld [vmem:[#allocation9 + $0x34] sm:$0xf]
    %v3963 = vld [vmem:[#allocation9 + $0x38] sm:$0xf]
    %v3964 = vld [vmem:[#allocation9 + $0x3c] sm:$0xf]
    %v3965 = vld [vmem:[#allocation9 + $0x40] sm:$0xf]
    %v3966 = vld [vmem:[#allocation9 + $0x44] sm:$0xf]
    %v3967 = vld [vmem:[#allocation9 + $0x48] sm:$0xf]
    %v3968 = vld [vmem:[#allocation9 + $0x4c] sm:$0xf]
    %v3969 = vld [vmem:[#allocation9 + $0x50] sm:$0xf]
    %v3970 = vld [vmem:[#allocation9 + $0x54] sm:$0xf]
    %v3971 = vld [vmem:[#allocation9 + $0x58] sm:$0xf]
    %v3972 = vld [vmem:[#allocation9 + $0x5c] sm:$0xf]
    %v3973 = vld [vmem:[#allocation9 + $0x60] sm:$0xf]
    %v3974 = vld [vmem:[#allocation9 + $0x64] sm:$0xf]
    %v3975 = vld [vmem:[#allocation9 + $0x68] sm:$0xf]
    %v3976 = vld [vmem:[#allocation9 + $0x6c] sm:$0xf]
    %v3977 = vld [vmem:[#allocation9 + $0x70] sm:$0xf]
    %v3978 = vld [vmem:[#allocation9 + $0x74] sm:$0xf]
    %v3979 = vld [vmem:[#allocation9 + $0x78] sm:$0xf]
    %v3980 = vld [vmem:[#allocation9 + $0x7c] sm:$0xf]
    %v3981 = vld [vmem:[#allocation9 + $0x80] sm:$0xf]
    %v3982 = vld [vmem:[#allocation9 + $0x84] sm:$0xf]
    %v3983 = vld [vmem:[#allocation9 + $0x88] sm:$0xf]
    %v3984 = vld [vmem:[#allocation9 + $0x8c] sm:$0xf]
    %v3985 = vld [vmem:[#allocation9 + $0x90] sm:$0xf]
    %v3986 = vld [vmem:[#allocation9 + $0x94] sm:$0xf]
    %v3987 = vld [vmem:[#allocation9 + $0x98] sm:$0xf]
    %v3988 = vld [vmem:[#allocation9 + $0x9c] sm:$0xf]
    %v3989 = vld [vmem:[#allocation9 + $0xa0] sm:$0xf]
    %v3990 = vld [vmem:[#allocation9 + $0xa4] sm:$0xf]
    %v3991 = vld [vmem:[#allocation9 + $0xa8] sm:$0xf]
    %v3992 = vld [vmem:[#allocation9 + $0xac] sm:$0xf]
    %v3993 = vld [vmem:[#allocation9 + $0xb0] sm:$0xf]
    %v3994 = vld [vmem:[#allocation9 + $0xb4] sm:$0xf]
    %v3995 = vld [vmem:[#allocation9 + $0xb8] sm:$0xf]
    %v3996 = vld [vmem:[#allocation9 + $0xbc] sm:$0xf]
    %v4045 = vunpack.c.l.b16 %v3949
    %v4046 = vunpack.c.l.b16 %v3950
    %v4047 = vunpack.c.l.b16 %v3951
    %v4048 = vunpack.c.l.b16 %v3952
    %v4049 = vunpack.c.l.b16 %v3953
    %v4050 = vunpack.c.l.b16 %v3954
    %v4051 = vunpack.c.l.b16 %v3955
    %v4052 = vunpack.c.l.b16 %v3956
    %v4053 = vunpack.c.l.b16 %v3957
    %v4054 = vunpack.c.l.b16 %v3958
    %v4055 = vunpack.c.l.b16 %v3959
    %v4056 = vunpack.c.l.b16 %v3960
    %v4057 = vunpack.c.l.b16 %v3961
    %v4058 = vunpack.c.l.b16 %v3962
    %v4059 = vunpack.c.l.b16 %v3963
    %v4060 = vunpack.c.l.b16 %v3964
    %v4061 = vunpack.c.l.b16 %v3965
    %v4062 = vunpack.c.l.b16 %v3966
    %v4063 = vunpack.c.l.b16 %v3967
    %v4064 = vunpack.c.l.b16 %v3968
    %v4065 = vunpack.c.l.b16 %v3969
    %v4066 = vunpack.c.l.b16 %v3970
    %v4067 = vunpack.c.l.b16 %v3971
    %v4068 = vunpack.c.l.b16 %v3972
    %v4069 = vunpack.c.l.b16 %v3973
    %v4070 = vunpack.c.l.b16 %v3974
    %v4071 = vunpack.c.l.b16 %v3975
    %v4072 = vunpack.c.l.b16 %v3976
    %v4073 = vunpack.c.l.b16 %v3977
    %v4074 = vunpack.c.l.b16 %v3978
    %v4075 = vunpack.c.l.b16 %v3979
    %v4076 = vunpack.c.l.b16 %v3980
    %v4077 = vunpack.c.l.b16 %v3981
    %v4078 = vunpack.c.l.b16 %v3982
    %v4079 = vunpack.c.l.b16 %v3983
    %v4080 = vunpack.c.l.b16 %v3984
    %v4081 = vunpack.c.l.b16 %v3985
    %v4082 = vunpack.c.l.b16 %v3986
    %v4083 = vunpack.c.l.b16 %v3987
    %v4084 = vunpack.c.l.b16 %v3988
    %v4085 = vunpack.c.l.b16 %v3989
    %v4086 = vunpack.c.l.b16 %v3990
    %v4087 = vunpack.c.l.b16 %v3991
    %v4088 = vunpack.c.l.b16 %v3992
    %v4089 = vunpack.c.l.b16 %v3993
    %v4090 = vunpack.c.l.b16 %v3994
    %v4091 = vunpack.c.l.b16 %v3995
    %v4092 = vunpack.c.l.b16 %v3996
    %v4093 = vpack.c.b16 %v4046, %v4045
    %v4094 = vpack.c.b16 %v4048, %v4047
    %v4095 = vpack.c.b16 %v4050, %v4049
    %v4096 = vpack.c.b16 %v4052, %v4051
    %v4097 = vpack.c.b16 %v4054, %v4053
    %v4098 = vpack.c.b16 %v4056, %v4055
    %v4099 = vpack.c.b16 %v4058, %v4057
    %v4100 = vpack.c.b16 %v4060, %v4059
    %v4101 = vpack.c.b16 %v4062, %v4061
    %v4102 = vpack.c.b16 %v4064, %v4063
    %v4103 = vpack.c.b16 %v4066, %v4065
    %v4104 = vpack.c.b16 %v4068, %v4067
    %v4105 = vpack.c.b16 %v4070, %v4069
    %v4106 = vpack.c.b16 %v4072, %v4071
    %v4107 = vpack.c.b16 %v4074, %v4073
    %v4108 = vpack.c.b16 %v4076, %v4075
    %v4109 = vpack.c.b16 %v4078, %v4077
    %v4110 = vpack.c.b16 %v4080, %v4079
    %v4111 = vpack.c.b16 %v4082, %v4081
    %v4112 = vpack.c.b16 %v4084, %v4083
    %v4113 = vpack.c.b16 %v4086, %v4085
    %v4114 = vpack.c.b16 %v4088, %v4087
    %v4115 = vpack.c.b16 %v4090, %v4089
    %v4116 = vpack.c.b16 %v4092, %v4091
    %4141 = vmatprep.subr.bf16.mxu0 0
    %4142 = vmatpush1.bf16.msra.mxu0 %v4093
    %4143 = vmatprep.subr.bf16.mxu0 0
    %4144 = vmatpush1.bf16.msra.mxu0 %v4094
    %4145 = vmatprep.subr.bf16.mxu0 0
    %4146 = vmatpush1.bf16.msra.mxu0 %v4095
    %4147 = vmatprep.subr.bf16.mxu0 0
    %4148 = vmatpush1.bf16.msra.mxu0 %v4096
    %4149 = vmatprep.subr.bf16.mxu0 0
    %4150 = vmatpush1.bf16.msra.mxu0 %v4097
    %4151 = vmatprep.subr.bf16.mxu0 0
    %4152 = vmatpush1.bf16.msra.mxu0 %v4098
    %4153 = vmatprep.subr.bf16.mxu0 0
    %4154 = vmatpush1.bf16.msra.mxu0 %v4099
    %4155 = vmatprep.subr.bf16.mxu0 0
    %4156 = vmatpush1.bf16.msra.mxu0 %v4100
    %4157 = vmatprep.subr.bf16.mxu0 0
    %4158 = vmatpush1.bf16.msra.mxu0 %v4101
    %4159 = vmatprep.subr.bf16.mxu0 0
    %4160 = vmatpush1.bf16.msra.mxu0 %v4102
    %4161 = vmatprep.subr.bf16.mxu0 0
    %4162 = vmatpush1.bf16.msra.mxu0 %v4103
    %4163 = vmatprep.subr.bf16.mxu0 0
    %4164 = vmatpush1.bf16.msra.mxu0 %v4104
    %4165 = vmatprep.subr.bf16.mxu0 0
    %4166 = vmatpush1.bf16.msra.mxu0 %v4105
    %4167 = vmatprep.subr.bf16.mxu0 0
    %4168 = vmatpush1.bf16.msra.mxu0 %v4106
    %4169 = vmatprep.subr.bf16.mxu0 0
    %4170 = vmatpush1.bf16.msra.mxu0 %v4107
    %4171 = vmatprep.subr.bf16.mxu0 0
    %4172 = vmatpush1.bf16.msra.mxu0 %v4108
    %4173 = vmatprep.mubr.bf16.mxu0 %v3947
    %4174 = vmatmul.mubr.bf16.gmra.mrb[0].mxu0 %v3946
    %v4175 = vpop.f32.mrb[0].mxu0
    %v4176 = vadd.f32 0.0, %v4175
    %v4177 = vpop.f32.mrb[0].mxu0
    %v4178 = vpop.f32.mrb[0].mxu0
    %v4179 = vadd.f32 0.0, %v4178
    %v4180 = vpop.f32.mrb[0].mxu0
    %4181 = vdwg.mxu0
    %4182 = vmatprep.subr.bf16.mxu0 0
    %4183 = vmatpush1.bf16.msra.mxu0 %v4109
    %4184 = vmatprep.subr.bf16.mxu0 0
    %4185 = vmatpush1.bf16.msra.mxu0 %v4110
    %4186 = vmatprep.subr.bf16.mxu0 0
    %4187 = vmatpush1.bf16.msra.mxu0 %v4111
    %4188 = vmatprep.subr.bf16.mxu0 0
    %4189 = vmatpush1.bf16.msra.mxu0 %v4112
    %4190 = vmatprep.subr.bf16.mxu0 0
    %4191 = vmatpush1.bf16.msra.mxu0 %v4113
    %4192 = vmatprep.subr.bf16.mxu0 0
    %4193 = vmatpush1.bf16.msra.mxu0 %v4114
    %4194 = vmatprep.subr.bf16.mxu0 0
    %4195 = vmatpush1.bf16.msra.mxu0 %v4115
    %4196 = vmatprep.subr.bf16.mxu0 0
    %4197 = vmatpush1.bf16.msra.mxu0 %v4116
    %4198 = vmatprep.subr.bf16.mxu0 0
    %4199 = vmatpush1.bf16.msra.mxu0 0
    %4200 = vmatprep.subr.bf16.mxu0 0
    %4201 = vmatpush1.bf16.msra.mxu0 0
    %4202 = vmatprep.subr.bf16.mxu0 0
    %4203 = vmatpush1.bf16.msra.mxu0 0
    %4204 = vmatprep.subr.bf16.mxu0 0
    %4205 = vmatpush1.bf16.msra.mxu0 0
    %4206 = vmatprep.subr.bf16.mxu0 0
    %4207 = vmatpush1.bf16.msra.mxu0 0
    %4208 = vmatprep.subr.bf16.mxu0 0
    %4209 = vmatpush1.bf16.msra.mxu0 0
    %4210 = vmatprep.subr.bf16.mxu0 0
    %4211 = vmatpush1.bf16.msra.mxu0 0
    %4212 = vmatprep.subr.bf16.mxu0 0
    %4213 = vmatpush1.bf16.msra.mxu0 0
    %4214 = vmatprep.mubr.bf16.mxu0 0
    %4215 = vmatmul.mubr.bf16.gmra.mrb[0].mxu0 %v3948
    %v4216 = vpop.f32.mrb[0].mxu0
    %v4217 = vadd.f32 %v4176, %v4216
    %v4218 = vpop.f32.mrb[0].mxu0
    %v4219 = vpop.f32.mrb[0].mxu0
    %v4220 = vadd.f32 %v4179, %v4219
    %v4221 = vpop.f32.mrb[0].mxu0
    %4222 = vdwg.mxu0
    %v4223 = vld [vmem:[%s6 + $0x21] sm:$0x1]
    %v4224 = vlaneseq
    %v4225 = vshrl.u32 %v4224, 7
    %v4226 = vsub.s32 0, %v4225
    %v4227 = vrot.slane %v4223, %v4226
    %v4228 = vmul.f32 %v4217, %v4227
    %v4229 = vmul.f32 %v4220, %v4227
    %v4230 = vld [vmem:[%s6 + $0x20] sm:$0x1]
    %v4231 = vlaneseq
    %v4232 = vshrl.u32 %v4231, 7
    %v4233 = vsub.s32 0, %v4232
    %v4234 = vrot.slane %v4230, %v4233
    %v4235 = vadd.f32 %v4228, %v4234
    %v4236 = vadd.f32 %v4229, %v4234
    %v4237 = vlaneseq
    %v4238 = vand.u32 %v4237, 127
    %vm4239 = vcmp.ge.s32.totalorder %v4238, 1
    %vm4240 = vcmp.le.s32.totalorder %v4238, 6
    %vm4241 = vmand %vm4239, %vm4240
    %v4242 = vand.u32 2147483647, %v4235
    %v4243 = vand.u32 2147483647, %v4236
    %v4244 = vadd.f32 %v4242, 1.0
    %v4245 = vadd.f32 %v4243, 1.0
    %v4246 = vrcp.pop %v4244
    %v4247 = vrcp.pop %v4245
    %v4248 = vmul.f32 %v4235, %v4246
    %v4249 = vmul.f32 %v4236, %v4247
    %v4250 = vsel %vm4241, %v4248, %v4235
    %v4251 = vsel %vm4241, %v4249, %v4236
    %4252 = vst [vmem:[%s7] sm:$0xff] %v4250
    %4253 = vst [vmem:[%s7 + $0x8] sm:$0xff] %v4251
    // Predicated region
    $region50: #{a3c_mlp_forward.1} parent=1 // pred_check
      _
    $region51: #{a3c_mlp_forward.1} parent=1 // pred_check_branch
      %4255 = sbr.rel (0) target = $region53
    $region52: #{a3c_mlp_forward.1} parent=1 // pred_region
      _
    $region53: #{a3c_mlp_forward.1} parent=1 // pred_fallthru
      _
    // Predicated region
    $region54: #{a3c_mlp_forward.1} parent=1 // pred_check
      _
    $region55: #{a3c_mlp_forward.1} parent=1 // pred_check_branch
      %4257 = sbr.rel (0) target = $region57
    $region56: #{a3c_mlp_forward.1} parent=1 // pred_region
      _
    $region57: #{a3c_mlp_forward.1} parent=1 // pred_fallthru
      _
    %4258 = vsyncpa [#allocation3], 1
    %4259 = vsyncpa [#allocation5], 1
    %4260 = vsyncpa [#allocation8], 1

</llo_original>
